<compile_context>
chip_gen: v6e
topology: v6e:2x2x1
jax: 0.10.0
libtpu: 0.0.40
codegen_flags: <defaults>
</compile_context>

<pallas_src>
import functools

import jax
import jax.numpy as jnp
from jax import lax
from jax.experimental import pallas as pl
from jax.experimental.pallas import tpu as pltpu


def _leaky_relu(y):
    # LeakyReLU(negative_slope=0.1): single vmax instead of compare+select.
    return jnp.maximum(y, 0.1 * y)


def _round_up(v, m):
    return ((v + m - 1) // m) * m


def _default_vmem_limit():
    """Generation-aware VMEM limit: ~48 MiB on v7x (64 MiB/TC), ~96 MiB on v5e/v6e."""
    cap = None
    try:
        cap = getattr(pltpu.get_tpu_info(), "vmem_capacity_bytes", None)
    except Exception:
        cap = None
    if not cap:
        cap = 64 * 1024 * 1024  # conservative fallback (v7x per-core VMEM)
    return int(min((cap * 3) // 4, 100 * 1024 * 1024))


# ---------------------------------------------------------------------------
# Path A: full weight resident in VMEM, 1-D grid over the batch only.
# ---------------------------------------------------------------------------
def _resmlp_single_kernel(x_ref, w_ref, b_ref, o_ref, *, dims, compute_dtype):
    x = x_ref[...]
    w = w_ref[...]
    if compute_dtype is not None:
        # In-kernel cast: free VPU work hidden under DMA/MXU (no extra HBM pass).
        x = x.astype(compute_dtype)
        w = w.astype(compute_dtype)
    acc = lax.dot_general(x, w, dims, preferred_element_type=jnp.float32)
    y = acc + b_ref[...]                       # f32 epilogue (v5e-safe)
    o_ref[...] = _leaky_relu(y).astype(o_ref.dtype)


# ---------------------------------------------------------------------------
# Path B: 3-D (M, N, K) grid, K innermost, f32 scratch accumulator.
# ---------------------------------------------------------------------------
def _resmlp_tiled_kernel(x_ref, w_ref, b_ref, o_ref, acc_ref, *,
                         dims, compute_dtype, k_total, tk, k_tail, w_k_axis):
    k = pl.program_id(2)

    x = x_ref[...]
    w = w_ref[...]
    if k_tail:
        # Mask the padded K tail (OOB reads on the contraction axis are not
        # masked by Pallas and could be garbage / NaN).
        kofs = k * tk
        xm = (lax.broadcasted_iota(jnp.int32, x.shape, 1) + kofs) < k_total
        x = jnp.where(xm, x, jnp.zeros_like(x))
        wm = (lax.broadcasted_iota(jnp.int32, w.shape, w_k_axis) + kofs) < k_total
        w = jnp.where(wm, w, jnp.zeros_like(w))
    if compute_dtype is not None:
        x = x.astype(compute_dtype)
        w = w.astype(compute_dtype)

    p = lax.dot_general(x, w, dims, preferred_element_type=jnp.float32)

    @pl.when(k == 0)
    def _():
        acc_ref[...] = p            # assign on first K step (no zero-init pass)

    @pl.when(k != 0)
    def _():
        acc_ref[...] += p

    @pl.when(k == pl.num_programs(2) - 1)
    def _():
        y = acc_ref[...] + b_ref[...]
        o_ref[...] = _leaky_relu(y).astype(o_ref.dtype)


def resmlp_forward(x, w, b, *, compute_dtype=None, w_transposed=False,
                   tm=512, tn=512, tk=1024,
                   vmem_limit_bytes=None, force_tiled=False):
    """LeakyReLU(x @ W.T + b, 0.1), matching nn.Linear(n_feats, n_feats) + LeakyReLU.

    x: (M, n_feats).  w: (out, in) PyTorch layout, or (in, out) if
    w_transposed=True (pre-transpose/pre-cast W once at parameter-setup time
    for the best MXU feed and halved HBM traffic when stored bf16).
    b: (n_feats,).  compute_dtype: optional MXU operand dtype (bf16 is
    profitable on v5e/v6e/v7x; cast happens in-kernel, accumulation and the
    bias/LeakyReLU epilogue stay f32).  Output dtype == x.dtype.
    """
    M, K = x.shape
    if w_transposed:
        Kw, N = w.shape
    else:
        N, Kw = w.shape
    assert K == Kw and b.shape == (N,)

    out_dtype = x.dtype
    x_item = jnp.dtype(x.dtype).itemsize
    w_item = jnp.dtype(w.dtype).itemsize
    o_item = jnp.dtype(out_dtype).itemsize
    sub = 16 if x_item < 4 else 8              # sublane multiple for M tiles

    b2 = b.reshape(1, N).astype(jnp.float32)

    vmem_limit = int(vmem_limit_bytes) if vmem_limit_bytes else _default_vmem_limit()
    budget = (vmem_limit * 9) // 10            # headroom for Mosaic scratch

    if w_transposed:
        dims = (((1,), (0,)), ((), ()))        # x:(m,k) . w:(k,n) -> (m,n)
    else:
        dims = (((1,), (1,)), ((), ()))        # x:(m,k) . w:(n,k) -> (m,n)

    # ------------------------ path A admission ----------------------------
    # Weight + bias counted once (single-buffered resident operands); x and
    # the output are double-buffered per batch row.
    w_bytes = N * K * w_item
    row_bytes = 2 * K * x_item + 2 * N * o_item
    avail = budget - w_bytes - N * 4
    tm_fit = avail // row_bytes if avail > 0 else 0

    if not force_tiled and tm_fit >= min(M, sub):
        if M <= sub:
            tm_a = M
        else:
            tm_cap = min(tm, M, max(sub, (tm_fit // sub) * sub))
            t = tm_cap
            if -(-M // t) < 2:
                # Single grid step would idle one TensorCore on v7x; split the
                # batch into >=2 parallel steps when the sublane rules allow.
                t = min(t, -(-M // 2))
            tm_a = max(sub, min(_round_up(t, sub), _round_up(M, sub)))

        grid = (pl.cdiv(M, tm_a),)
        w_block = (K, N) if w_transposed else (N, K)
        kern = functools.partial(_resmlp_single_kernel, dims=dims,
                                 compute_dtype=compute_dtype)

        def _path_a(resident_single_buffered):
            # Constant index_map -> W / bias fetched from HBM exactly once;
            # request a single VMEM buffer for them when supported.
            res_kw = ({"pipeline_mode": pl.Buffered(1)}
                      if resident_single_buffered else {})
            return pl.pallas_call(
                kern,
                out_shape=jax.ShapeDtypeStruct((M, N), out_dtype),
                grid_spec=pltpu.PrefetchScalarGridSpec(
                    num_scalar_prefetch=0,
                    grid=grid,
                    in_specs=[
                        pl.BlockSpec((tm_a, K), lambda i: (i, 0)),     # x rows
                        pl.BlockSpec(w_block, lambda i: (0, 0), **res_kw),
                        pl.BlockSpec((1, N), lambda i: (0, 0), **res_kw),
                    ],
                    out_specs=pl.BlockSpec((tm_a, N), lambda i: (i, 0)),
                ),
                compiler_params=pltpu.CompilerParams(
                    dimension_semantics=("parallel",),
                    vmem_limit_bytes=vmem_limit,
                ),
            )(x, w, b2)

        # pl.Buffered(1) support varies across JAX versions; fall back to the
        # default (double-buffered) specs, then to the tiled path, on failure.
        for single in (True, False):
            try:
                return _path_a(single)
            except Exception:
                continue

    # ------------------------ path B (tiled fallback) ----------------------
    if M <= tm:
        tm_b = M
    else:
        tm_b = max(sub, (tm // sub) * sub)
    tn_b = N if N <= tn else max(128, (tn // 128) * 128)
    tk_b = K if K <= tk else max(128, (tk // 128) * 128)
    k_tail = (K % tk_b) != 0

    w_k_axis = 0 if w_transposed else 1
    w_block = (tk_b, tn_b) if w_transposed else (tn_b, tk_b)
    w_index = (lambda i, j, k: (k, j)) if w_transposed else (lambda i, j, k: (j, k))

    grid = (pl.cdiv(M, tm_b), pl.cdiv(N, tn_b), pl.cdiv(K, tk_b))
    kern = functools.partial(_resmlp_tiled_kernel, dims=dims,
                             compute_dtype=compute_dtype, k_total=K, tk=tk_b,
                             k_tail=k_tail, w_k_axis=w_k_axis)
    return pl.pallas_call(
        kern,
        out_shape=jax.ShapeDtypeStruct((M, N), out_dtype),
        grid_spec=pltpu.PrefetchScalarGridSpec(
            num_scalar_prefetch=0,
            grid=grid,
            in_specs=[
                pl.BlockSpec((tm_b, tk_b), lambda i, j, k: (i, k)),   # x tile
                pl.BlockSpec(w_block, w_index),                       # W tile
                pl.BlockSpec((1, tn_b), lambda i, j, k: (0, j)),      # bias tile
            ],
            out_specs=pl.BlockSpec((tm_b, tn_b), lambda i, j, k: (i, j)),
            scratch_shapes=[pltpu.VMEM((tm_b, tn_b), jnp.float32)],   # f32 acc
        ),
        compiler_params=pltpu.CompilerParams(
            dimension_semantics=("parallel", "parallel", "arbitrary"),
            vmem_limit_bytes=vmem_limit,
        ),
    )(x, w, b2)


if __name__ == "__main__":
    # Module-consistent shapes: n_feats=512 (module default), small batch.
    n_feats = 512
    batch = 64

    key = jax.random.PRNGKey(0)
    kx, kw, kb = jax.random.split(key, 3)

    x = jax.random.normal(kx, (batch, n_feats), dtype=jnp.float32)
    # PyTorch nn.Linear init scale: U(-1/sqrt(in), 1/sqrt(in)).
    bound = 1.0 / jnp.sqrt(n_feats)
    w = jax.random.uniform(kw, (n_feats, n_feats), jnp.float32, -bound, bound)  # (out, in)
    b = jax.random.uniform(kb, (n_feats,), jnp.float32, -bound, bound)

    # Pure-JAX reference of nn.Linear + LeakyReLU(0.1).
    ref = x @ w.T + b
    ref = jnp.where(ref > 0, ref, 0.1 * ref)

    # 1) f32 weight-resident fast path (tight check).
    out = jax.block_until_ready(resmlp_forward(x, w, b))
    assert out.shape == ref.shape and out.dtype == ref.dtype
    assert jnp.allclose(out, ref, atol=1e-5, rtol=1e-5), "f32 mismatch vs reference"

    # 2) bf16 MXU operands via in-kernel cast (f32 accumulate/epilogue).
    out_bf = jax.block_until_ready(resmlp_forward(x, w, b, compute_dtype=jnp.bfloat16))
    assert jnp.allclose(out_bf, ref, atol=5e-2, rtol=5e-2), "bf16 mismatch vs reference"

    # 3) Pre-transposed (in, out) weight layout (one-time setup outside the hot path).
    out_t = jax.block_until_ready(resmlp_forward(x, w.T, b, w_transposed=True))
    assert jnp.allclose(out_t, ref, atol=1e-5, rtol=1e-5), "transposed-W mismatch"

    # 4) Tiled fallback with a non-dividing K tile (exercises K-tail masking).
    out_tiled = jax.block_until_ready(
        resmlp_forward(x, w, b, force_tiled=True, tk=384))
    assert out_tiled.dtype == ref.dtype
    assert jnp.allclose(out_tiled, ref, atol=1e-4, rtol=1e-4), "tiled mismatch"

    print("KERNEL_OK")
</pallas_src>

<mosaic_0001>
module attributes {stable_mosaic.version = 11 : i64} {
  func.func @_resmlp_single_kernel(%arg0: i32, %arg1: memref<32x512xf32, #tpu.memory_space<vmem>>, %arg2: memref<512x512xf32, #tpu.memory_space<vmem>>, %arg3: memref<1x512xf32, #tpu.memory_space<vmem>>, %arg4: memref<32x512xf32, #tpu.memory_space<vmem>>) attributes {dimension_semantics = [#tpu.dimension_semantics<parallel>], iteration_bounds = array<i64: 2>, scalar_prefetch = 0 : i64, scratch_operands = 0 : i64, tpu.core_type = #tpu.core_type<tc>, window_params = [{transform_indices = @transform_0, window_bounds = array<i64: 32, 512>}, {pipeline_mode = #tpu.pipeline_mode<synchronous>, transform_indices = @transform_1, window_bounds = array<i64: 512, 512>}, {pipeline_mode = #tpu.pipeline_mode<synchronous>, transform_indices = @transform_2, window_bounds = array<i64: 1, 512>}, {transform_indices = @transform_3, window_bounds = array<i64: 32, 512>}]} {
    %c0 = arith.constant 0 : index
    %c0_0 = arith.constant 0 : index
    %0 = vector.load %arg1[%c0, %c0_0] : memref<32x512xf32, #tpu.memory_space<vmem>>, vector<32x512xf32>
    %c0_1 = arith.constant 0 : index
    %c0_2 = arith.constant 0 : index
    %1 = vector.load %arg2[%c0_1, %c0_2] : memref<512x512xf32, #tpu.memory_space<vmem>>, vector<512x512xf32>
    %cst = arith.constant dense<0.000000e+00> : vector<32x512xf32>
    %2 = tpu.matmul %0, %1, %cst {dimension_numbers = #tpu.dot_dimension_numbers<[1], [1], [0], [0], [0, 0, 1, 0], [], []>} : vector<32x512xf32>, vector<512x512xf32>, vector<32x512xf32> -> vector<32x512xf32>
    %c0_3 = arith.constant 0 : index
    %c0_4 = arith.constant 0 : index
    %3 = vector.load %arg3[%c0_3, %c0_4] : memref<1x512xf32, #tpu.memory_space<vmem>>, vector<1x512xf32>
    %4 = vector.broadcast %3 : vector<1x512xf32> to vector<32x512xf32>
    %5 = arith.addf %2, %4 : vector<32x512xf32>
    %cst_5 = arith.constant 1.000000e-01 : f32
    %6 = vector.broadcast %cst_5 : f32 to vector<32x512xf32>
    %7 = arith.mulf %6, %5 : vector<32x512xf32>
    %8 = arith.maximumf %5, %7 : vector<32x512xf32>
    %c0_6 = arith.constant 0 : index
    %c0_7 = arith.constant 0 : index
    %9 = vector.load %arg4[%c0_6, %c0_7] : memref<32x512xf32, #tpu.memory_space<vmem>>, vector<32x512xf32>
    tpu.vector_store %arg4[%c0_6, %c0_7], %8 {strides = array<i32>} : memref<32x512xf32, #tpu.memory_space<vmem>>, vector<32x512xf32>,
    return
  }
  func.func @transform_0(%arg0: i32) -> (i32, i32) {
    %c0_i32 = arith.constant 0 : i32
    %c0_i32_0 = arith.constant 0 : i32
    return %arg0, %c0_i32 : i32, i32
  }
  func.func @transform_1(%arg0: i32) -> (i32, i32) {
    %c0_i32 = arith.constant 0 : i32
    %c0_i32_0 = arith.constant 0 : i32
    %c0_i32_1 = arith.constant 0 : i32
    return %c0_i32, %c0_i32_0 : i32, i32
  }
  func.func @transform_2(%arg0: i32) -> (i32, i32) {
    %c0_i32 = arith.constant 0 : i32
    %c0_i32_0 = arith.constant 0 : i32
    %c0_i32_1 = arith.constant 0 : i32
    return %c0_i32, %c0_i32_0 : i32, i32
  }
  func.func @transform_3(%arg0: i32) -> (i32, i32) {
    %c0_i32 = arith.constant 0 : i32
    %c0_i32_0 = arith.constant 0 : i32
    return %arg0, %c0_i32 : i32, i32
  }
}

module attributes {stable_mosaic.version = 11 : i64} {
  func.func @_resmlp_single_kernel(%arg0: i32, %arg1: memref<32x512xf32, #tpu.memory_space<vmem>>, %arg2: memref<512x512xf32, #tpu.memory_space<vmem>>, %arg3: memref<1x512xf32, #tpu.memory_space<vmem>>, %arg4: memref<32x512xf32, #tpu.memory_space<vmem>>) attributes {dimension_semantics = [#tpu.dimension_semantics<parallel>], iteration_bounds = array<i64: 2>, scalar_prefetch = 0 : i64, scratch_operands = 0 : i64, tpu.core_type = #tpu.core_type<tc>, window_params = [{transform_indices = @transform_0, window_bounds = array<i64: 32, 512>}, {pipeline_mode = #tpu.pipeline_mode<synchronous>, transform_indices = @transform_1, window_bounds = array<i64: 512, 512>}, {pipeline_mode = #tpu.pipeline_mode<synchronous>, transform_indices = @transform_2, window_bounds = array<i64: 1, 512>}, {transform_indices = @transform_3, window_bounds = array<i64: 32, 512>}]} {
    %c0 = arith.constant 0 : index
    %c0_0 = arith.constant 0 : index
    %0 = vector.load %arg1[%c0, %c0_0] : memref<32x512xf32, #tpu.memory_space<vmem>>, vector<32x512xf32>
    %c0_1 = arith.constant 0 : index
    %c0_2 = arith.constant 0 : index
    %1 = vector.load %arg2[%c0_1, %c0_2] : memref<512x512xf32, #tpu.memory_space<vmem>>, vector<512x512xf32>
    %cst = arith.constant dense<0.000000e+00> : vector<32x512xf32>
    %2 = tpu.matmul %0, %1, %cst {dimension_numbers = #tpu.dot_dimension_numbers<[1], [1], [0], [0], [0, 0, 1, 0], [], []>} : vector<32x512xf32>, vector<512x512xf32>, vector<32x512xf32> -> vector<32x512xf32>
    %c0_3 = arith.constant 0 : index
    %c0_4 = arith.constant 0 : index
    %3 = vector.load %arg3[%c0_3, %c0_4] : memref<1x512xf32, #tpu.memory_space<vmem>>, vector<1x512xf32>
    %4 = vector.broadcast %3 : vector<1x512xf32> to vector<32x512xf32>
    %5 = arith.addf %2, %4 : vector<32x512xf32>
    %cst_5 = arith.constant 1.000000e-01 : f32
    %6 = vector.broadcast %cst_5 : f32 to vector<32x512xf32>
    %7 = arith.mulf %6, %5 : vector<32x512xf32>
    %8 = arith.maximumf %5, %7 : vector<32x512xf32>
    %c0_6 = arith.constant 0 : index
    %c0_7 = arith.constant 0 : index
    %9 = vector.load %arg4[%c0_6, %c0_7] : memref<32x512xf32, #tpu.memory_space<vmem>>, vector<32x512xf32>
    tpu.vector_store %arg4[%c0_6, %c0_7], %8 {strides = array<i32>} : memref<32x512xf32, #tpu.memory_space<vmem>>, vector<32x512xf32>,
    return
  }
  func.func @transform_0(%arg0: i32) -> (i32, i32) {
    %c0_i32 = arith.constant 0 : i32
    %c0_i32_0 = arith.constant 0 : i32
    return %arg0, %c0_i32 : i32, i32
  }
  func.func @transform_1(%arg0: i32) -> (i32, i32) {
    %c0_i32 = arith.constant 0 : i32
    %c0_i32_0 = arith.constant 0 : i32
    %c0_i32_1 = arith.constant 0 : i32
    return %c0_i32, %c0_i32_0 : i32, i32
  }
  func.func @transform_2(%arg0: i32) -> (i32, i32) {
    %c0_i32 = arith.constant 0 : i32
    %c0_i32_0 = arith.constant 0 : i32
    %c0_i32_1 = arith.constant 0 : i32
    return %c0_i32, %c0_i32_0 : i32, i32
  }
  func.func @transform_3(%arg0: i32) -> (i32, i32) {
    %c0_i32 = arith.constant 0 : i32
    %c0_i32_0 = arith.constant 0 : i32
    return %arg0, %c0_i32 : i32, i32
  }
}

module attributes {stable_mosaic.version = 11 : i64} {
  func.func @_resmlp_tiled_kernel(%arg0: i32, %arg1: i32, %arg2: i32, %arg3: memref<64x512xf32, #tpu.memory_space<vmem>>, %arg4: memref<512x512xf32, #tpu.memory_space<vmem>>, %arg5: memref<1x512xf32, #tpu.memory_space<vmem>>, %arg6: memref<64x512xf32, #tpu.memory_space<vmem>>, %arg7: memref<64x512xf32, #tpu.memory_space<vmem>>) attributes {dimension_semantics = [#tpu.dimension_semantics<parallel>, #tpu.dimension_semantics<parallel>, #tpu.dimension_semantics<arbitrary>], iteration_bounds = array<i64: 1, 1, 1>, scalar_prefetch = 0 : i64, scratch_operands = 1 : i64, tpu.core_type = #tpu.core_type<tc>, window_params = [{transform_indices = @transform_0, window_bounds = array<i64: 64, 512>}, {transform_indices = @transform_1, window_bounds = array<i64: 512, 512>}, {transform_indices = @transform_2, window_bounds = array<i64: 1, 512>}, {transform_indices = @transform_3, window_bounds = array<i64: 64, 512>}]} {
    %c0 = arith.constant 0 : index
    %c0_0 = arith.constant 0 : index
    %0 = vector.load %arg3[%c0, %c0_0] : memref<64x512xf32, #tpu.memory_space<vmem>>, vector<64x512xf32>
    %c0_1 = arith.constant 0 : index
    %c0_2 = arith.constant 0 : index
    %1 = vector.load %arg4[%c0_1, %c0_2] : memref<512x512xf32, #tpu.memory_space<vmem>>, vector<512x512xf32>
    %cst = arith.constant dense<0.000000e+00> : vector<64x512xf32>
    %2 = tpu.matmul %0, %1, %cst {dimension_numbers = #tpu.dot_dimension_numbers<[1], [1], [0], [0], [0, 0, 1, 0], [], []>} : vector<64x512xf32>, vector<512x512xf32>, vector<64x512xf32> -> vector<64x512xf32>
    %c0_i32 = arith.constant 0 : i32
    %3 = arith.cmpi eq, %arg2, %c0_i32 : i32
    %4 = arith.extui %3 : i1 to i32
    %c0_i32_3 = arith.constant 0 : i32
    %5 = arith.cmpi ne, %4, %c0_i32_3 : i32
    scf.if %5 {
      %c0_8 = arith.constant 0 : index
      %c0_9 = arith.constant 0 : index
      %12 = vector.load %arg7[%c0_8, %c0_9] : memref<64x512xf32, #tpu.memory_space<vmem>>, vector<64x512xf32>
      tpu.vector_store %arg7[%c0_8, %c0_9], %2 {strides = array<i32>} : memref<64x512xf32, #tpu.memory_space<vmem>>, vector<64x512xf32>,
    } else {
    }
    %c0_i32_4 = arith.constant 0 : i32
    %6 = arith.cmpi ne, %arg2, %c0_i32_4 : i32
    %7 = arith.extui %6 : i1 to i32
    %c0_i32_5 = arith.constant 0 : i32
    %8 = arith.cmpi ne, %7, %c0_i32_5 : i32
    scf.if %8 {
      %c0_8 = arith.constant 0 : index
      %c0_9 = arith.constant 0 : index
      %12 = vector.load %arg7[%c0_8, %c0_9] : memref<64x512xf32, #tpu.memory_space<vmem>>, vector<64x512xf32>
      %13 = arith.addf %12, %2 : vector<64x512xf32>
      %c0_10 = arith.constant 0 : index
      %c0_11 = arith.constant 0 : index
      %14 = vector.load %arg7[%c0_10, %c0_11] : memref<64x512xf32, #tpu.memory_space<vmem>>, vector<64x512xf32>
      tpu.vector_store %arg7[%c0_10, %c0_11], %13 {strides = array<i32>} : memref<64x512xf32, #tpu.memory_space<vmem>>, vector<64x512xf32>,
    } else {
    }
    %c0_i32_6 = arith.constant 0 : i32
    %9 = arith.cmpi eq, %arg2, %c0_i32_6 : i32
    %10 = arith.extui %9 : i1 to i32
    %c0_i32_7 = arith.constant 0 : i32
    %11 = arith.cmpi ne, %10, %c0_i32_7 : i32
    scf.if %11 {
      %c0_8 = arith.constant 0 : index
      %c0_9 = arith.constant 0 : index
      %12 = vector.load %arg7[%c0_8, %c0_9] : memref<64x512xf32, #tpu.memory_space<vmem>>, vector<64x512xf32>
      %c0_10 = arith.constant 0 : index
      %c0_11 = arith.constant 0 : index
      %13 = vector.load %arg5[%c0_10, %c0_11] : memref<1x512xf32, #tpu.memory_space<vmem>>, vector<1x512xf32>
      %14 = vector.broadcast %13 : vector<1x512xf32> to vector<64x512xf32>
      %15 = arith.addf %12, %14 : vector<64x512xf32>
      %cst_12 = arith.constant 1.000000e-01 : f32
      %16 = vector.broadcast %cst_12 : f32 to vector<64x512xf32>
      %17 = arith.mulf %16, %15 : vector<64x512xf32>
      %18 = arith.maximumf %15, %17 : vector<64x512xf32>
      %c0_13 = arith.constant 0 : index
      %c0_14 = arith.constant 0 : index
      %19 = vector.load %arg6[%c0_13, %c0_14] : memref<64x512xf32, #tpu.memory_space<vmem>>, vector<64x512xf32>
      tpu.vector_store %arg6[%c0_13, %c0_14], %18 {strides = array<i32>} : memref<64x512xf32, #tpu.memory_space<vmem>>, vector<64x512xf32>,
    } else {
    }
    return
  }
  func.func @transform_0(%arg0: i32, %arg1: i32, %arg2: i32) -> (i32, i32) {
    %c0_i32 = arith.constant 0 : i32
    return %arg0, %arg2 : i32, i32
  }
  func.func @transform_1(%arg0: i32, %arg1: i32, %arg2: i32) -> (i32, i32) {
    %c0_i32 = arith.constant 0 : i32
    return %arg1, %arg2 : i32, i32
  }
  func.func @transform_2(%arg0: i32, %arg1: i32, %arg2: i32) -> (i32, i32) {
    %c0_i32 = arith.constant 0 : i32
    %c0_i32_0 = arith.constant 0 : i32
    return %c0_i32, %arg1 : i32, i32
  }
  func.func @transform_3(%arg0: i32, %arg1: i32, %arg2: i32) -> (i32, i32) {
    %c0_i32 = arith.constant 0 : i32
    return %arg0, %arg1 : i32, i32
  }
}

</mosaic_0001>

<llo_original>
// kernel: tpu_custom_call.1
$region0: #{tpu_custom_call.1}
  #allocation0 [shape = 'u32[]', space=smem, size = 0x4, offset = 0x4, fixed_abs, tag = 'smem constant byte address 0x4 - core index']
  #allocation1 [shape = 'u32[144,128]{1,0:T(1,128)}', space=vmem, size = 0x12000, scoped, tag = 'internal scratch']
  %s0 = inlined_call_operand.hbm [shape: f32[64,512], index: 0, kind: input, shape index: {}]
  %s1 = inlined_call_operand.hbm [shape: f32[512,512], index: 1, kind: input, shape index: {}]
  %s2 = inlined_call_operand.hbm [shape: f32[1,512], index: 2, kind: input, shape index: {}]
  %s3 = inlined_call_operand.hbm [shape: f32[64,512], index: 3, kind: output, shape index: {}]
  %s4 = sld [smem:[#allocation0]]
  $region57: #{tpu_custom_call.1} parent=0
    _
  %s6 = ssub.s32 1, %s4
  %s7 = scalar_select 0, %s6, %s4
  $region1: #{tpu_custom_call.1} parent=0
    #allocation2 [shape = 'u8[131072]{0}', space=vmem, size = 0x20000, scoped, tag = 'input window, operand 0']
    #allocation3 [shape = 's32[2]{0}', space=sflag, size = 0x8, scoped, tag = 'scoped memory for tpu_custom_call.1']
    #allocation4 [shape = 's32[2]{0}', space=sflag, size = 0x8, scoped, tag = 'scoped memory for tpu_custom_call.1']
    #allocation5 [shape = 'u8[1048576]{0}', space=vmem, size = 0x100000, scoped, tag = 'input window, operand 1, single buffered']
    #allocation6 [shape = 's32[1]{0}', space=sflag, size = 0x4, scoped, tag = 'scoped memory for tpu_custom_call.1']
    #allocation7 [shape = 'u8[2048]{0}', space=vmem, size = 0x800, scoped, tag = 'input window, operand 2, single buffered']
    #allocation8 [shape = 'u8[131072]{0}', space=vmem, size = 0x20000, scoped, tag = 'output window, operand 0']
    %8 = vsyncpa [#allocation3], 0
    %s9 = scalar_lea.sflag [#allocation3], 1
    %10 = vsyncpa %s9, 0
    %11 = vsyncpa [#allocation6], 0
    %12 = vsyncpa [#allocation4], 0
    %s13 = scalar_lea.sflag [#allocation4], 1
    %14 = vsyncpa %s13, 0
    loop: start=0, step=1, limit=4
    $region2: #{tpu_custom_call.1} parent=1 // loop_pre_header
      _
    $region3: #{tpu_custom_call.1} parent=1 // loop_header
      %s16 = sphi 0, %s20
      %p17 = scmp.ge.s32.totalorder %s16, 4
      %s26 = sphi 0, %s28
      %s29 = sphi 0, %s26
      %s30 = sphi 0, %s29
      %s46 = sphi 0, %s30
      %s50 = sphi 0, %s50
      %s52 = sphi 0, %s50
      %s53 = sphi 0, %s52
      %s67 = sphi 0, %s53
      %s71 = sphi 0, %s71
      %s73 = sphi 0, %s71
      %s74 = sphi 0, %s73
      %s88 = sphi 0, %s74
      %s94 = sphi 0, %s96
      %s97 = sphi 0, %s94
      %s98 = sphi 0, %s97
      %s114 = sphi 0, %s98
    $region4: #{tpu_custom_call.1} parent=1 // loop_header_branch
      %19 = sbr.rel (%p17) target = $region8
    $region5: #{tpu_custom_call.1} parent=1 // loop_body
      %s21 = ssub.s32 %s16, 1
      %s22 = ssub.s32 %s16, 2
      %s23 = sadd.s32 %s16, 1
      %s24 = ssub.s32 %s16, %s23
      %p25 = scmp.eq.s32.totalorder %s24, 0
      %s27 = sadd.s32 %s26, 1
      %s28 = scalar_select %p25, %s26, %s27
      %p31 = pneg %p25
      %p32 = scmp.eq.s32.totalorder %s16, 1
      %p33 = por %p31, %p32
      %p34 = scmp.ne.s32.totalorder %s26, %s29
      %p35 = scmp.eq.s32.totalorder %s16, 0
      %p36 = por %p34, %p35
      %p37 = scmp.ne.s32.totalorder %s26, %s29
      %p38 = scmp.eq.s32.totalorder %s21, 1
      %p39 = por %p37, %p38
      %p40 = scmp.ne.s32.totalorder %s29, %s30
      %p41 = scmp.eq.s32.totalorder %s21, 0
      %p42 = por %p40, %p41
      %p43 = scmp.ne.s32.totalorder %s29, %s30
      %p44 = scmp.eq.s32.totalorder %s22, 1
      %p45 = por %p43, %p44
      %p47 = scmp.ne.s32.totalorder %s30, %s46
      %p48 = scmp.eq.s32.totalorder %s22, 0
      %p49 = por %p47, %p48
      %s51 = sadd.s32 %s50, 1
      %p54 = scmp.eq.s32.totalorder %s16, 1
      %p55 = scmp.ne.s32.totalorder %s50, %s52
      %p56 = scmp.eq.s32.totalorder %s16, 0
      %p57 = por %p55, %p56
      %p58 = scmp.ne.s32.totalorder %s50, %s52
      %p59 = scmp.eq.s32.totalorder %s21, 1
      %p60 = por %p58, %p59
      %p61 = scmp.ne.s32.totalorder %s52, %s53
      %p62 = scmp.eq.s32.totalorder %s21, 0
      %p63 = por %p61, %p62
      %p64 = scmp.ne.s32.totalorder %s52, %s53
      %p65 = scmp.eq.s32.totalorder %s22, 1
      %p66 = por %p64, %p65
      %p68 = scmp.ne.s32.totalorder %s53, %s67
      %p69 = scmp.eq.s32.totalorder %s22, 0
      %p70 = por %p68, %p69
      %s72 = sadd.s32 %s71, 1
      %p75 = scmp.eq.s32.totalorder %s16, 1
      %p76 = scmp.ne.s32.totalorder %s71, %s73
      %p77 = scmp.eq.s32.totalorder %s16, 0
      %p78 = por %p76, %p77
      %p79 = scmp.ne.s32.totalorder %s71, %s73
      %p80 = scmp.eq.s32.totalorder %s21, 1
      %p81 = por %p79, %p80
      %p82 = scmp.ne.s32.totalorder %s73, %s74
      %p83 = scmp.eq.s32.totalorder %s21, 0
      %p84 = por %p82, %p83
      %p85 = scmp.ne.s32.totalorder %s73, %s74
      %p86 = scmp.eq.s32.totalorder %s22, 1
      %p87 = por %p85, %p86
      %p89 = scmp.ne.s32.totalorder %s74, %s88
      %p90 = scmp.eq.s32.totalorder %s22, 0
      %p91 = por %p89, %p90
      %s92 = ssub.s32 %s16, %s23
      %p93 = scmp.eq.s32.totalorder %s92, 0
      %s95 = sadd.s32 %s94, 1
      %s96 = scalar_select %p93, %s94, %s95
      %p99 = pneg %p93
      %p100 = scmp.eq.s32.totalorder %s16, 1
      %p101 = por %p99, %p100
      %p102 = scmp.ne.s32.totalorder %s94, %s97
      %p103 = scmp.eq.s32.totalorder %s16, 0
      %p104 = por %p102, %p103
      %p105 = scmp.ne.s32.totalorder %s94, %s97
      %p106 = scmp.eq.s32.totalorder %s21, 1
      %p107 = por %p105, %p106
      %p108 = scmp.ne.s32.totalorder %s97, %s98
      %p109 = scmp.eq.s32.totalorder %s21, 0
      %p110 = por %p108, %p109
      %p111 = scmp.ne.s32.totalorder %s97, %s98
      %p112 = scmp.eq.s32.totalorder %s22, 1
      %p113 = por %p111, %p112
      %p115 = scmp.ne.s32.totalorder %s98, %s114
      %p116 = scmp.eq.s32.totalorder %s22, 0
      %p117 = por %p115, %p116
      %p118 = scmp.le.s32.totalorder 1, %s16
      %p119 = scmp.lt.s32.totalorder %s16, 3
      %p120 = pnand %p118, %p119
      %p121 = pneg %p120
      // Predicated region
      $region9: #{tpu_custom_call.1} parent=5 // pred_check
        _
      $region10: #{tpu_custom_call.1} parent=5 // pred_check_branch
        %123 = sbr.rel (%p120) target = $region12
      $region11: #{tpu_custom_call.1} parent=5 // pred_region
        %s124 = ssub.s32 %s16, 1
        // Predicated region
        $region13: #{tpu_custom_call.1} parent=11 // pred_check
          %p125 = pneg %p63
        $region14: #{tpu_custom_call.1} parent=11 // pred_check_branch
          %127 = sbr.rel (%p125) target = $region16
        $region15: #{tpu_custom_call.1} parent=11 // pred_region
          %s129 = ssub.s32 32768, 32768
          %130 = vsyncadd [#allocation6], %s129
          %s131 = sshll.u32 [#allocation5], 4
          %s132 = int_to_ptr.vmem [resolvable:$true] %s131
          %137 = dma.hbm_to_vmem [thread:$0]  %s1, 32768, %s132, [#allocation6], 512, 512, 32
        $region16: #{tpu_custom_call.1} parent=11 // pred_fallthru
          _
        // Predicated region
        $region17: #{tpu_custom_call.1} parent=11 // pred_check
          %p138 = pneg %p84
        $region18: #{tpu_custom_call.1} parent=11 // pred_check_branch
          %140 = sbr.rel (%p138) target = $region20
        $region19: #{tpu_custom_call.1} parent=11 // pred_region
          %s142 = ssub.s32 64, 64
          %143 = vsyncadd [#allocation6], %s142
          %s145 = sshll.u32 [#allocation7], 4
          %s146 = int_to_ptr.vmem [resolvable:$true] %s145
          %148 = dma.hbm_to_vmem [thread:$0]  %s2, 64, %s146, [#allocation6]
        $region20: #{tpu_custom_call.1} parent=11 // pred_fallthru
          _
      $region12: #{tpu_custom_call.1} parent=5 // pred_fallthru
        _
      %p149 = scmp.lt.s32.totalorder %s16, 2
      // Predicated region
      $region21: #{tpu_custom_call.1} parent=5 // pred_check
        %p150 = pneg %p149
      $region22: #{tpu_custom_call.1} parent=5 // pred_check_branch
        %152 = sbr.rel (%p150) target = $region24
      $region23: #{tpu_custom_call.1} parent=5 // pred_region
        // Predicated region
        $region25: #{tpu_custom_call.1} parent=23 // pred_check
          %p153 = pneg %p36
        $region26: #{tpu_custom_call.1} parent=23 // pred_check_branch
          %155 = sbr.rel (%p153) target = $region28
        $region27: #{tpu_custom_call.1} parent=23 // pred_region
          %s156 = sand.u32 %s26, 1
          %s157 = scalar_lea.sflag [#allocation3], %s156
          %s158 = sand.u32 %s26, 1
          %s159 = smul.addr %s158, 128
          %s160 = scalar_lea.vmem [#allocation2], %s159
          %s161 = smul.u32 4, %s16
          %s163 = ssub.s32 2048, 2048
          %164 = vsyncadd %s157, %s163
          %s165 = smul.addr %s161, 4
          %s166 = smul.addr %s165, 128
          %s167 = scalar_lea.hbm %s0, %s166
          %s168 = sshll.u32 %s160, 4
          %s169 = int_to_ptr.vmem [resolvable:$true] %s168
          %174 = dma.hbm_to_vmem [thread:$0]  %s167, 2048, %s169, %s157, 512, 512, 32
        $region28: #{tpu_custom_call.1} parent=23 // pred_fallthru
          _
      $region24: #{tpu_custom_call.1} parent=5 // pred_fallthru
        _
      %p175 = scmp.le.s32.totalorder 1, %s16
      %p176 = scmp.lt.s32.totalorder %s16, 3
      %p177 = pnand %p175, %p176
      %p178 = pneg %p177
      // Predicated region
      $region29: #{tpu_custom_call.1} parent=5 // pred_check
        _
      $region30: #{tpu_custom_call.1} parent=5 // pred_check_branch
        %180 = sbr.rel (%p177) target = $region32
      $region31: #{tpu_custom_call.1} parent=5 // pred_region
        %s181 = ssub.s32 %s16, 1
        %s182 = sand.u32 %s29, 1
        %s183 = scalar_lea.sflag [#allocation3], %s182
        %s184 = sand.u32 %s29, 1
        %s185 = smul.addr %s184, 128
        %s186 = scalar_lea.vmem [#allocation2], %s185
        // Predicated region
        $region33: #{tpu_custom_call.1} parent=31 // pred_check
          %p187 = pneg %p42
        $region34: #{tpu_custom_call.1} parent=31 // pred_check_branch
          %189 = sbr.rel (%p187) target = $region36
        $region35: #{tpu_custom_call.1} parent=31 // pred_region
          %190 = dma.done %s183, 2048
        $region36: #{tpu_custom_call.1} parent=31 // pred_fallthru
          _
        // Predicated region
        $region37: #{tpu_custom_call.1} parent=31 // pred_check
          %p191 = pneg %p63
        $region38: #{tpu_custom_call.1} parent=31 // pred_check_branch
          %193 = sbr.rel (%p191) target = $region40
        $region39: #{tpu_custom_call.1} parent=31 // pred_region
          %194 = dma.done [#allocation6], 32768
        $region40: #{tpu_custom_call.1} parent=31 // pred_fallthru
          _
        // Predicated region
        $region41: #{tpu_custom_call.1} parent=31 // pred_check
          %p195 = pneg %p84
        $region42: #{tpu_custom_call.1} parent=31 // pred_check_branch
          %197 = sbr.rel (%p195) target = $region44
        $region43: #{tpu_custom_call.1} parent=31 // pred_region
          %198 = dma.done [#allocation6], 64
        $region44: #{tpu_custom_call.1} parent=31 // pred_fallthru
          _
        %s199 = sand.u32 %s29, 1
        %s200 = scalar_lea.sflag [#allocation3], %s199
        %s201 = sand.u32 %s29, 1
        %s202 = smul.addr %s201, 128
        %s203 = scalar_lea.vmem [#allocation2], %s202
        %p204 = pneg %p42
        %p205 = pneg %p39
        %p206 = pneg %p63
        %p207 = pneg %p60
        %p208 = pneg %p84
        %p209 = pneg %p81
        %p210 = pneg %p110
        %p211 = pneg %p107
        %s212 = sand.u32 %s97, 1
        %s213 = scalar_lea.sflag [#allocation4], %s212
        %s214 = sand.u32 %s97, 1
        %s215 = smul.addr %s214, 128
        %s216 = scalar_lea.vmem [#allocation8], %s215
        %s217 = smul.u32 4, %s21
        %s218 = smul.u32 4, %s21
        %v219 = vld [vmem:[%s186] sm:$0xff]
        %v220 = vld [vmem:[%s186 + $0x8] sm:$0xff]
        %v221 = vld [vmem:[%s186 + $0x10] sm:$0xff]
        %v222 = vld [vmem:[%s186 + $0x18] sm:$0xff]
        %v223 = vld [vmem:[%s186 + $0x20] sm:$0xff]
        %v224 = vld [vmem:[%s186 + $0x28] sm:$0xff]
        %v225 = vld [vmem:[%s186 + $0x30] sm:$0xff]
        %v226 = vld [vmem:[%s186 + $0x38] sm:$0xff]
        %v227 = vld [vmem:[%s186 + $0x40] sm:$0xff]
        %v228 = vld [vmem:[%s186 + $0x48] sm:$0xff]
        %v229 = vld [vmem:[%s186 + $0x50] sm:$0xff]
        %v230 = vld [vmem:[%s186 + $0x58] sm:$0xff]
        %v231 = vld [vmem:[%s186 + $0x60] sm:$0xff]
        %v232 = vld [vmem:[%s186 + $0x68] sm:$0xff]
        %v233 = vld [vmem:[%s186 + $0x70] sm:$0xff]
        %v234 = vld [vmem:[%s186 + $0x78] sm:$0xff]
        %v235 = vld [vmem:[#allocation5] sm:$0xff]
        %v236 = vld [vmem:[#allocation5 + $0x8] sm:$0xff]
        %v237 = vld [vmem:[#allocation5 + $0x10] sm:$0xff]
        %v238 = vld [vmem:[#allocation5 + $0x18] sm:$0xff]
        %v239 = vld [vmem:[#allocation5 + $0x20] sm:$0xff]
        %v240 = vld [vmem:[#allocation5 + $0x28] sm:$0xff]
        %v241 = vld [vmem:[#allocation5 + $0x30] sm:$0xff]
        %v242 = vld [vmem:[#allocation5 + $0x38] sm:$0xff]
        %v243 = vld [vmem:[#allocation5 + $0x40] sm:$0xff]
        %v244 = vld [vmem:[#allocation5 + $0x48] sm:$0xff]
        %v245 = vld [vmem:[#allocation5 + $0x50] sm:$0xff]
        %v246 = vld [vmem:[#allocation5 + $0x58] sm:$0xff]
        %v247 = vld [vmem:[#allocation5 + $0x60] sm:$0xff]
        %v248 = vld [vmem:[#allocation5 + $0x68] sm:$0xff]
        %v249 = vld [vmem:[#allocation5 + $0x70] sm:$0xff]
        %v250 = vld [vmem:[#allocation5 + $0x78] sm:$0xff]
        %v251 = vld [vmem:[#allocation5 + $0x80] sm:$0xff]
        %v252 = vld [vmem:[#allocation5 + $0x88] sm:$0xff]
        %v253 = vld [vmem:[#allocation5 + $0x90] sm:$0xff]
        %v254 = vld [vmem:[#allocation5 + $0x98] sm:$0xff]
        %v255 = vld [vmem:[#allocation5 + $0xa0] sm:$0xff]
        %v256 = vld [vmem:[#allocation5 + $0xa8] sm:$0xff]
        %v257 = vld [vmem:[#allocation5 + $0xb0] sm:$0xff]
        %v258 = vld [vmem:[#allocation5 + $0xb8] sm:$0xff]
        %v259 = vld [vmem:[#allocation5 + $0xc0] sm:$0xff]
        %v260 = vld [vmem:[#allocation5 + $0xc8] sm:$0xff]
        %v261 = vld [vmem:[#allocation5 + $0xd0] sm:$0xff]
        %v262 = vld [vmem:[#allocation5 + $0xd8] sm:$0xff]
        %v263 = vld [vmem:[#allocation5 + $0xe0] sm:$0xff]
        %v264 = vld [vmem:[#allocation5 + $0xe8] sm:$0xff]
        %v265 = vld [vmem:[#allocation5 + $0xf0] sm:$0xff]
        %v266 = vld [vmem:[#allocation5 + $0xf8] sm:$0xff]
        %v267 = vld [vmem:[#allocation5 + $0x100] sm:$0xff]
        %v268 = vld [vmem:[#allocation5 + $0x108] sm:$0xff]
        %v269 = vld [vmem:[#allocation5 + $0x110] sm:$0xff]
        %v270 = vld [vmem:[#allocation5 + $0x118] sm:$0xff]
        %v271 = vld [vmem:[#allocation5 + $0x120] sm:$0xff]
        %v272 = vld [vmem:[#allocation5 + $0x128] sm:$0xff]
        %v273 = vld [vmem:[#allocation5 + $0x130] sm:$0xff]
        %v274 = vld [vmem:[#allocation5 + $0x138] sm:$0xff]
        %v275 = vld [vmem:[#allocation5 + $0x140] sm:$0xff]
        %v276 = vld [vmem:[#allocation5 + $0x148] sm:$0xff]
        %v277 = vld [vmem:[#allocation5 + $0x150] sm:$0xff]
        %v278 = vld [vmem:[#allocation5 + $0x158] sm:$0xff]
        %v279 = vld [vmem:[#allocation5 + $0x160] sm:$0xff]
        %v280 = vld [vmem:[#allocation5 + $0x168] sm:$0xff]
        %v281 = vld [vmem:[#allocation5 + $0x170] sm:$0xff]
        %v282 = vld [vmem:[#allocation5 + $0x178] sm:$0xff]
        %v283 = vld [vmem:[#allocation5 + $0x180] sm:$0xff]
        %v284 = vld [vmem:[#allocation5 + $0x188] sm:$0xff]
        %v285 = vld [vmem:[#allocation5 + $0x190] sm:$0xff]
        %v286 = vld [vmem:[#allocation5 + $0x198] sm:$0xff]
        %v287 = vld [vmem:[#allocation5 + $0x1a0] sm:$0xff]
        %v288 = vld [vmem:[#allocation5 + $0x1a8] sm:$0xff]
        %v289 = vld [vmem:[#allocation5 + $0x1b0] sm:$0xff]
        %v290 = vld [vmem:[#allocation5 + $0x1b8] sm:$0xff]
        %v291 = vld [vmem:[#allocation5 + $0x1c0] sm:$0xff]
        %v292 = vld [vmem:[#allocation5 + $0x1c8] sm:$0xff]
        %v293 = vld [vmem:[#allocation5 + $0x1d0] sm:$0xff]
        %v294 = vld [vmem:[#allocation5 + $0x1d8] sm:$0xff]
        %v295 = vld [vmem:[#allocation5 + $0x1e0] sm:$0xff]
        %v296 = vld [vmem:[#allocation5 + $0x1e8] sm:$0xff]
        %v297 = vld [vmem:[#allocation5 + $0x1f0] sm:$0xff]
        %v298 = vld [vmem:[#allocation5 + $0x1f8] sm:$0xff]
        %v299 = vld [vmem:[#allocation5 + $0x200] sm:$0xff]
        %v300 = vld [vmem:[#allocation5 + $0x208] sm:$0xff]
        %v301 = vld [vmem:[#allocation5 + $0x210] sm:$0xff]
        %v302 = vld [vmem:[#allocation5 + $0x218] sm:$0xff]
        %v303 = vld [vmem:[#allocation5 + $0x220] sm:$0xff]
        %v304 = vld [vmem:[#allocation5 + $0x228] sm:$0xff]
        %v305 = vld [vmem:[#allocation5 + $0x230] sm:$0xff]
        %v306 = vld [vmem:[#allocation5 + $0x238] sm:$0xff]
        %v307 = vld [vmem:[#allocation5 + $0x240] sm:$0xff]
        %v308 = vld [vmem:[#allocation5 + $0x248] sm:$0xff]
        %v309 = vld [vmem:[#allocation5 + $0x250] sm:$0xff]
        %v310 = vld [vmem:[#allocation5 + $0x258] sm:$0xff]
        %v311 = vld [vmem:[#allocation5 + $0x260] sm:$0xff]
        %v312 = vld [vmem:[#allocation5 + $0x268] sm:$0xff]
        %v313 = vld [vmem:[#allocation5 + $0x270] sm:$0xff]
        %v314 = vld [vmem:[#allocation5 + $0x278] sm:$0xff]
        %v315 = vld [vmem:[#allocation5 + $0x280] sm:$0xff]
        %v316 = vld [vmem:[#allocation5 + $0x288] sm:$0xff]
        %v317 = vld [vmem:[#allocation5 + $0x290] sm:$0xff]
        %v318 = vld [vmem:[#allocation5 + $0x298] sm:$0xff]
        %v319 = vld [vmem:[#allocation5 + $0x2a0] sm:$0xff]
        %v320 = vld [vmem:[#allocation5 + $0x2a8] sm:$0xff]
        %v321 = vld [vmem:[#allocation5 + $0x2b0] sm:$0xff]
        %v322 = vld [vmem:[#allocation5 + $0x2b8] sm:$0xff]
        %v323 = vld [vmem:[#allocation5 + $0x2c0] sm:$0xff]
        %v324 = vld [vmem:[#allocation5 + $0x2c8] sm:$0xff]
        %v325 = vld [vmem:[#allocation5 + $0x2d0] sm:$0xff]
        %v326 = vld [vmem:[#allocation5 + $0x2d8] sm:$0xff]
        %v327 = vld [vmem:[#allocation5 + $0x2e0] sm:$0xff]
        %v328 = vld [vmem:[#allocation5 + $0x2e8] sm:$0xff]
        %v329 = vld [vmem:[#allocation5 + $0x2f0] sm:$0xff]
        %v330 = vld [vmem:[#allocation5 + $0x2f8] sm:$0xff]
        %v331 = vld [vmem:[#allocation5 + $0x300] sm:$0xff]
        %v332 = vld [vmem:[#allocation5 + $0x308] sm:$0xff]
        %v333 = vld [vmem:[#allocation5 + $0x310] sm:$0xff]
        %v334 = vld [vmem:[#allocation5 + $0x318] sm:$0xff]
        %v335 = vld [vmem:[#allocation5 + $0x320] sm:$0xff]
        %v336 = vld [vmem:[#allocation5 + $0x328] sm:$0xff]
        %v337 = vld [vmem:[#allocation5 + $0x330] sm:$0xff]
        %v338 = vld [vmem:[#allocation5 + $0x338] sm:$0xff]
        %v339 = vld [vmem:[#allocation5 + $0x340] sm:$0xff]
        %v340 = vld [vmem:[#allocation5 + $0x348] sm:$0xff]
        %v341 = vld [vmem:[#allocation5 + $0x350] sm:$0xff]
        %v342 = vld [vmem:[#allocation5 + $0x358] sm:$0xff]
        %v343 = vld [vmem:[#allocation5 + $0x360] sm:$0xff]
        %v344 = vld [vmem:[#allocation5 + $0x368] sm:$0xff]
        %v345 = vld [vmem:[#allocation5 + $0x370] sm:$0xff]
        %v346 = vld [vmem:[#allocation5 + $0x378] sm:$0xff]
        %v347 = vld [vmem:[#allocation5 + $0x380] sm:$0xff]
        %v348 = vld [vmem:[#allocation5 + $0x388] sm:$0xff]
        %v349 = vld [vmem:[#allocation5 + $0x390] sm:$0xff]
        %v350 = vld [vmem:[#allocation5 + $0x398] sm:$0xff]
        %v351 = vld [vmem:[#allocation5 + $0x3a0] sm:$0xff]
        %v352 = vld [vmem:[#allocation5 + $0x3a8] sm:$0xff]
        %v353 = vld [vmem:[#allocation5 + $0x3b0] sm:$0xff]
        %v354 = vld [vmem:[#allocation5 + $0x3b8] sm:$0xff]
        %v355 = vld [vmem:[#allocation5 + $0x3c0] sm:$0xff]
        %v356 = vld [vmem:[#allocation5 + $0x3c8] sm:$0xff]
        %v357 = vld [vmem:[#allocation5 + $0x3d0] sm:$0xff]
        %v358 = vld [vmem:[#allocation5 + $0x3d8] sm:$0xff]
        %v359 = vld [vmem:[#allocation5 + $0x3e0] sm:$0xff]
        %v360 = vld [vmem:[#allocation5 + $0x3e8] sm:$0xff]
        %v361 = vld [vmem:[#allocation5 + $0x3f0] sm:$0xff]
        %v362 = vld [vmem:[#allocation5 + $0x3f8] sm:$0xff]
        %v363 = vld [vmem:[#allocation5 + $0x400] sm:$0xff]
        %v364 = vld [vmem:[#allocation5 + $0x408] sm:$0xff]
        %v365 = vld [vmem:[#allocation5 + $0x410] sm:$0xff]
        %v366 = vld [vmem:[#allocation5 + $0x418] sm:$0xff]
        %v367 = vld [vmem:[#allocation5 + $0x420] sm:$0xff]
        %v368 = vld [vmem:[#allocation5 + $0x428] sm:$0xff]
        %v369 = vld [vmem:[#allocation5 + $0x430] sm:$0xff]
        %v370 = vld [vmem:[#allocation5 + $0x438] sm:$0xff]
        %v371 = vld [vmem:[#allocation5 + $0x440] sm:$0xff]
        %v372 = vld [vmem:[#allocation5 + $0x448] sm:$0xff]
        %v373 = vld [vmem:[#allocation5 + $0x450] sm:$0xff]
        %v374 = vld [vmem:[#allocation5 + $0x458] sm:$0xff]
        %v375 = vld [vmem:[#allocation5 + $0x460] sm:$0xff]
        %v376 = vld [vmem:[#allocation5 + $0x468] sm:$0xff]
        %v377 = vld [vmem:[#allocation5 + $0x470] sm:$0xff]
        %v378 = vld [vmem:[#allocation5 + $0x478] sm:$0xff]
        %v379 = vld [vmem:[#allocation5 + $0x480] sm:$0xff]
        %v380 = vld [vmem:[#allocation5 + $0x488] sm:$0xff]
        %v381 = vld [vmem:[#allocation5 + $0x490] sm:$0xff]
        %v382 = vld [vmem:[#allocation5 + $0x498] sm:$0xff]
        %v383 = vld [vmem:[#allocation5 + $0x4a0] sm:$0xff]
        %v384 = vld [vmem:[#allocation5 + $0x4a8] sm:$0xff]
        %v385 = vld [vmem:[#allocation5 + $0x4b0] sm:$0xff]
        %v386 = vld [vmem:[#allocation5 + $0x4b8] sm:$0xff]
        %v387 = vld [vmem:[#allocation5 + $0x4c0] sm:$0xff]
        %v388 = vld [vmem:[#allocation5 + $0x4c8] sm:$0xff]
        %v389 = vld [vmem:[#allocation5 + $0x4d0] sm:$0xff]
        %v390 = vld [vmem:[#allocation5 + $0x4d8] sm:$0xff]
        %v391 = vld [vmem:[#allocation5 + $0x4e0] sm:$0xff]
        %v392 = vld [vmem:[#allocation5 + $0x4e8] sm:$0xff]
        %v393 = vld [vmem:[#allocation5 + $0x4f0] sm:$0xff]
        %v394 = vld [vmem:[#allocation5 + $0x4f8] sm:$0xff]
        %v395 = vld [vmem:[#allocation5 + $0x500] sm:$0xff]
        %v396 = vld [vmem:[#allocation5 + $0x508] sm:$0xff]
        %v397 = vld [vmem:[#allocation5 + $0x510] sm:$0xff]
        %v398 = vld [vmem:[#allocation5 + $0x518] sm:$0xff]
        %v399 = vld [vmem:[#allocation5 + $0x520] sm:$0xff]
        %v400 = vld [vmem:[#allocation5 + $0x528] sm:$0xff]
        %v401 = vld [vmem:[#allocation5 + $0x530] sm:$0xff]
        %v402 = vld [vmem:[#allocation5 + $0x538] sm:$0xff]
        %v403 = vld [vmem:[#allocation5 + $0x540] sm:$0xff]
        %v404 = vld [vmem:[#allocation5 + $0x548] sm:$0xff]
        %v405 = vld [vmem:[#allocation5 + $0x550] sm:$0xff]
        %v406 = vld [vmem:[#allocation5 + $0x558] sm:$0xff]
        %v407 = vld [vmem:[#allocation5 + $0x560] sm:$0xff]
        %v408 = vld [vmem:[#allocation5 + $0x568] sm:$0xff]
        %v409 = vld [vmem:[#allocation5 + $0x570] sm:$0xff]
        %v410 = vld [vmem:[#allocation5 + $0x578] sm:$0xff]
        %v411 = vld [vmem:[#allocation5 + $0x580] sm:$0xff]
        %v412 = vld [vmem:[#allocation5 + $0x588] sm:$0xff]
        %v413 = vld [vmem:[#allocation5 + $0x590] sm:$0xff]
        %v414 = vld [vmem:[#allocation5 + $0x598] sm:$0xff]
        %v415 = vld [vmem:[#allocation5 + $0x5a0] sm:$0xff]
        %v416 = vld [vmem:[#allocation5 + $0x5a8] sm:$0xff]
        %v417 = vld [vmem:[#allocation5 + $0x5b0] sm:$0xff]
        %v418 = vld [vmem:[#allocation5 + $0x5b8] sm:$0xff]
        %v419 = vld [vmem:[#allocation5 + $0x5c0] sm:$0xff]
        %v420 = vld [vmem:[#allocation5 + $0x5c8] sm:$0xff]
        %v421 = vld [vmem:[#allocation5 + $0x5d0] sm:$0xff]
        %v422 = vld [vmem:[#allocation5 + $0x5d8] sm:$0xff]
        %v423 = vld [vmem:[#allocation5 + $0x5e0] sm:$0xff]
        %v424 = vld [vmem:[#allocation5 + $0x5e8] sm:$0xff]
        %v425 = vld [vmem:[#allocation5 + $0x5f0] sm:$0xff]
        %v426 = vld [vmem:[#allocation5 + $0x5f8] sm:$0xff]
        %v427 = vld [vmem:[#allocation5 + $0x600] sm:$0xff]
        %v428 = vld [vmem:[#allocation5 + $0x608] sm:$0xff]
        %v429 = vld [vmem:[#allocation5 + $0x610] sm:$0xff]
        %v430 = vld [vmem:[#allocation5 + $0x618] sm:$0xff]
        %v431 = vld [vmem:[#allocation5 + $0x620] sm:$0xff]
        %v432 = vld [vmem:[#allocation5 + $0x628] sm:$0xff]
        %v433 = vld [vmem:[#allocation5 + $0x630] sm:$0xff]
        %v434 = vld [vmem:[#allocation5 + $0x638] sm:$0xff]
        %v435 = vld [vmem:[#allocation5 + $0x640] sm:$0xff]
        %v436 = vld [vmem:[#allocation5 + $0x648] sm:$0xff]
        %v437 = vld [vmem:[#allocation5 + $0x650] sm:$0xff]
        %v438 = vld [vmem:[#allocation5 + $0x658] sm:$0xff]
        %v439 = vld [vmem:[#allocation5 + $0x660] sm:$0xff]
        %v440 = vld [vmem:[#allocation5 + $0x668] sm:$0xff]
        %v441 = vld [vmem:[#allocation5 + $0x670] sm:$0xff]
        %v442 = vld [vmem:[#allocation5 + $0x678] sm:$0xff]
        %v443 = vld [vmem:[#allocation5 + $0x680] sm:$0xff]
        %v444 = vld [vmem:[#allocation5 + $0x688] sm:$0xff]
        %v445 = vld [vmem:[#allocation5 + $0x690] sm:$0xff]
        %v446 = vld [vmem:[#allocation5 + $0x698] sm:$0xff]
        %v447 = vld [vmem:[#allocation5 + $0x6a0] sm:$0xff]
        %v448 = vld [vmem:[#allocation5 + $0x6a8] sm:$0xff]
        %v449 = vld [vmem:[#allocation5 + $0x6b0] sm:$0xff]
        %v450 = vld [vmem:[#allocation5 + $0x6b8] sm:$0xff]
        %v451 = vld [vmem:[#allocation5 + $0x6c0] sm:$0xff]
        %v452 = vld [vmem:[#allocation5 + $0x6c8] sm:$0xff]
        %v453 = vld [vmem:[#allocation5 + $0x6d0] sm:$0xff]
        %v454 = vld [vmem:[#allocation5 + $0x6d8] sm:$0xff]
        %v455 = vld [vmem:[#allocation5 + $0x6e0] sm:$0xff]
        %v456 = vld [vmem:[#allocation5 + $0x6e8] sm:$0xff]
        %v457 = vld [vmem:[#allocation5 + $0x6f0] sm:$0xff]
        %v458 = vld [vmem:[#allocation5 + $0x6f8] sm:$0xff]
        %v459 = vld [vmem:[#allocation5 + $0x700] sm:$0xff]
        %v460 = vld [vmem:[#allocation5 + $0x708] sm:$0xff]
        %v461 = vld [vmem:[#allocation5 + $0x710] sm:$0xff]
        %v462 = vld [vmem:[#allocation5 + $0x718] sm:$0xff]
        %v463 = vld [vmem:[#allocation5 + $0x720] sm:$0xff]
        %v464 = vld [vmem:[#allocation5 + $0x728] sm:$0xff]
        %v465 = vld [vmem:[#allocation5 + $0x730] sm:$0xff]
        %v466 = vld [vmem:[#allocation5 + $0x738] sm:$0xff]
        %v467 = vld [vmem:[#allocation5 + $0x740] sm:$0xff]
        %v468 = vld [vmem:[#allocation5 + $0x748] sm:$0xff]
        %v469 = vld [vmem:[#allocation5 + $0x750] sm:$0xff]
        %v470 = vld [vmem:[#allocation5 + $0x758] sm:$0xff]
        %v471 = vld [vmem:[#allocation5 + $0x760] sm:$0xff]
        %v472 = vld [vmem:[#allocation5 + $0x768] sm:$0xff]
        %v473 = vld [vmem:[#allocation5 + $0x770] sm:$0xff]
        %v474 = vld [vmem:[#allocation5 + $0x778] sm:$0xff]
        %v475 = vld [vmem:[#allocation5 + $0x780] sm:$0xff]
        %v476 = vld [vmem:[#allocation5 + $0x788] sm:$0xff]
        %v477 = vld [vmem:[#allocation5 + $0x790] sm:$0xff]
        %v478 = vld [vmem:[#allocation5 + $0x798] sm:$0xff]
        %v479 = vld [vmem:[#allocation5 + $0x7a0] sm:$0xff]
        %v480 = vld [vmem:[#allocation5 + $0x7a8] sm:$0xff]
        %v481 = vld [vmem:[#allocation5 + $0x7b0] sm:$0xff]
        %v482 = vld [vmem:[#allocation5 + $0x7b8] sm:$0xff]
        %v483 = vld [vmem:[#allocation5 + $0x7c0] sm:$0xff]
        %v484 = vld [vmem:[#allocation5 + $0x7c8] sm:$0xff]
        %v485 = vld [vmem:[#allocation5 + $0x7d0] sm:$0xff]
        %v486 = vld [vmem:[#allocation5 + $0x7d8] sm:$0xff]
        %v487 = vld [vmem:[#allocation5 + $0x7e0] sm:$0xff]
        %v488 = vld [vmem:[#allocation5 + $0x7e8] sm:$0xff]
        %v489 = vld [vmem:[#allocation5 + $0x7f0] sm:$0xff]
        %v490 = vld [vmem:[#allocation5 + $0x7f8] sm:$0xff]
        %v491 = vld [vmem:[#allocation7] sm:$0xf]
        %v493 = vlaneseq
        %v494 = vshrl.u32 %v493, 7
        %v495 = vsub.s32 0, %v494
        %v496 = vrot.slane %v491, %v495
        %v497 = vlaneseq
        %v498 = vshrl.u32 %v497, 7
        %v499 = vsub.s32 1, %v498
        %v500 = vrot.slane %v491, %v499
        %v501 = vlaneseq
        %v502 = vshrl.u32 %v501, 7
        %v503 = vsub.s32 2, %v502
        %v504 = vrot.slane %v491, %v503
        %v505 = vlaneseq
        %v506 = vshrl.u32 %v505, 7
        %v507 = vsub.s32 3, %v506
        %v508 = vrot.slane %v491, %v507
        %513 = vmatprep.subr.mxu0 %v296
        %514 = vmatpush1.xpose.msra.mxu0 %v295
        %515 = vmatprep.subr.mxu0 %v292
        %516 = vmatpush1.xpose.msra.mxu0 %v291
        %517 = vmatprep.subr.mxu0 %v288
        %518 = vmatpush1.xpose.msra.mxu0 %v287
        %519 = vmatprep.subr.mxu0 %v284
        %520 = vmatpush1.xpose.msra.mxu0 %v283
        %521 = vmatprep.subr.mxu0 %v280
        %522 = vmatpush1.xpose.msra.mxu0 %v279
        %523 = vmatprep.subr.mxu0 %v276
        %524 = vmatpush1.xpose.msra.mxu0 %v275
        %525 = vmatprep.subr.mxu0 %v272
        %526 = vmatpush1.xpose.msra.mxu0 %v271
        %527 = vmatprep.subr.mxu0 %v268
        %528 = vmatpush1.xpose.msra.mxu0 %v267
        %529 = vmatprep.subr.mxu0 %v264
        %530 = vmatpush1.xpose.msra.mxu0 %v263
        %531 = vmatprep.subr.mxu0 %v260
        %532 = vmatpush1.xpose.msra.mxu0 %v259
        %533 = vmatprep.subr.mxu0 %v256
        %534 = vmatpush1.xpose.msra.mxu0 %v255
        %535 = vmatprep.subr.mxu0 %v252
        %536 = vmatpush1.xpose.msra.mxu0 %v251
        %537 = vmatprep.subr.mxu0 %v248
        %538 = vmatpush1.xpose.msra.mxu0 %v247
        %539 = vmatprep.subr.mxu0 %v244
        %540 = vmatpush1.xpose.msra.mxu0 %v243
        %541 = vmatprep.subr.mxu0 %v240
        %542 = vmatpush1.xpose.msra.mxu0 %v239
        %543 = vmatprep.subr.mxu0 %v236
        %544 = vmatpush1.xpose.msra.mxu0 %v235
        %545 = vmatprep.subr.mxu0 %v360
        %546 = vmatpush2.xpose.msra.mxu0 %v359
        %547 = vmatprep.subr.mxu0 %v356
        %548 = vmatpush2.xpose.msra.mxu0 %v355
        %549 = vmatprep.subr.mxu0 %v352
        %550 = vmatpush2.xpose.msra.mxu0 %v351
        %551 = vmatprep.subr.mxu0 %v348
        %552 = vmatpush2.xpose.msra.mxu0 %v347
        %553 = vmatprep.subr.mxu0 %v344
        %554 = vmatpush2.xpose.msra.mxu0 %v343
        %555 = vmatprep.subr.mxu0 %v340
        %556 = vmatpush2.xpose.msra.mxu0 %v339
        %557 = vmatprep.subr.mxu0 %v336
        %558 = vmatpush2.xpose.msra.mxu0 %v335
        %559 = vmatprep.subr.mxu0 %v332
        %560 = vmatpush2.xpose.msra.mxu0 %v331
        %561 = vmatprep.subr.mxu0 %v328
        %562 = vmatpush2.xpose.msra.mxu0 %v327
        %563 = vmatprep.subr.mxu0 %v324
        %564 = vmatpush2.xpose.msra.mxu0 %v323
        %565 = vmatprep.subr.mxu0 %v320
        %566 = vmatpush2.xpose.msra.mxu0 %v319
        %567 = vmatprep.subr.mxu0 %v316
        %568 = vmatpush2.xpose.msra.mxu0 %v315
        %569 = vmatprep.subr.mxu0 %v312
        %570 = vmatpush2.xpose.msra.mxu0 %v311
        %571 = vmatprep.subr.mxu0 %v308
        %572 = vmatpush2.xpose.msra.mxu0 %v307
        %573 = vmatprep.subr.mxu0 %v304
        %574 = vmatpush2.xpose.msra.mxu0 %v303
        %575 = vmatprep.subr.mxu0 %v300
        %576 = vmatpush2.xpose.msra.mxu0 %v299
        %577 = vmatprep.mubr.f32.mxu0 %v220
        %578 = vmatmul.mubr.f32.gmra.mxu0 %v219
        %v579 = vpop.f32.mrf.mxu0
        %v580 = vadd.f32 %v496, %v579
        %v581 = vpop.f32.mrf.mxu0
        %v582 = vadd.f32 %v500, %v581
        %583 = vmatprep.mubr.f32.mxu0 %v224
        %584 = vmatmul.mubr.f32.gmra.mxu0 %v223
        %v585 = vpop.f32.mrf.mxu0
        %v586 = vadd.f32 %v496, %v585
        %v587 = vpop.f32.mrf.mxu0
        %v588 = vadd.f32 %v500, %v587
        %589 = vmatprep.mubr.f32.mxu0 %v228
        %590 = vmatmul.mubr.f32.gmra.mxu0 %v227
        %v591 = vpop.f32.mrf.mxu0
        %v592 = vadd.f32 %v496, %v591
        %v593 = vpop.f32.mrf.mxu0
        %v594 = vadd.f32 %v500, %v593
        %595 = vmatprep.mubr.f32.mxu0 %v232
        %596 = vmatmul.mubr.f32.gmra.mxu0 %v231
        %v597 = vpop.f32.mrf.mxu0
        %v598 = vadd.f32 %v496, %v597
        %v599 = vpop.f32.mrf.mxu0
        %v600 = vadd.f32 %v500, %v599
        %601 = vdwg.mxu0
        %602 = vmatprep.subr.mxu0 %v298
        %603 = vmatpush1.xpose.msra.mxu0 %v297
        %604 = vmatprep.subr.mxu0 %v294
        %605 = vmatpush1.xpose.msra.mxu0 %v293
        %606 = vmatprep.subr.mxu0 %v290
        %607 = vmatpush1.xpose.msra.mxu0 %v289
        %608 = vmatprep.subr.mxu0 %v286
        %609 = vmatpush1.xpose.msra.mxu0 %v285
        %610 = vmatprep.subr.mxu0 %v282
        %611 = vmatpush1.xpose.msra.mxu0 %v281
        %612 = vmatprep.subr.mxu0 %v278
        %613 = vmatpush1.xpose.msra.mxu0 %v277
        %614 = vmatprep.subr.mxu0 %v274
        %615 = vmatpush1.xpose.msra.mxu0 %v273
        %616 = vmatprep.subr.mxu0 %v270
        %617 = vmatpush1.xpose.msra.mxu0 %v269
        %618 = vmatprep.subr.mxu0 %v266
        %619 = vmatpush1.xpose.msra.mxu0 %v265
        %620 = vmatprep.subr.mxu0 %v262
        %621 = vmatpush1.xpose.msra.mxu0 %v261
        %622 = vmatprep.subr.mxu0 %v258
        %623 = vmatpush1.xpose.msra.mxu0 %v257
        %624 = vmatprep.subr.mxu0 %v254
        %625 = vmatpush1.xpose.msra.mxu0 %v253
        %626 = vmatprep.subr.mxu0 %v250
        %627 = vmatpush1.xpose.msra.mxu0 %v249
        %628 = vmatprep.subr.mxu0 %v246
        %629 = vmatpush1.xpose.msra.mxu0 %v245
        %630 = vmatprep.subr.mxu0 %v242
        %631 = vmatpush1.xpose.msra.mxu0 %v241
        %632 = vmatprep.subr.mxu0 %v238
        %633 = vmatpush1.xpose.msra.mxu0 %v237
        %634 = vmatprep.subr.mxu0 %v362
        %635 = vmatpush2.xpose.msra.mxu0 %v361
        %636 = vmatprep.subr.mxu0 %v358
        %637 = vmatpush2.xpose.msra.mxu0 %v357
        %638 = vmatprep.subr.mxu0 %v354
        %639 = vmatpush2.xpose.msra.mxu0 %v353
        %640 = vmatprep.subr.mxu0 %v350
        %641 = vmatpush2.xpose.msra.mxu0 %v349
        %642 = vmatprep.subr.mxu0 %v346
        %643 = vmatpush2.xpose.msra.mxu0 %v345
        %644 = vmatprep.subr.mxu0 %v342
        %645 = vmatpush2.xpose.msra.mxu0 %v341
        %646 = vmatprep.subr.mxu0 %v338
        %647 = vmatpush2.xpose.msra.mxu0 %v337
        %648 = vmatprep.subr.mxu0 %v334
        %649 = vmatpush2.xpose.msra.mxu0 %v333
        %650 = vmatprep.subr.mxu0 %v330
        %651 = vmatpush2.xpose.msra.mxu0 %v329
        %652 = vmatprep.subr.mxu0 %v326
        %653 = vmatpush2.xpose.msra.mxu0 %v325
        %654 = vmatprep.subr.mxu0 %v322
        %655 = vmatpush2.xpose.msra.mxu0 %v321
        %656 = vmatprep.subr.mxu0 %v318
        %657 = vmatpush2.xpose.msra.mxu0 %v317
        %658 = vmatprep.subr.mxu0 %v314
        %659 = vmatpush2.xpose.msra.mxu0 %v313
        %660 = vmatprep.subr.mxu0 %v310
        %661 = vmatpush2.xpose.msra.mxu0 %v309
        %662 = vmatprep.subr.mxu0 %v306
        %663 = vmatpush2.xpose.msra.mxu0 %v305
        %664 = vmatprep.subr.mxu0 %v302
        %665 = vmatpush2.xpose.msra.mxu0 %v301
        %666 = vmatprep.mubr.f32.mxu0 %v222
        %667 = vmatmul.mubr.f32.gmra.mxu0 %v221
        %v668 = vpop.f32.mrf.mxu0
        %v669 = vadd.f32 %v580, %v668
        %v670 = vpop.f32.mrf.mxu0
        %v671 = vadd.f32 %v582, %v670
        %672 = vmatprep.mubr.f32.mxu0 %v226
        %673 = vmatmul.mubr.f32.gmra.mxu0 %v225
        %v674 = vpop.f32.mrf.mxu0
        %v675 = vadd.f32 %v586, %v674
        %v676 = vpop.f32.mrf.mxu0
        %v677 = vadd.f32 %v588, %v676
        %678 = vmatprep.mubr.f32.mxu0 %v230
        %679 = vmatmul.mubr.f32.gmra.mxu0 %v229
        %v680 = vpop.f32.mrf.mxu0
        %v681 = vadd.f32 %v592, %v680
        %v682 = vpop.f32.mrf.mxu0
        %v683 = vadd.f32 %v594, %v682
        %684 = vmatprep.mubr.f32.mxu0 %v234
        %685 = vmatmul.mubr.f32.gmra.mxu0 %v233
        %v686 = vpop.f32.mrf.mxu0
        %v687 = vadd.f32 %v598, %v686
        %v688 = vpop.f32.mrf.mxu0
        %v689 = vadd.f32 %v600, %v688
        %690 = vdwg.mxu0
        %691 = vmatprep.subr.mxu0 %v424
        %692 = vmatpush1.xpose.msra.mxu0 %v423
        %693 = vmatprep.subr.mxu0 %v420
        %694 = vmatpush1.xpose.msra.mxu0 %v419
        %695 = vmatprep.subr.mxu0 %v416
        %696 = vmatpush1.xpose.msra.mxu0 %v415
        %697 = vmatprep.subr.mxu0 %v412
        %698 = vmatpush1.xpose.msra.mxu0 %v411
        %699 = vmatprep.subr.mxu0 %v408
        %700 = vmatpush1.xpose.msra.mxu0 %v407
        %701 = vmatprep.subr.mxu0 %v404
        %702 = vmatpush1.xpose.msra.mxu0 %v403
        %703 = vmatprep.subr.mxu0 %v400
        %704 = vmatpush1.xpose.msra.mxu0 %v399
        %705 = vmatprep.subr.mxu0 %v396
        %706 = vmatpush1.xpose.msra.mxu0 %v395
        %707 = vmatprep.subr.mxu0 %v392
        %708 = vmatpush1.xpose.msra.mxu0 %v391
        %709 = vmatprep.subr.mxu0 %v388
        %710 = vmatpush1.xpose.msra.mxu0 %v387
        %711 = vmatprep.subr.mxu0 %v384
        %712 = vmatpush1.xpose.msra.mxu0 %v383
        %713 = vmatprep.subr.mxu0 %v380
        %714 = vmatpush1.xpose.msra.mxu0 %v379
        %715 = vmatprep.subr.mxu0 %v376
        %716 = vmatpush1.xpose.msra.mxu0 %v375
        %717 = vmatprep.subr.mxu0 %v372
        %718 = vmatpush1.xpose.msra.mxu0 %v371
        %719 = vmatprep.subr.mxu0 %v368
        %720 = vmatpush1.xpose.msra.mxu0 %v367
        %721 = vmatprep.subr.mxu0 %v364
        %722 = vmatpush1.xpose.msra.mxu0 %v363
        %723 = vmatprep.subr.mxu0 %v488
        %724 = vmatpush2.xpose.msra.mxu0 %v487
        %725 = vmatprep.subr.mxu0 %v484
        %726 = vmatpush2.xpose.msra.mxu0 %v483
        %727 = vmatprep.subr.mxu0 %v480
        %728 = vmatpush2.xpose.msra.mxu0 %v479
        %729 = vmatprep.subr.mxu0 %v476
        %730 = vmatpush2.xpose.msra.mxu0 %v475
        %731 = vmatprep.subr.mxu0 %v472
        %732 = vmatpush2.xpose.msra.mxu0 %v471
        %733 = vmatprep.subr.mxu0 %v468
        %734 = vmatpush2.xpose.msra.mxu0 %v467
        %735 = vmatprep.subr.mxu0 %v464
        %736 = vmatpush2.xpose.msra.mxu0 %v463
        %737 = vmatprep.subr.mxu0 %v460
        %738 = vmatpush2.xpose.msra.mxu0 %v459
        %739 = vmatprep.subr.mxu0 %v456
        %740 = vmatpush2.xpose.msra.mxu0 %v455
        %741 = vmatprep.subr.mxu0 %v452
        %742 = vmatpush2.xpose.msra.mxu0 %v451
        %743 = vmatprep.subr.mxu0 %v448
        %744 = vmatpush2.xpose.msra.mxu0 %v447
        %745 = vmatprep.subr.mxu0 %v444
        %746 = vmatpush2.xpose.msra.mxu0 %v443
        %747 = vmatprep.subr.mxu0 %v440
        %748 = vmatpush2.xpose.msra.mxu0 %v439
        %749 = vmatprep.subr.mxu0 %v436
        %750 = vmatpush2.xpose.msra.mxu0 %v435
        %751 = vmatprep.subr.mxu0 %v432
        %752 = vmatpush2.xpose.msra.mxu0 %v431
        %753 = vmatprep.subr.mxu0 %v428
        %754 = vmatpush2.xpose.msra.mxu0 %v427
        %755 = vmatprep.mubr.f32.mxu0 %v220
        %756 = vmatmul.mubr.f32.gmra.mxu0 %v219
        %v757 = vpop.f32.mrf.mxu0
        %v758 = vadd.f32 %v504, %v757
        %v759 = vpop.f32.mrf.mxu0
        %v760 = vadd.f32 %v508, %v759
        %761 = vmatprep.mubr.f32.mxu0 %v224
        %762 = vmatmul.mubr.f32.gmra.mxu0 %v223
        %v763 = vpop.f32.mrf.mxu0
        %v764 = vadd.f32 %v504, %v763
        %v765 = vpop.f32.mrf.mxu0
        %v766 = vadd.f32 %v508, %v765
        %767 = vmatprep.mubr.f32.mxu0 %v228
        %768 = vmatmul.mubr.f32.gmra.mxu0 %v227
        %v769 = vpop.f32.mrf.mxu0
        %v770 = vadd.f32 %v504, %v769
        %v771 = vpop.f32.mrf.mxu0
        %v772 = vadd.f32 %v508, %v771
        %773 = vmatprep.mubr.f32.mxu0 %v232
        %774 = vmatmul.mubr.f32.gmra.mxu0 %v231
        %v775 = vpop.f32.mrf.mxu0
        %v776 = vadd.f32 %v504, %v775
        %v777 = vpop.f32.mrf.mxu0
        %v778 = vadd.f32 %v508, %v777
        %779 = vdwg.mxu0
        %780 = vmatprep.subr.mxu0 %v426
        %781 = vmatpush1.xpose.msra.mxu0 %v425
        %782 = vmatprep.subr.mxu0 %v422
        %783 = vmatpush1.xpose.msra.mxu0 %v421
        %784 = vmatprep.subr.mxu0 %v418
        %785 = vmatpush1.xpose.msra.mxu0 %v417
        %786 = vmatprep.subr.mxu0 %v414
        %787 = vmatpush1.xpose.msra.mxu0 %v413
        %788 = vmatprep.subr.mxu0 %v410
        %789 = vmatpush1.xpose.msra.mxu0 %v409
        %790 = vmatprep.subr.mxu0 %v406
        %791 = vmatpush1.xpose.msra.mxu0 %v405
        %792 = vmatprep.subr.mxu0 %v402
        %793 = vmatpush1.xpose.msra.mxu0 %v401
        %794 = vmatprep.subr.mxu0 %v398
        %795 = vmatpush1.xpose.msra.mxu0 %v397
        %796 = vmatprep.subr.mxu0 %v394
        %797 = vmatpush1.xpose.msra.mxu0 %v393
        %798 = vmatprep.subr.mxu0 %v390
        %799 = vmatpush1.xpose.msra.mxu0 %v389
        %800 = vmatprep.subr.mxu0 %v386
        %801 = vmatpush1.xpose.msra.mxu0 %v385
        %802 = vmatprep.subr.mxu0 %v382
        %803 = vmatpush1.xpose.msra.mxu0 %v381
        %804 = vmatprep.subr.mxu0 %v378
        %805 = vmatpush1.xpose.msra.mxu0 %v377
        %806 = vmatprep.subr.mxu0 %v374
        %807 = vmatpush1.xpose.msra.mxu0 %v373
        %808 = vmatprep.subr.mxu0 %v370
        %809 = vmatpush1.xpose.msra.mxu0 %v369
        %810 = vmatprep.subr.mxu0 %v366
        %811 = vmatpush1.xpose.msra.mxu0 %v365
        %812 = vmatprep.subr.mxu0 %v490
        %813 = vmatpush2.xpose.msra.mxu0 %v489
        %814 = vmatprep.subr.mxu0 %v486
        %815 = vmatpush2.xpose.msra.mxu0 %v485
        %816 = vmatprep.subr.mxu0 %v482
        %817 = vmatpush2.xpose.msra.mxu0 %v481
        %818 = vmatprep.subr.mxu0 %v478
        %819 = vmatpush2.xpose.msra.mxu0 %v477
        %820 = vmatprep.subr.mxu0 %v474
        %821 = vmatpush2.xpose.msra.mxu0 %v473
        %822 = vmatprep.subr.mxu0 %v470
        %823 = vmatpush2.xpose.msra.mxu0 %v469
        %824 = vmatprep.subr.mxu0 %v466
        %825 = vmatpush2.xpose.msra.mxu0 %v465
        %826 = vmatprep.subr.mxu0 %v462
        %827 = vmatpush2.xpose.msra.mxu0 %v461
        %828 = vmatprep.subr.mxu0 %v458
        %829 = vmatpush2.xpose.msra.mxu0 %v457
        %830 = vmatprep.subr.mxu0 %v454
        %831 = vmatpush2.xpose.msra.mxu0 %v453
        %832 = vmatprep.subr.mxu0 %v450
        %833 = vmatpush2.xpose.msra.mxu0 %v449
        %834 = vmatprep.subr.mxu0 %v446
        %835 = vmatpush2.xpose.msra.mxu0 %v445
        %836 = vmatprep.subr.mxu0 %v442
        %837 = vmatpush2.xpose.msra.mxu0 %v441
        %838 = vmatprep.subr.mxu0 %v438
        %839 = vmatpush2.xpose.msra.mxu0 %v437
        %840 = vmatprep.subr.mxu0 %v434
        %841 = vmatpush2.xpose.msra.mxu0 %v433
        %842 = vmatprep.subr.mxu0 %v430
        %843 = vmatpush2.xpose.msra.mxu0 %v429
        %844 = vmatprep.mubr.f32.mxu0 %v222
        %845 = vmatmul.mubr.f32.gmra.mxu0 %v221
        %v846 = vpop.f32.mrf.mxu0
        %v847 = vadd.f32 %v758, %v846
        %v848 = vpop.f32.mrf.mxu0
        %v849 = vadd.f32 %v760, %v848
        %850 = vmatprep.mubr.f32.mxu0 %v226
        %851 = vmatmul.mubr.f32.gmra.mxu0 %v225
        %v852 = vpop.f32.mrf.mxu0
        %v853 = vadd.f32 %v764, %v852
        %v854 = vpop.f32.mrf.mxu0
        %v855 = vadd.f32 %v766, %v854
        %856 = vmatprep.mubr.f32.mxu0 %v230
        %857 = vmatmul.mubr.f32.gmra.mxu0 %v229
        %v858 = vpop.f32.mrf.mxu0
        %v859 = vadd.f32 %v770, %v858
        %v860 = vpop.f32.mrf.mxu0
        %v861 = vadd.f32 %v772, %v860
        %862 = vmatprep.mubr.f32.mxu0 %v234
        %863 = vmatmul.mubr.f32.gmra.mxu0 %v233
        %v864 = vpop.f32.mrf.mxu0
        %v865 = vadd.f32 %v776, %v864
        %v866 = vpop.f32.mrf.mxu0
        %v867 = vadd.f32 %v778, %v866
        %868 = vdwg.mxu0
        %v869 = vmul.f32 %v669, 0.1
        %v870 = vmul.f32 %v671, 0.1
        %v871 = vmul.f32 %v847, 0.1
        %v872 = vmul.f32 %v849, 0.1
        %v873 = vmul.f32 %v675, 0.1
        %v874 = vmul.f32 %v677, 0.1
        %v875 = vmul.f32 %v853, 0.1
        %v876 = vmul.f32 %v855, 0.1
        %v877 = vmul.f32 %v681, 0.1
        %v878 = vmul.f32 %v683, 0.1
        %v879 = vmul.f32 %v859, 0.1
        %v880 = vmul.f32 %v861, 0.1
        %v881 = vmul.f32 %v687, 0.1
        %v882 = vmul.f32 %v689, 0.1
        %v883 = vmul.f32 %v865, 0.1
        %v884 = vmul.f32 %v867, 0.1
        %v885 = vmax.f32 %v669, %v869
        %v886 = vmax.f32 %v671, %v870
        %v887 = vmax.f32 %v847, %v871
        %v888 = vmax.f32 %v849, %v872
        %v889 = vmax.f32 %v675, %v873
        %v890 = vmax.f32 %v677, %v874
        %v891 = vmax.f32 %v853, %v875
        %v892 = vmax.f32 %v855, %v876
        %v893 = vmax.f32 %v681, %v877
        %v894 = vmax.f32 %v683, %v878
        %v895 = vmax.f32 %v859, %v879
        %v896 = vmax.f32 %v861, %v880
        %v897 = vmax.f32 %v687, %v881
        %v898 = vmax.f32 %v689, %v882
        %v899 = vmax.f32 %v865, %v883
        %v900 = vmax.f32 %v867, %v884
        %901 = vst [vmem:[%s216] sm:$0xff] %v885
        %902 = vst [vmem:[%s216 + $0x8] sm:$0xff] %v886
        %903 = vst [vmem:[%s216 + $0x10] sm:$0xff] %v887
        %904 = vst [vmem:[%s216 + $0x18] sm:$0xff] %v888
        %905 = vst [vmem:[%s216 + $0x20] sm:$0xff] %v889
        %906 = vst [vmem:[%s216 + $0x28] sm:$0xff] %v890
        %907 = vst [vmem:[%s216 + $0x30] sm:$0xff] %v891
        %908 = vst [vmem:[%s216 + $0x38] sm:$0xff] %v892
        %909 = vst [vmem:[%s216 + $0x40] sm:$0xff] %v893
        %910 = vst [vmem:[%s216 + $0x48] sm:$0xff] %v894
        %911 = vst [vmem:[%s216 + $0x50] sm:$0xff] %v895
        %912 = vst [vmem:[%s216 + $0x58] sm:$0xff] %v896
        %913 = vst [vmem:[%s216 + $0x60] sm:$0xff] %v897
        %914 = vst [vmem:[%s216 + $0x68] sm:$0xff] %v898
        %915 = vst [vmem:[%s216 + $0x70] sm:$0xff] %v899
        %916 = vst [vmem:[%s216 + $0x78] sm:$0xff] %v900
        %s917 = sand.u32 %s97, 1
        %s918 = scalar_lea.sflag [#allocation4], %s917
        %s919 = sand.u32 %s97, 1
        %s920 = smul.addr %s919, 128
        %s921 = scalar_lea.vmem [#allocation8], %s920
        // Predicated region
        $region45: #{tpu_custom_call.1} parent=31 // pred_check
          %p922 = pneg %p107
        $region46: #{tpu_custom_call.1} parent=31 // pred_check_branch
          %924 = sbr.rel (%p922) target = $region48
        $region47: #{tpu_custom_call.1} parent=31 // pred_region
          %s925 = smul.u32 4, %s21
          %s927 = ssub.s32 2048, 2048
          %928 = vsyncadd %s918, %s927
          %s929 = smul.addr %s925, 4
          %s930 = smul.addr %s929, 128
          %s931 = scalar_lea.hbm %s3, %s930
          %s932 = sshll.u32 %s921, 4
          %s933 = int_to_ptr.vmem [resolvable:$true] %s932
          %938 = dma.vmem_to_hbm [thread:$0]  %s933, 2048, %s931, %s918, 512, 512, 32
        $region48: #{tpu_custom_call.1} parent=31 // pred_fallthru
          _
      $region32: #{tpu_custom_call.1} parent=5 // pred_fallthru
        _
      %p939 = scmp.le.s32.totalorder 2, %s16
      // Predicated region
      $region49: #{tpu_custom_call.1} parent=5 // pred_check
        %p940 = pneg %p939
      $region50: #{tpu_custom_call.1} parent=5 // pred_check_branch
        %942 = sbr.rel (%p940) target = $region52
      $region51: #{tpu_custom_call.1} parent=5 // pred_region
        %s943 = ssub.s32 %s16, 2
        // Predicated region
        $region53: #{tpu_custom_call.1} parent=51 // pred_check
          %p944 = pneg %p113
        $region54: #{tpu_custom_call.1} parent=51 // pred_check_branch
          %946 = sbr.rel (%p944) target = $region56
        $region55: #{tpu_custom_call.1} parent=51 // pred_region
          %s947 = sand.u32 %s98, 1
          %s948 = scalar_lea.sflag [#allocation4], %s947
          %s949 = sand.u32 %s98, 1
          %s950 = smul.addr %s949, 128
          %s951 = scalar_lea.vmem [#allocation8], %s950
          %952 = dma.done %s948, 2048
        $region56: #{tpu_custom_call.1} parent=51 // pred_fallthru
          _
      $region52: #{tpu_custom_call.1} parent=5 // pred_fallthru
        _
    $region6: #{tpu_custom_call.1} parent=1 // loop_footer
      %s20 = sadd.s32 1, %s16
    $region7: #{tpu_custom_call.1} parent=1 // loop_footer_branch
      %15 = sbr.rel target = $region3
    $region8: #{tpu_custom_call.1} parent=1 // loop_exit
      _
    %953 = vsyncpa [#allocation3], 1
    %s954 = scalar_lea.sflag [#allocation3], 1
    %955 = vsyncpa %s954, 1
    %956 = vsyncpa [#allocation6], 1
    %957 = vsyncpa [#allocation4], 1
    %s958 = scalar_lea.sflag [#allocation4], 1
    %959 = vsyncpa %s958, 1

// kernel: tpu_custom_call.1
$region0: #{tpu_custom_call.1}
  #allocation0 [shape = 'u32[]', space=smem, size = 0x4, offset = 0x4, fixed_abs, tag = 'smem constant byte address 0x4 - core index']
  #allocation1 [shape = 'u32[144,128]{1,0:T(1,128)}', space=vmem, size = 0x12000, scoped, tag = 'internal scratch']
  %s0 = inlined_call_operand.hbm [shape: f32[64,512], index: 0, kind: input, shape index: {}]
  %s1 = inlined_call_operand.hbm [shape: f32[512,512], index: 1, kind: input, shape index: {}]
  %s2 = inlined_call_operand.hbm [shape: f32[1,512], index: 2, kind: input, shape index: {}]
  %s3 = inlined_call_operand.hbm [shape: f32[64,512], index: 3, kind: output, shape index: {}]
  %s4 = sld [smem:[#allocation0]]
  $region57: #{tpu_custom_call.1} parent=0
    _
  %s6 = ssub.s32 1, %s4
  %s7 = scalar_select 0, %s6, %s4
  $region1: #{tpu_custom_call.1} parent=0
    #allocation2 [shape = 'u8[131072]{0}', space=vmem, size = 0x20000, scoped, tag = 'input window, operand 0']
    #allocation3 [shape = 's32[2]{0}', space=sflag, size = 0x8, scoped, tag = 'scoped memory for tpu_custom_call.1']
    #allocation4 [shape = 's32[2]{0}', space=sflag, size = 0x8, scoped, tag = 'scoped memory for tpu_custom_call.1']
    #allocation5 [shape = 'u8[1048576]{0}', space=vmem, size = 0x100000, scoped, tag = 'input window, operand 1, single buffered']
    #allocation6 [shape = 's32[1]{0}', space=sflag, size = 0x4, scoped, tag = 'scoped memory for tpu_custom_call.1']
    #allocation7 [shape = 'u8[2048]{0}', space=vmem, size = 0x800, scoped, tag = 'input window, operand 2, single buffered']
    #allocation8 [shape = 'u8[131072]{0}', space=vmem, size = 0x20000, scoped, tag = 'output window, operand 0']
    %8 = vsyncpa [#allocation3], 0
    %s9 = scalar_lea.sflag [#allocation3], 1
    %10 = vsyncpa %s9, 0
    %11 = vsyncpa [#allocation6], 0
    %12 = vsyncpa [#allocation4], 0
    %s13 = scalar_lea.sflag [#allocation4], 1
    %14 = vsyncpa %s13, 0
    loop: start=0, step=1, limit=4
    $region2: #{tpu_custom_call.1} parent=1 // loop_pre_header
      _
    $region3: #{tpu_custom_call.1} parent=1 // loop_header
      %s16 = sphi 0, %s20
      %p17 = scmp.ge.s32.totalorder %s16, 4
      %s26 = sphi 0, %s28
      %s29 = sphi 0, %s26
      %s30 = sphi 0, %s29
      %s46 = sphi 0, %s30
      %s50 = sphi 0, %s50
      %s52 = sphi 0, %s50
      %s53 = sphi 0, %s52
      %s67 = sphi 0, %s53
      %s71 = sphi 0, %s71
      %s73 = sphi 0, %s71
      %s74 = sphi 0, %s73
      %s88 = sphi 0, %s74
      %s94 = sphi 0, %s96
      %s97 = sphi 0, %s94
      %s98 = sphi 0, %s97
      %s114 = sphi 0, %s98
    $region4: #{tpu_custom_call.1} parent=1 // loop_header_branch
      %19 = sbr.rel (%p17) target = $region8
    $region5: #{tpu_custom_call.1} parent=1 // loop_body
      %s21 = ssub.s32 %s16, 1
      %s22 = ssub.s32 %s16, 2
      %s23 = sadd.s32 %s16, 1
      %s24 = ssub.s32 %s16, %s23
      %p25 = scmp.eq.s32.totalorder %s24, 0
      %s27 = sadd.s32 %s26, 1
      %s28 = scalar_select %p25, %s26, %s27
      %p31 = pneg %p25
      %p32 = scmp.eq.s32.totalorder %s16, 1
      %p33 = por %p31, %p32
      %p34 = scmp.ne.s32.totalorder %s26, %s29
      %p35 = scmp.eq.s32.totalorder %s16, 0
      %p36 = por %p34, %p35
      %p37 = scmp.ne.s32.totalorder %s26, %s29
      %p38 = scmp.eq.s32.totalorder %s21, 1
      %p39 = por %p37, %p38
      %p40 = scmp.ne.s32.totalorder %s29, %s30
      %p41 = scmp.eq.s32.totalorder %s21, 0
      %p42 = por %p40, %p41
      %p43 = scmp.ne.s32.totalorder %s29, %s30
      %p44 = scmp.eq.s32.totalorder %s22, 1
      %p45 = por %p43, %p44
      %p47 = scmp.ne.s32.totalorder %s30, %s46
      %p48 = scmp.eq.s32.totalorder %s22, 0
      %p49 = por %p47, %p48
      %s51 = sadd.s32 %s50, 1
      %p54 = scmp.eq.s32.totalorder %s16, 1
      %p55 = scmp.ne.s32.totalorder %s50, %s52
      %p56 = scmp.eq.s32.totalorder %s16, 0
      %p57 = por %p55, %p56
      %p58 = scmp.ne.s32.totalorder %s50, %s52
      %p59 = scmp.eq.s32.totalorder %s21, 1
      %p60 = por %p58, %p59
      %p61 = scmp.ne.s32.totalorder %s52, %s53
      %p62 = scmp.eq.s32.totalorder %s21, 0
      %p63 = por %p61, %p62
      %p64 = scmp.ne.s32.totalorder %s52, %s53
      %p65 = scmp.eq.s32.totalorder %s22, 1
      %p66 = por %p64, %p65
      %p68 = scmp.ne.s32.totalorder %s53, %s67
      %p69 = scmp.eq.s32.totalorder %s22, 0
      %p70 = por %p68, %p69
      %s72 = sadd.s32 %s71, 1
      %p75 = scmp.eq.s32.totalorder %s16, 1
      %p76 = scmp.ne.s32.totalorder %s71, %s73
      %p77 = scmp.eq.s32.totalorder %s16, 0
      %p78 = por %p76, %p77
      %p79 = scmp.ne.s32.totalorder %s71, %s73
      %p80 = scmp.eq.s32.totalorder %s21, 1
      %p81 = por %p79, %p80
      %p82 = scmp.ne.s32.totalorder %s73, %s74
      %p83 = scmp.eq.s32.totalorder %s21, 0
      %p84 = por %p82, %p83
      %p85 = scmp.ne.s32.totalorder %s73, %s74
      %p86 = scmp.eq.s32.totalorder %s22, 1
      %p87 = por %p85, %p86
      %p89 = scmp.ne.s32.totalorder %s74, %s88
      %p90 = scmp.eq.s32.totalorder %s22, 0
      %p91 = por %p89, %p90
      %s92 = ssub.s32 %s16, %s23
      %p93 = scmp.eq.s32.totalorder %s92, 0
      %s95 = sadd.s32 %s94, 1
      %s96 = scalar_select %p93, %s94, %s95
      %p99 = pneg %p93
      %p100 = scmp.eq.s32.totalorder %s16, 1
      %p101 = por %p99, %p100
      %p102 = scmp.ne.s32.totalorder %s94, %s97
      %p103 = scmp.eq.s32.totalorder %s16, 0
      %p104 = por %p102, %p103
      %p105 = scmp.ne.s32.totalorder %s94, %s97
      %p106 = scmp.eq.s32.totalorder %s21, 1
      %p107 = por %p105, %p106
      %p108 = scmp.ne.s32.totalorder %s97, %s98
      %p109 = scmp.eq.s32.totalorder %s21, 0
      %p110 = por %p108, %p109
      %p111 = scmp.ne.s32.totalorder %s97, %s98
      %p112 = scmp.eq.s32.totalorder %s22, 1
      %p113 = por %p111, %p112
      %p115 = scmp.ne.s32.totalorder %s98, %s114
      %p116 = scmp.eq.s32.totalorder %s22, 0
      %p117 = por %p115, %p116
      %p118 = scmp.le.s32.totalorder 1, %s16
      %p119 = scmp.lt.s32.totalorder %s16, 3
      %p120 = pnand %p118, %p119
      %p121 = pneg %p120
      // Predicated region
      $region9: #{tpu_custom_call.1} parent=5 // pred_check
        _
      $region10: #{tpu_custom_call.1} parent=5 // pred_check_branch
        %123 = sbr.rel (%p120) target = $region12
      $region11: #{tpu_custom_call.1} parent=5 // pred_region
        %s124 = ssub.s32 %s16, 1
        // Predicated region
        $region13: #{tpu_custom_call.1} parent=11 // pred_check
          %p125 = pneg %p63
        $region14: #{tpu_custom_call.1} parent=11 // pred_check_branch
          %127 = sbr.rel (%p125) target = $region16
        $region15: #{tpu_custom_call.1} parent=11 // pred_region
          %s129 = ssub.s32 32768, 32768
          %130 = vsyncadd [#allocation6], %s129
          %s131 = sshll.u32 [#allocation5], 4
          %s132 = int_to_ptr.vmem [resolvable:$true] %s131
          %137 = dma.hbm_to_vmem [thread:$0]  %s1, 32768, %s132, [#allocation6], 512, 512, 32
        $region16: #{tpu_custom_call.1} parent=11 // pred_fallthru
          _
        // Predicated region
        $region17: #{tpu_custom_call.1} parent=11 // pred_check
          %p138 = pneg %p84
        $region18: #{tpu_custom_call.1} parent=11 // pred_check_branch
          %140 = sbr.rel (%p138) target = $region20
        $region19: #{tpu_custom_call.1} parent=11 // pred_region
          %s142 = ssub.s32 64, 64
          %143 = vsyncadd [#allocation6], %s142
          %s145 = sshll.u32 [#allocation7], 4
          %s146 = int_to_ptr.vmem [resolvable:$true] %s145
          %148 = dma.hbm_to_vmem [thread:$0]  %s2, 64, %s146, [#allocation6]
        $region20: #{tpu_custom_call.1} parent=11 // pred_fallthru
          _
      $region12: #{tpu_custom_call.1} parent=5 // pred_fallthru
        _
      %p149 = scmp.lt.s32.totalorder %s16, 2
      // Predicated region
      $region21: #{tpu_custom_call.1} parent=5 // pred_check
        %p150 = pneg %p149
      $region22: #{tpu_custom_call.1} parent=5 // pred_check_branch
        %152 = sbr.rel (%p150) target = $region24
      $region23: #{tpu_custom_call.1} parent=5 // pred_region
        // Predicated region
        $region25: #{tpu_custom_call.1} parent=23 // pred_check
          %p153 = pneg %p36
        $region26: #{tpu_custom_call.1} parent=23 // pred_check_branch
          %155 = sbr.rel (%p153) target = $region28
        $region27: #{tpu_custom_call.1} parent=23 // pred_region
          %s156 = sand.u32 %s26, 1
          %s157 = scalar_lea.sflag [#allocation3], %s156
          %s158 = sand.u32 %s26, 1
          %s159 = smul.addr %s158, 128
          %s160 = scalar_lea.vmem [#allocation2], %s159
          %s161 = smul.u32 4, %s16
          %s163 = ssub.s32 2048, 2048
          %164 = vsyncadd %s157, %s163
          %s165 = smul.addr %s161, 4
          %s166 = smul.addr %s165, 128
          %s167 = scalar_lea.hbm %s0, %s166
          %s168 = sshll.u32 %s160, 4
          %s169 = int_to_ptr.vmem [resolvable:$true] %s168
          %174 = dma.hbm_to_vmem [thread:$0]  %s167, 2048, %s169, %s157, 512, 512, 32
        $region28: #{tpu_custom_call.1} parent=23 // pred_fallthru
          _
      $region24: #{tpu_custom_call.1} parent=5 // pred_fallthru
        _
      %p175 = scmp.le.s32.totalorder 1, %s16
      %p176 = scmp.lt.s32.totalorder %s16, 3
      %p177 = pnand %p175, %p176
      %p178 = pneg %p177
      // Predicated region
      $region29: #{tpu_custom_call.1} parent=5 // pred_check
        _
      $region30: #{tpu_custom_call.1} parent=5 // pred_check_branch
        %180 = sbr.rel (%p177) target = $region32
      $region31: #{tpu_custom_call.1} parent=5 // pred_region
        %s181 = ssub.s32 %s16, 1
        %s182 = sand.u32 %s29, 1
        %s183 = scalar_lea.sflag [#allocation3], %s182
        %s184 = sand.u32 %s29, 1
        %s185 = smul.addr %s184, 128
        %s186 = scalar_lea.vmem [#allocation2], %s185
        // Predicated region
        $region33: #{tpu_custom_call.1} parent=31 // pred_check
          %p187 = pneg %p42
        $region34: #{tpu_custom_call.1} parent=31 // pred_check_branch
          %189 = sbr.rel (%p187) target = $region36
        $region35: #{tpu_custom_call.1} parent=31 // pred_region
          %190 = dma.done %s183, 2048
        $region36: #{tpu_custom_call.1} parent=31 // pred_fallthru
          _
        // Predicated region
        $region37: #{tpu_custom_call.1} parent=31 // pred_check
          %p191 = pneg %p63
        $region38: #{tpu_custom_call.1} parent=31 // pred_check_branch
          %193 = sbr.rel (%p191) target = $region40
        $region39: #{tpu_custom_call.1} parent=31 // pred_region
          %194 = dma.done [#allocation6], 32768
        $region40: #{tpu_custom_call.1} parent=31 // pred_fallthru
          _
        // Predicated region
        $region41: #{tpu_custom_call.1} parent=31 // pred_check
          %p195 = pneg %p84
        $region42: #{tpu_custom_call.1} parent=31 // pred_check_branch
          %197 = sbr.rel (%p195) target = $region44
        $region43: #{tpu_custom_call.1} parent=31 // pred_region
          %198 = dma.done [#allocation6], 64
        $region44: #{tpu_custom_call.1} parent=31 // pred_fallthru
          _
        %s199 = sand.u32 %s29, 1
        %s200 = scalar_lea.sflag [#allocation3], %s199
        %s201 = sand.u32 %s29, 1
        %s202 = smul.addr %s201, 128
        %s203 = scalar_lea.vmem [#allocation2], %s202
        %p204 = pneg %p42
        %p205 = pneg %p39
        %p206 = pneg %p63
        %p207 = pneg %p60
        %p208 = pneg %p84
        %p209 = pneg %p81
        %p210 = pneg %p110
        %p211 = pneg %p107
        %s212 = sand.u32 %s97, 1
        %s213 = scalar_lea.sflag [#allocation4], %s212
        %s214 = sand.u32 %s97, 1
        %s215 = smul.addr %s214, 128
        %s216 = scalar_lea.vmem [#allocation8], %s215
        %s217 = smul.u32 4, %s21
        %s218 = smul.u32 4, %s21
        %v219 = vld [vmem:[%s186] sm:$0xff]
        %v220 = vld [vmem:[%s186 + $0x8] sm:$0xff]
        %v221 = vld [vmem:[%s186 + $0x10] sm:$0xff]
        %v222 = vld [vmem:[%s186 + $0x18] sm:$0xff]
        %v223 = vld [vmem:[%s186 + $0x20] sm:$0xff]
        %v224 = vld [vmem:[%s186 + $0x28] sm:$0xff]
        %v225 = vld [vmem:[%s186 + $0x30] sm:$0xff]
        %v226 = vld [vmem:[%s186 + $0x38] sm:$0xff]
        %v227 = vld [vmem:[%s186 + $0x40] sm:$0xff]
        %v228 = vld [vmem:[%s186 + $0x48] sm:$0xff]
        %v229 = vld [vmem:[%s186 + $0x50] sm:$0xff]
        %v230 = vld [vmem:[%s186 + $0x58] sm:$0xff]
        %v231 = vld [vmem:[%s186 + $0x60] sm:$0xff]
        %v232 = vld [vmem:[%s186 + $0x68] sm:$0xff]
        %v233 = vld [vmem:[%s186 + $0x70] sm:$0xff]
        %v234 = vld [vmem:[%s186 + $0x78] sm:$0xff]
        %v235 = vld [vmem:[#allocation5] sm:$0xff]
        %v236 = vld [vmem:[#allocation5 + $0x8] sm:$0xff]
        %v237 = vld [vmem:[#allocation5 + $0x10] sm:$0xff]
        %v238 = vld [vmem:[#allocation5 + $0x18] sm:$0xff]
        %v239 = vld [vmem:[#allocation5 + $0x20] sm:$0xff]
        %v240 = vld [vmem:[#allocation5 + $0x28] sm:$0xff]
        %v241 = vld [vmem:[#allocation5 + $0x30] sm:$0xff]
        %v242 = vld [vmem:[#allocation5 + $0x38] sm:$0xff]
        %v243 = vld [vmem:[#allocation5 + $0x40] sm:$0xff]
        %v244 = vld [vmem:[#allocation5 + $0x48] sm:$0xff]
        %v245 = vld [vmem:[#allocation5 + $0x50] sm:$0xff]
        %v246 = vld [vmem:[#allocation5 + $0x58] sm:$0xff]
        %v247 = vld [vmem:[#allocation5 + $0x60] sm:$0xff]
        %v248 = vld [vmem:[#allocation5 + $0x68] sm:$0xff]
        %v249 = vld [vmem:[#allocation5 + $0x70] sm:$0xff]
        %v250 = vld [vmem:[#allocation5 + $0x78] sm:$0xff]
        %v251 = vld [vmem:[#allocation5 + $0x80] sm:$0xff]
        %v252 = vld [vmem:[#allocation5 + $0x88] sm:$0xff]
        %v253 = vld [vmem:[#allocation5 + $0x90] sm:$0xff]
        %v254 = vld [vmem:[#allocation5 + $0x98] sm:$0xff]
        %v255 = vld [vmem:[#allocation5 + $0xa0] sm:$0xff]
        %v256 = vld [vmem:[#allocation5 + $0xa8] sm:$0xff]
        %v257 = vld [vmem:[#allocation5 + $0xb0] sm:$0xff]
        %v258 = vld [vmem:[#allocation5 + $0xb8] sm:$0xff]
        %v259 = vld [vmem:[#allocation5 + $0xc0] sm:$0xff]
        %v260 = vld [vmem:[#allocation5 + $0xc8] sm:$0xff]
        %v261 = vld [vmem:[#allocation5 + $0xd0] sm:$0xff]
        %v262 = vld [vmem:[#allocation5 + $0xd8] sm:$0xff]
        %v263 = vld [vmem:[#allocation5 + $0xe0] sm:$0xff]
        %v264 = vld [vmem:[#allocation5 + $0xe8] sm:$0xff]
        %v265 = vld [vmem:[#allocation5 + $0xf0] sm:$0xff]
        %v266 = vld [vmem:[#allocation5 + $0xf8] sm:$0xff]
        %v267 = vld [vmem:[#allocation5 + $0x100] sm:$0xff]
        %v268 = vld [vmem:[#allocation5 + $0x108] sm:$0xff]
        %v269 = vld [vmem:[#allocation5 + $0x110] sm:$0xff]
        %v270 = vld [vmem:[#allocation5 + $0x118] sm:$0xff]
        %v271 = vld [vmem:[#allocation5 + $0x120] sm:$0xff]
        %v272 = vld [vmem:[#allocation5 + $0x128] sm:$0xff]
        %v273 = vld [vmem:[#allocation5 + $0x130] sm:$0xff]
        %v274 = vld [vmem:[#allocation5 + $0x138] sm:$0xff]
        %v275 = vld [vmem:[#allocation5 + $0x140] sm:$0xff]
        %v276 = vld [vmem:[#allocation5 + $0x148] sm:$0xff]
        %v277 = vld [vmem:[#allocation5 + $0x150] sm:$0xff]
        %v278 = vld [vmem:[#allocation5 + $0x158] sm:$0xff]
        %v279 = vld [vmem:[#allocation5 + $0x160] sm:$0xff]
        %v280 = vld [vmem:[#allocation5 + $0x168] sm:$0xff]
        %v281 = vld [vmem:[#allocation5 + $0x170] sm:$0xff]
        %v282 = vld [vmem:[#allocation5 + $0x178] sm:$0xff]
        %v283 = vld [vmem:[#allocation5 + $0x180] sm:$0xff]
        %v284 = vld [vmem:[#allocation5 + $0x188] sm:$0xff]
        %v285 = vld [vmem:[#allocation5 + $0x190] sm:$0xff]
        %v286 = vld [vmem:[#allocation5 + $0x198] sm:$0xff]
        %v287 = vld [vmem:[#allocation5 + $0x1a0] sm:$0xff]
        %v288 = vld [vmem:[#allocation5 + $0x1a8] sm:$0xff]
        %v289 = vld [vmem:[#allocation5 + $0x1b0] sm:$0xff]
        %v290 = vld [vmem:[#allocation5 + $0x1b8] sm:$0xff]
        %v291 = vld [vmem:[#allocation5 + $0x1c0] sm:$0xff]
        %v292 = vld [vmem:[#allocation5 + $0x1c8] sm:$0xff]
        %v293 = vld [vmem:[#allocation5 + $0x1d0] sm:$0xff]
        %v294 = vld [vmem:[#allocation5 + $0x1d8] sm:$0xff]
        %v295 = vld [vmem:[#allocation5 + $0x1e0] sm:$0xff]
        %v296 = vld [vmem:[#allocation5 + $0x1e8] sm:$0xff]
        %v297 = vld [vmem:[#allocation5 + $0x1f0] sm:$0xff]
        %v298 = vld [vmem:[#allocation5 + $0x1f8] sm:$0xff]
        %v299 = vld [vmem:[#allocation5 + $0x200] sm:$0xff]
        %v300 = vld [vmem:[#allocation5 + $0x208] sm:$0xff]
        %v301 = vld [vmem:[#allocation5 + $0x210] sm:$0xff]
        %v302 = vld [vmem:[#allocation5 + $0x218] sm:$0xff]
        %v303 = vld [vmem:[#allocation5 + $0x220] sm:$0xff]
        %v304 = vld [vmem:[#allocation5 + $0x228] sm:$0xff]
        %v305 = vld [vmem:[#allocation5 + $0x230] sm:$0xff]
        %v306 = vld [vmem:[#allocation5 + $0x238] sm:$0xff]
        %v307 = vld [vmem:[#allocation5 + $0x240] sm:$0xff]
        %v308 = vld [vmem:[#allocation5 + $0x248] sm:$0xff]
        %v309 = vld [vmem:[#allocation5 + $0x250] sm:$0xff]
        %v310 = vld [vmem:[#allocation5 + $0x258] sm:$0xff]
        %v311 = vld [vmem:[#allocation5 + $0x260] sm:$0xff]
        %v312 = vld [vmem:[#allocation5 + $0x268] sm:$0xff]
        %v313 = vld [vmem:[#allocation5 + $0x270] sm:$0xff]
        %v314 = vld [vmem:[#allocation5 + $0x278] sm:$0xff]
        %v315 = vld [vmem:[#allocation5 + $0x280] sm:$0xff]
        %v316 = vld [vmem:[#allocation5 + $0x288] sm:$0xff]
        %v317 = vld [vmem:[#allocation5 + $0x290] sm:$0xff]
        %v318 = vld [vmem:[#allocation5 + $0x298] sm:$0xff]
        %v319 = vld [vmem:[#allocation5 + $0x2a0] sm:$0xff]
        %v320 = vld [vmem:[#allocation5 + $0x2a8] sm:$0xff]
        %v321 = vld [vmem:[#allocation5 + $0x2b0] sm:$0xff]
        %v322 = vld [vmem:[#allocation5 + $0x2b8] sm:$0xff]
        %v323 = vld [vmem:[#allocation5 + $0x2c0] sm:$0xff]
        %v324 = vld [vmem:[#allocation5 + $0x2c8] sm:$0xff]
        %v325 = vld [vmem:[#allocation5 + $0x2d0] sm:$0xff]
        %v326 = vld [vmem:[#allocation5 + $0x2d8] sm:$0xff]
        %v327 = vld [vmem:[#allocation5 + $0x2e0] sm:$0xff]
        %v328 = vld [vmem:[#allocation5 + $0x2e8] sm:$0xff]
        %v329 = vld [vmem:[#allocation5 + $0x2f0] sm:$0xff]
        %v330 = vld [vmem:[#allocation5 + $0x2f8] sm:$0xff]
        %v331 = vld [vmem:[#allocation5 + $0x300] sm:$0xff]
        %v332 = vld [vmem:[#allocation5 + $0x308] sm:$0xff]
        %v333 = vld [vmem:[#allocation5 + $0x310] sm:$0xff]
        %v334 = vld [vmem:[#allocation5 + $0x318] sm:$0xff]
        %v335 = vld [vmem:[#allocation5 + $0x320] sm:$0xff]
        %v336 = vld [vmem:[#allocation5 + $0x328] sm:$0xff]
        %v337 = vld [vmem:[#allocation5 + $0x330] sm:$0xff]
        %v338 = vld [vmem:[#allocation5 + $0x338] sm:$0xff]
        %v339 = vld [vmem:[#allocation5 + $0x340] sm:$0xff]
        %v340 = vld [vmem:[#allocation5 + $0x348] sm:$0xff]
        %v341 = vld [vmem:[#allocation5 + $0x350] sm:$0xff]
        %v342 = vld [vmem:[#allocation5 + $0x358] sm:$0xff]
        %v343 = vld [vmem:[#allocation5 + $0x360] sm:$0xff]
        %v344 = vld [vmem:[#allocation5 + $0x368] sm:$0xff]
        %v345 = vld [vmem:[#allocation5 + $0x370] sm:$0xff]
        %v346 = vld [vmem:[#allocation5 + $0x378] sm:$0xff]
        %v347 = vld [vmem:[#allocation5 + $0x380] sm:$0xff]
        %v348 = vld [vmem:[#allocation5 + $0x388] sm:$0xff]
        %v349 = vld [vmem:[#allocation5 + $0x390] sm:$0xff]
        %v350 = vld [vmem:[#allocation5 + $0x398] sm:$0xff]
        %v351 = vld [vmem:[#allocation5 + $0x3a0] sm:$0xff]
        %v352 = vld [vmem:[#allocation5 + $0x3a8] sm:$0xff]
        %v353 = vld [vmem:[#allocation5 + $0x3b0] sm:$0xff]
        %v354 = vld [vmem:[#allocation5 + $0x3b8] sm:$0xff]
        %v355 = vld [vmem:[#allocation5 + $0x3c0] sm:$0xff]
        %v356 = vld [vmem:[#allocation5 + $0x3c8] sm:$0xff]
        %v357 = vld [vmem:[#allocation5 + $0x3d0] sm:$0xff]
        %v358 = vld [vmem:[#allocation5 + $0x3d8] sm:$0xff]
        %v359 = vld [vmem:[#allocation5 + $0x3e0] sm:$0xff]
        %v360 = vld [vmem:[#allocation5 + $0x3e8] sm:$0xff]
        %v361 = vld [vmem:[#allocation5 + $0x3f0] sm:$0xff]
        %v362 = vld [vmem:[#allocation5 + $0x3f8] sm:$0xff]
        %v363 = vld [vmem:[#allocation5 + $0x400] sm:$0xff]
        %v364 = vld [vmem:[#allocation5 + $0x408] sm:$0xff]
        %v365 = vld [vmem:[#allocation5 + $0x410] sm:$0xff]
        %v366 = vld [vmem:[#allocation5 + $0x418] sm:$0xff]
        %v367 = vld [vmem:[#allocation5 + $0x420] sm:$0xff]
        %v368 = vld [vmem:[#allocation5 + $0x428] sm:$0xff]
        %v369 = vld [vmem:[#allocation5 + $0x430] sm:$0xff]
        %v370 = vld [vmem:[#allocation5 + $0x438] sm:$0xff]
        %v371 = vld [vmem:[#allocation5 + $0x440] sm:$0xff]
        %v372 = vld [vmem:[#allocation5 + $0x448] sm:$0xff]
        %v373 = vld [vmem:[#allocation5 + $0x450] sm:$0xff]
        %v374 = vld [vmem:[#allocation5 + $0x458] sm:$0xff]
        %v375 = vld [vmem:[#allocation5 + $0x460] sm:$0xff]
        %v376 = vld [vmem:[#allocation5 + $0x468] sm:$0xff]
        %v377 = vld [vmem:[#allocation5 + $0x470] sm:$0xff]
        %v378 = vld [vmem:[#allocation5 + $0x478] sm:$0xff]
        %v379 = vld [vmem:[#allocation5 + $0x480] sm:$0xff]
        %v380 = vld [vmem:[#allocation5 + $0x488] sm:$0xff]
        %v381 = vld [vmem:[#allocation5 + $0x490] sm:$0xff]
        %v382 = vld [vmem:[#allocation5 + $0x498] sm:$0xff]
        %v383 = vld [vmem:[#allocation5 + $0x4a0] sm:$0xff]
        %v384 = vld [vmem:[#allocation5 + $0x4a8] sm:$0xff]
        %v385 = vld [vmem:[#allocation5 + $0x4b0] sm:$0xff]
        %v386 = vld [vmem:[#allocation5 + $0x4b8] sm:$0xff]
        %v387 = vld [vmem:[#allocation5 + $0x4c0] sm:$0xff]
        %v388 = vld [vmem:[#allocation5 + $0x4c8] sm:$0xff]
        %v389 = vld [vmem:[#allocation5 + $0x4d0] sm:$0xff]
        %v390 = vld [vmem:[#allocation5 + $0x4d8] sm:$0xff]
        %v391 = vld [vmem:[#allocation5 + $0x4e0] sm:$0xff]
        %v392 = vld [vmem:[#allocation5 + $0x4e8] sm:$0xff]
        %v393 = vld [vmem:[#allocation5 + $0x4f0] sm:$0xff]
        %v394 = vld [vmem:[#allocation5 + $0x4f8] sm:$0xff]
        %v395 = vld [vmem:[#allocation5 + $0x500] sm:$0xff]
        %v396 = vld [vmem:[#allocation5 + $0x508] sm:$0xff]
        %v397 = vld [vmem:[#allocation5 + $0x510] sm:$0xff]
        %v398 = vld [vmem:[#allocation5 + $0x518] sm:$0xff]
        %v399 = vld [vmem:[#allocation5 + $0x520] sm:$0xff]
        %v400 = vld [vmem:[#allocation5 + $0x528] sm:$0xff]
        %v401 = vld [vmem:[#allocation5 + $0x530] sm:$0xff]
        %v402 = vld [vmem:[#allocation5 + $0x538] sm:$0xff]
        %v403 = vld [vmem:[#allocation5 + $0x540] sm:$0xff]
        %v404 = vld [vmem:[#allocation5 + $0x548] sm:$0xff]
        %v405 = vld [vmem:[#allocation5 + $0x550] sm:$0xff]
        %v406 = vld [vmem:[#allocation5 + $0x558] sm:$0xff]
        %v407 = vld [vmem:[#allocation5 + $0x560] sm:$0xff]
        %v408 = vld [vmem:[#allocation5 + $0x568] sm:$0xff]
        %v409 = vld [vmem:[#allocation5 + $0x570] sm:$0xff]
        %v410 = vld [vmem:[#allocation5 + $0x578] sm:$0xff]
        %v411 = vld [vmem:[#allocation5 + $0x580] sm:$0xff]
        %v412 = vld [vmem:[#allocation5 + $0x588] sm:$0xff]
        %v413 = vld [vmem:[#allocation5 + $0x590] sm:$0xff]
        %v414 = vld [vmem:[#allocation5 + $0x598] sm:$0xff]
        %v415 = vld [vmem:[#allocation5 + $0x5a0] sm:$0xff]
        %v416 = vld [vmem:[#allocation5 + $0x5a8] sm:$0xff]
        %v417 = vld [vmem:[#allocation5 + $0x5b0] sm:$0xff]
        %v418 = vld [vmem:[#allocation5 + $0x5b8] sm:$0xff]
        %v419 = vld [vmem:[#allocation5 + $0x5c0] sm:$0xff]
        %v420 = vld [vmem:[#allocation5 + $0x5c8] sm:$0xff]
        %v421 = vld [vmem:[#allocation5 + $0x5d0] sm:$0xff]
        %v422 = vld [vmem:[#allocation5 + $0x5d8] sm:$0xff]
        %v423 = vld [vmem:[#allocation5 + $0x5e0] sm:$0xff]
        %v424 = vld [vmem:[#allocation5 + $0x5e8] sm:$0xff]
        %v425 = vld [vmem:[#allocation5 + $0x5f0] sm:$0xff]
        %v426 = vld [vmem:[#allocation5 + $0x5f8] sm:$0xff]
        %v427 = vld [vmem:[#allocation5 + $0x600] sm:$0xff]
        %v428 = vld [vmem:[#allocation5 + $0x608] sm:$0xff]
        %v429 = vld [vmem:[#allocation5 + $0x610] sm:$0xff]
        %v430 = vld [vmem:[#allocation5 + $0x618] sm:$0xff]
        %v431 = vld [vmem:[#allocation5 + $0x620] sm:$0xff]
        %v432 = vld [vmem:[#allocation5 + $0x628] sm:$0xff]
        %v433 = vld [vmem:[#allocation5 + $0x630] sm:$0xff]
        %v434 = vld [vmem:[#allocation5 + $0x638] sm:$0xff]
        %v435 = vld [vmem:[#allocation5 + $0x640] sm:$0xff]
        %v436 = vld [vmem:[#allocation5 + $0x648] sm:$0xff]
        %v437 = vld [vmem:[#allocation5 + $0x650] sm:$0xff]
        %v438 = vld [vmem:[#allocation5 + $0x658] sm:$0xff]
        %v439 = vld [vmem:[#allocation5 + $0x660] sm:$0xff]
        %v440 = vld [vmem:[#allocation5 + $0x668] sm:$0xff]
        %v441 = vld [vmem:[#allocation5 + $0x670] sm:$0xff]
        %v442 = vld [vmem:[#allocation5 + $0x678] sm:$0xff]
        %v443 = vld [vmem:[#allocation5 + $0x680] sm:$0xff]
        %v444 = vld [vmem:[#allocation5 + $0x688] sm:$0xff]
        %v445 = vld [vmem:[#allocation5 + $0x690] sm:$0xff]
        %v446 = vld [vmem:[#allocation5 + $0x698] sm:$0xff]
        %v447 = vld [vmem:[#allocation5 + $0x6a0] sm:$0xff]
        %v448 = vld [vmem:[#allocation5 + $0x6a8] sm:$0xff]
        %v449 = vld [vmem:[#allocation5 + $0x6b0] sm:$0xff]
        %v450 = vld [vmem:[#allocation5 + $0x6b8] sm:$0xff]
        %v451 = vld [vmem:[#allocation5 + $0x6c0] sm:$0xff]
        %v452 = vld [vmem:[#allocation5 + $0x6c8] sm:$0xff]
        %v453 = vld [vmem:[#allocation5 + $0x6d0] sm:$0xff]
        %v454 = vld [vmem:[#allocation5 + $0x6d8] sm:$0xff]
        %v455 = vld [vmem:[#allocation5 + $0x6e0] sm:$0xff]
        %v456 = vld [vmem:[#allocation5 + $0x6e8] sm:$0xff]
        %v457 = vld [vmem:[#allocation5 + $0x6f0] sm:$0xff]
        %v458 = vld [vmem:[#allocation5 + $0x6f8] sm:$0xff]
        %v459 = vld [vmem:[#allocation5 + $0x700] sm:$0xff]
        %v460 = vld [vmem:[#allocation5 + $0x708] sm:$0xff]
        %v461 = vld [vmem:[#allocation5 + $0x710] sm:$0xff]
        %v462 = vld [vmem:[#allocation5 + $0x718] sm:$0xff]
        %v463 = vld [vmem:[#allocation5 + $0x720] sm:$0xff]
        %v464 = vld [vmem:[#allocation5 + $0x728] sm:$0xff]
        %v465 = vld [vmem:[#allocation5 + $0x730] sm:$0xff]
        %v466 = vld [vmem:[#allocation5 + $0x738] sm:$0xff]
        %v467 = vld [vmem:[#allocation5 + $0x740] sm:$0xff]
        %v468 = vld [vmem:[#allocation5 + $0x748] sm:$0xff]
        %v469 = vld [vmem:[#allocation5 + $0x750] sm:$0xff]
        %v470 = vld [vmem:[#allocation5 + $0x758] sm:$0xff]
        %v471 = vld [vmem:[#allocation5 + $0x760] sm:$0xff]
        %v472 = vld [vmem:[#allocation5 + $0x768] sm:$0xff]
        %v473 = vld [vmem:[#allocation5 + $0x770] sm:$0xff]
        %v474 = vld [vmem:[#allocation5 + $0x778] sm:$0xff]
        %v475 = vld [vmem:[#allocation5 + $0x780] sm:$0xff]
        %v476 = vld [vmem:[#allocation5 + $0x788] sm:$0xff]
        %v477 = vld [vmem:[#allocation5 + $0x790] sm:$0xff]
        %v478 = vld [vmem:[#allocation5 + $0x798] sm:$0xff]
        %v479 = vld [vmem:[#allocation5 + $0x7a0] sm:$0xff]
        %v480 = vld [vmem:[#allocation5 + $0x7a8] sm:$0xff]
        %v481 = vld [vmem:[#allocation5 + $0x7b0] sm:$0xff]
        %v482 = vld [vmem:[#allocation5 + $0x7b8] sm:$0xff]
        %v483 = vld [vmem:[#allocation5 + $0x7c0] sm:$0xff]
        %v484 = vld [vmem:[#allocation5 + $0x7c8] sm:$0xff]
        %v485 = vld [vmem:[#allocation5 + $0x7d0] sm:$0xff]
        %v486 = vld [vmem:[#allocation5 + $0x7d8] sm:$0xff]
        %v487 = vld [vmem:[#allocation5 + $0x7e0] sm:$0xff]
        %v488 = vld [vmem:[#allocation5 + $0x7e8] sm:$0xff]
        %v489 = vld [vmem:[#allocation5 + $0x7f0] sm:$0xff]
        %v490 = vld [vmem:[#allocation5 + $0x7f8] sm:$0xff]
        %v491 = vld [vmem:[#allocation7] sm:$0xf]
        %v493 = vlaneseq
        %v494 = vshrl.u32 %v493, 7
        %v495 = vsub.s32 0, %v494
        %v496 = vrot.slane %v491, %v495
        %v497 = vlaneseq
        %v498 = vshrl.u32 %v497, 7
        %v499 = vsub.s32 1, %v498
        %v500 = vrot.slane %v491, %v499
        %v501 = vlaneseq
        %v502 = vshrl.u32 %v501, 7
        %v503 = vsub.s32 2, %v502
        %v504 = vrot.slane %v491, %v503
        %v505 = vlaneseq
        %v506 = vshrl.u32 %v505, 7
        %v507 = vsub.s32 3, %v506
        %v508 = vrot.slane %v491, %v507
        %513 = vmatprep.subr.mxu0 %v296
        %514 = vmatpush1.xpose.msra.mxu0 %v295
        %515 = vmatprep.subr.mxu0 %v292
        %516 = vmatpush1.xpose.msra.mxu0 %v291
        %517 = vmatprep.subr.mxu0 %v288
        %518 = vmatpush1.xpose.msra.mxu0 %v287
        %519 = vmatprep.subr.mxu0 %v284
        %520 = vmatpush1.xpose.msra.mxu0 %v283
        %521 = vmatprep.subr.mxu0 %v280
        %522 = vmatpush1.xpose.msra.mxu0 %v279
        %523 = vmatprep.subr.mxu0 %v276
        %524 = vmatpush1.xpose.msra.mxu0 %v275
        %525 = vmatprep.subr.mxu0 %v272
        %526 = vmatpush1.xpose.msra.mxu0 %v271
        %527 = vmatprep.subr.mxu0 %v268
        %528 = vmatpush1.xpose.msra.mxu0 %v267
        %529 = vmatprep.subr.mxu0 %v264
        %530 = vmatpush1.xpose.msra.mxu0 %v263
        %531 = vmatprep.subr.mxu0 %v260
        %532 = vmatpush1.xpose.msra.mxu0 %v259
        %533 = vmatprep.subr.mxu0 %v256
        %534 = vmatpush1.xpose.msra.mxu0 %v255
        %535 = vmatprep.subr.mxu0 %v252
        %536 = vmatpush1.xpose.msra.mxu0 %v251
        %537 = vmatprep.subr.mxu0 %v248
        %538 = vmatpush1.xpose.msra.mxu0 %v247
        %539 = vmatprep.subr.mxu0 %v244
        %540 = vmatpush1.xpose.msra.mxu0 %v243
        %541 = vmatprep.subr.mxu0 %v240
        %542 = vmatpush1.xpose.msra.mxu0 %v239
        %543 = vmatprep.subr.mxu0 %v236
        %544 = vmatpush1.xpose.msra.mxu0 %v235
        %545 = vmatprep.subr.mxu0 %v360
        %546 = vmatpush2.xpose.msra.mxu0 %v359
        %547 = vmatprep.subr.mxu0 %v356
        %548 = vmatpush2.xpose.msra.mxu0 %v355
        %549 = vmatprep.subr.mxu0 %v352
        %550 = vmatpush2.xpose.msra.mxu0 %v351
        %551 = vmatprep.subr.mxu0 %v348
        %552 = vmatpush2.xpose.msra.mxu0 %v347
        %553 = vmatprep.subr.mxu0 %v344
        %554 = vmatpush2.xpose.msra.mxu0 %v343
        %555 = vmatprep.subr.mxu0 %v340
        %556 = vmatpush2.xpose.msra.mxu0 %v339
        %557 = vmatprep.subr.mxu0 %v336
        %558 = vmatpush2.xpose.msra.mxu0 %v335
        %559 = vmatprep.subr.mxu0 %v332
        %560 = vmatpush2.xpose.msra.mxu0 %v331
        %561 = vmatprep.subr.mxu0 %v328
        %562 = vmatpush2.xpose.msra.mxu0 %v327
        %563 = vmatprep.subr.mxu0 %v324
        %564 = vmatpush2.xpose.msra.mxu0 %v323
        %565 = vmatprep.subr.mxu0 %v320
        %566 = vmatpush2.xpose.msra.mxu0 %v319
        %567 = vmatprep.subr.mxu0 %v316
        %568 = vmatpush2.xpose.msra.mxu0 %v315
        %569 = vmatprep.subr.mxu0 %v312
        %570 = vmatpush2.xpose.msra.mxu0 %v311
        %571 = vmatprep.subr.mxu0 %v308
        %572 = vmatpush2.xpose.msra.mxu0 %v307
        %573 = vmatprep.subr.mxu0 %v304
        %574 = vmatpush2.xpose.msra.mxu0 %v303
        %575 = vmatprep.subr.mxu0 %v300
        %576 = vmatpush2.xpose.msra.mxu0 %v299
        %577 = vmatprep.mubr.f32.mxu0 %v220
        %578 = vmatmul.mubr.f32.gmra.mxu0 %v219
        %v579 = vpop.f32.mrf.mxu0
        %v580 = vadd.f32 %v496, %v579
        %v581 = vpop.f32.mrf.mxu0
        %v582 = vadd.f32 %v500, %v581
        %583 = vmatprep.mubr.f32.mxu0 %v224
        %584 = vmatmul.mubr.f32.gmra.mxu0 %v223
        %v585 = vpop.f32.mrf.mxu0
        %v586 = vadd.f32 %v496, %v585
        %v587 = vpop.f32.mrf.mxu0
        %v588 = vadd.f32 %v500, %v587
        %589 = vmatprep.mubr.f32.mxu0 %v228
        %590 = vmatmul.mubr.f32.gmra.mxu0 %v227
        %v591 = vpop.f32.mrf.mxu0
        %v592 = vadd.f32 %v496, %v591
        %v593 = vpop.f32.mrf.mxu0
        %v594 = vadd.f32 %v500, %v593
        %595 = vmatprep.mubr.f32.mxu0 %v232
        %596 = vmatmul.mubr.f32.gmra.mxu0 %v231
        %v597 = vpop.f32.mrf.mxu0
        %v598 = vadd.f32 %v496, %v597
        %v599 = vpop.f32.mrf.mxu0
        %v600 = vadd.f32 %v500, %v599
        %601 = vdwg.mxu0
        %602 = vmatprep.subr.mxu0 %v298
        %603 = vmatpush1.xpose.msra.mxu0 %v297
        %604 = vmatprep.subr.mxu0 %v294
        %605 = vmatpush1.xpose.msra.mxu0 %v293
        %606 = vmatprep.subr.mxu0 %v290
        %607 = vmatpush1.xpose.msra.mxu0 %v289
        %608 = vmatprep.subr.mxu0 %v286
        %609 = vmatpush1.xpose.msra.mxu0 %v285
        %610 = vmatprep.subr.mxu0 %v282
        %611 = vmatpush1.xpose.msra.mxu0 %v281
        %612 = vmatprep.subr.mxu0 %v278
        %613 = vmatpush1.xpose.msra.mxu0 %v277
        %614 = vmatprep.subr.mxu0 %v274
        %615 = vmatpush1.xpose.msra.mxu0 %v273
        %616 = vmatprep.subr.mxu0 %v270
        %617 = vmatpush1.xpose.msra.mxu0 %v269
        %618 = vmatprep.subr.mxu0 %v266
        %619 = vmatpush1.xpose.msra.mxu0 %v265
        %620 = vmatprep.subr.mxu0 %v262
        %621 = vmatpush1.xpose.msra.mxu0 %v261
        %622 = vmatprep.subr.mxu0 %v258
        %623 = vmatpush1.xpose.msra.mxu0 %v257
        %624 = vmatprep.subr.mxu0 %v254
        %625 = vmatpush1.xpose.msra.mxu0 %v253
        %626 = vmatprep.subr.mxu0 %v250
        %627 = vmatpush1.xpose.msra.mxu0 %v249
        %628 = vmatprep.subr.mxu0 %v246
        %629 = vmatpush1.xpose.msra.mxu0 %v245
        %630 = vmatprep.subr.mxu0 %v242
        %631 = vmatpush1.xpose.msra.mxu0 %v241
        %632 = vmatprep.subr.mxu0 %v238
        %633 = vmatpush1.xpose.msra.mxu0 %v237
        %634 = vmatprep.subr.mxu0 %v362
        %635 = vmatpush2.xpose.msra.mxu0 %v361
        %636 = vmatprep.subr.mxu0 %v358
        %637 = vmatpush2.xpose.msra.mxu0 %v357
        %638 = vmatprep.subr.mxu0 %v354
        %639 = vmatpush2.xpose.msra.mxu0 %v353
        %640 = vmatprep.subr.mxu0 %v350
        %641 = vmatpush2.xpose.msra.mxu0 %v349
        %642 = vmatprep.subr.mxu0 %v346
        %643 = vmatpush2.xpose.msra.mxu0 %v345
        %644 = vmatprep.subr.mxu0 %v342
        %645 = vmatpush2.xpose.msra.mxu0 %v341
        %646 = vmatprep.subr.mxu0 %v338
        %647 = vmatpush2.xpose.msra.mxu0 %v337
        %648 = vmatprep.subr.mxu0 %v334
        %649 = vmatpush2.xpose.msra.mxu0 %v333
        %650 = vmatprep.subr.mxu0 %v330
        %651 = vmatpush2.xpose.msra.mxu0 %v329
        %652 = vmatprep.subr.mxu0 %v326
        %653 = vmatpush2.xpose.msra.mxu0 %v325
        %654 = vmatprep.subr.mxu0 %v322
        %655 = vmatpush2.xpose.msra.mxu0 %v321
        %656 = vmatprep.subr.mxu0 %v318
        %657 = vmatpush2.xpose.msra.mxu0 %v317
        %658 = vmatprep.subr.mxu0 %v314
        %659 = vmatpush2.xpose.msra.mxu0 %v313
        %660 = vmatprep.subr.mxu0 %v310
        %661 = vmatpush2.xpose.msra.mxu0 %v309
        %662 = vmatprep.subr.mxu0 %v306
        %663 = vmatpush2.xpose.msra.mxu0 %v305
        %664 = vmatprep.subr.mxu0 %v302
        %665 = vmatpush2.xpose.msra.mxu0 %v301
        %666 = vmatprep.mubr.f32.mxu0 %v222
        %667 = vmatmul.mubr.f32.gmra.mxu0 %v221
        %v668 = vpop.f32.mrf.mxu0
        %v669 = vadd.f32 %v580, %v668
        %v670 = vpop.f32.mrf.mxu0
        %v671 = vadd.f32 %v582, %v670
        %672 = vmatprep.mubr.f32.mxu0 %v226
        %673 = vmatmul.mubr.f32.gmra.mxu0 %v225
        %v674 = vpop.f32.mrf.mxu0
        %v675 = vadd.f32 %v586, %v674
        %v676 = vpop.f32.mrf.mxu0
        %v677 = vadd.f32 %v588, %v676
        %678 = vmatprep.mubr.f32.mxu0 %v230
        %679 = vmatmul.mubr.f32.gmra.mxu0 %v229
        %v680 = vpop.f32.mrf.mxu0
        %v681 = vadd.f32 %v592, %v680
        %v682 = vpop.f32.mrf.mxu0
        %v683 = vadd.f32 %v594, %v682
        %684 = vmatprep.mubr.f32.mxu0 %v234
        %685 = vmatmul.mubr.f32.gmra.mxu0 %v233
        %v686 = vpop.f32.mrf.mxu0
        %v687 = vadd.f32 %v598, %v686
        %v688 = vpop.f32.mrf.mxu0
        %v689 = vadd.f32 %v600, %v688
        %690 = vdwg.mxu0
        %691 = vmatprep.subr.mxu0 %v424
        %692 = vmatpush1.xpose.msra.mxu0 %v423
        %693 = vmatprep.subr.mxu0 %v420
        %694 = vmatpush1.xpose.msra.mxu0 %v419
        %695 = vmatprep.subr.mxu0 %v416
        %696 = vmatpush1.xpose.msra.mxu0 %v415
        %697 = vmatprep.subr.mxu0 %v412
        %698 = vmatpush1.xpose.msra.mxu0 %v411
        %699 = vmatprep.subr.mxu0 %v408
        %700 = vmatpush1.xpose.msra.mxu0 %v407
        %701 = vmatprep.subr.mxu0 %v404
        %702 = vmatpush1.xpose.msra.mxu0 %v403
        %703 = vmatprep.subr.mxu0 %v400
        %704 = vmatpush1.xpose.msra.mxu0 %v399
        %705 = vmatprep.subr.mxu0 %v396
        %706 = vmatpush1.xpose.msra.mxu0 %v395
        %707 = vmatprep.subr.mxu0 %v392
        %708 = vmatpush1.xpose.msra.mxu0 %v391
        %709 = vmatprep.subr.mxu0 %v388
        %710 = vmatpush1.xpose.msra.mxu0 %v387
        %711 = vmatprep.subr.mxu0 %v384
        %712 = vmatpush1.xpose.msra.mxu0 %v383
        %713 = vmatprep.subr.mxu0 %v380
        %714 = vmatpush1.xpose.msra.mxu0 %v379
        %715 = vmatprep.subr.mxu0 %v376
        %716 = vmatpush1.xpose.msra.mxu0 %v375
        %717 = vmatprep.subr.mxu0 %v372
        %718 = vmatpush1.xpose.msra.mxu0 %v371
        %719 = vmatprep.subr.mxu0 %v368
        %720 = vmatpush1.xpose.msra.mxu0 %v367
        %721 = vmatprep.subr.mxu0 %v364
        %722 = vmatpush1.xpose.msra.mxu0 %v363
        %723 = vmatprep.subr.mxu0 %v488
        %724 = vmatpush2.xpose.msra.mxu0 %v487
        %725 = vmatprep.subr.mxu0 %v484
        %726 = vmatpush2.xpose.msra.mxu0 %v483
        %727 = vmatprep.subr.mxu0 %v480
        %728 = vmatpush2.xpose.msra.mxu0 %v479
        %729 = vmatprep.subr.mxu0 %v476
        %730 = vmatpush2.xpose.msra.mxu0 %v475
        %731 = vmatprep.subr.mxu0 %v472
        %732 = vmatpush2.xpose.msra.mxu0 %v471
        %733 = vmatprep.subr.mxu0 %v468
        %734 = vmatpush2.xpose.msra.mxu0 %v467
        %735 = vmatprep.subr.mxu0 %v464
        %736 = vmatpush2.xpose.msra.mxu0 %v463
        %737 = vmatprep.subr.mxu0 %v460
        %738 = vmatpush2.xpose.msra.mxu0 %v459
        %739 = vmatprep.subr.mxu0 %v456
        %740 = vmatpush2.xpose.msra.mxu0 %v455
        %741 = vmatprep.subr.mxu0 %v452
        %742 = vmatpush2.xpose.msra.mxu0 %v451
        %743 = vmatprep.subr.mxu0 %v448
        %744 = vmatpush2.xpose.msra.mxu0 %v447
        %745 = vmatprep.subr.mxu0 %v444
        %746 = vmatpush2.xpose.msra.mxu0 %v443
        %747 = vmatprep.subr.mxu0 %v440
        %748 = vmatpush2.xpose.msra.mxu0 %v439
        %749 = vmatprep.subr.mxu0 %v436
        %750 = vmatpush2.xpose.msra.mxu0 %v435
        %751 = vmatprep.subr.mxu0 %v432
        %752 = vmatpush2.xpose.msra.mxu0 %v431
        %753 = vmatprep.subr.mxu0 %v428
        %754 = vmatpush2.xpose.msra.mxu0 %v427
        %755 = vmatprep.mubr.f32.mxu0 %v220
        %756 = vmatmul.mubr.f32.gmra.mxu0 %v219
        %v757 = vpop.f32.mrf.mxu0
        %v758 = vadd.f32 %v504, %v757
        %v759 = vpop.f32.mrf.mxu0
        %v760 = vadd.f32 %v508, %v759
        %761 = vmatprep.mubr.f32.mxu0 %v224
        %762 = vmatmul.mubr.f32.gmra.mxu0 %v223
        %v763 = vpop.f32.mrf.mxu0
        %v764 = vadd.f32 %v504, %v763
        %v765 = vpop.f32.mrf.mxu0
        %v766 = vadd.f32 %v508, %v765
        %767 = vmatprep.mubr.f32.mxu0 %v228
        %768 = vmatmul.mubr.f32.gmra.mxu0 %v227
        %v769 = vpop.f32.mrf.mxu0
        %v770 = vadd.f32 %v504, %v769
        %v771 = vpop.f32.mrf.mxu0
        %v772 = vadd.f32 %v508, %v771
        %773 = vmatprep.mubr.f32.mxu0 %v232
        %774 = vmatmul.mubr.f32.gmra.mxu0 %v231
        %v775 = vpop.f32.mrf.mxu0
        %v776 = vadd.f32 %v504, %v775
        %v777 = vpop.f32.mrf.mxu0
        %v778 = vadd.f32 %v508, %v777
        %779 = vdwg.mxu0
        %780 = vmatprep.subr.mxu0 %v426
        %781 = vmatpush1.xpose.msra.mxu0 %v425
        %782 = vmatprep.subr.mxu0 %v422
        %783 = vmatpush1.xpose.msra.mxu0 %v421
        %784 = vmatprep.subr.mxu0 %v418
        %785 = vmatpush1.xpose.msra.mxu0 %v417
        %786 = vmatprep.subr.mxu0 %v414
        %787 = vmatpush1.xpose.msra.mxu0 %v413
        %788 = vmatprep.subr.mxu0 %v410
        %789 = vmatpush1.xpose.msra.mxu0 %v409
        %790 = vmatprep.subr.mxu0 %v406
        %791 = vmatpush1.xpose.msra.mxu0 %v405
        %792 = vmatprep.subr.mxu0 %v402
        %793 = vmatpush1.xpose.msra.mxu0 %v401
        %794 = vmatprep.subr.mxu0 %v398
        %795 = vmatpush1.xpose.msra.mxu0 %v397
        %796 = vmatprep.subr.mxu0 %v394
        %797 = vmatpush1.xpose.msra.mxu0 %v393
        %798 = vmatprep.subr.mxu0 %v390
        %799 = vmatpush1.xpose.msra.mxu0 %v389
        %800 = vmatprep.subr.mxu0 %v386
        %801 = vmatpush1.xpose.msra.mxu0 %v385
        %802 = vmatprep.subr.mxu0 %v382
        %803 = vmatpush1.xpose.msra.mxu0 %v381
        %804 = vmatprep.subr.mxu0 %v378
        %805 = vmatpush1.xpose.msra.mxu0 %v377
        %806 = vmatprep.subr.mxu0 %v374
        %807 = vmatpush1.xpose.msra.mxu0 %v373
        %808 = vmatprep.subr.mxu0 %v370
        %809 = vmatpush1.xpose.msra.mxu0 %v369
        %810 = vmatprep.subr.mxu0 %v366
        %811 = vmatpush1.xpose.msra.mxu0 %v365
        %812 = vmatprep.subr.mxu0 %v490
        %813 = vmatpush2.xpose.msra.mxu0 %v489
        %814 = vmatprep.subr.mxu0 %v486
        %815 = vmatpush2.xpose.msra.mxu0 %v485
        %816 = vmatprep.subr.mxu0 %v482
        %817 = vmatpush2.xpose.msra.mxu0 %v481
        %818 = vmatprep.subr.mxu0 %v478
        %819 = vmatpush2.xpose.msra.mxu0 %v477
        %820 = vmatprep.subr.mxu0 %v474
        %821 = vmatpush2.xpose.msra.mxu0 %v473
        %822 = vmatprep.subr.mxu0 %v470
        %823 = vmatpush2.xpose.msra.mxu0 %v469
        %824 = vmatprep.subr.mxu0 %v466
        %825 = vmatpush2.xpose.msra.mxu0 %v465
        %826 = vmatprep.subr.mxu0 %v462
        %827 = vmatpush2.xpose.msra.mxu0 %v461
        %828 = vmatprep.subr.mxu0 %v458
        %829 = vmatpush2.xpose.msra.mxu0 %v457
        %830 = vmatprep.subr.mxu0 %v454
        %831 = vmatpush2.xpose.msra.mxu0 %v453
        %832 = vmatprep.subr.mxu0 %v450
        %833 = vmatpush2.xpose.msra.mxu0 %v449
        %834 = vmatprep.subr.mxu0 %v446
        %835 = vmatpush2.xpose.msra.mxu0 %v445
        %836 = vmatprep.subr.mxu0 %v442
        %837 = vmatpush2.xpose.msra.mxu0 %v441
        %838 = vmatprep.subr.mxu0 %v438
        %839 = vmatpush2.xpose.msra.mxu0 %v437
        %840 = vmatprep.subr.mxu0 %v434
        %841 = vmatpush2.xpose.msra.mxu0 %v433
        %842 = vmatprep.subr.mxu0 %v430
        %843 = vmatpush2.xpose.msra.mxu0 %v429
        %844 = vmatprep.mubr.f32.mxu0 %v222
        %845 = vmatmul.mubr.f32.gmra.mxu0 %v221
        %v846 = vpop.f32.mrf.mxu0
        %v847 = vadd.f32 %v758, %v846
        %v848 = vpop.f32.mrf.mxu0
        %v849 = vadd.f32 %v760, %v848
        %850 = vmatprep.mubr.f32.mxu0 %v226
        %851 = vmatmul.mubr.f32.gmra.mxu0 %v225
        %v852 = vpop.f32.mrf.mxu0
        %v853 = vadd.f32 %v764, %v852
        %v854 = vpop.f32.mrf.mxu0
        %v855 = vadd.f32 %v766, %v854
        %856 = vmatprep.mubr.f32.mxu0 %v230
        %857 = vmatmul.mubr.f32.gmra.mxu0 %v229
        %v858 = vpop.f32.mrf.mxu0
        %v859 = vadd.f32 %v770, %v858
        %v860 = vpop.f32.mrf.mxu0
        %v861 = vadd.f32 %v772, %v860
        %862 = vmatprep.mubr.f32.mxu0 %v234
        %863 = vmatmul.mubr.f32.gmra.mxu0 %v233
        %v864 = vpop.f32.mrf.mxu0
        %v865 = vadd.f32 %v776, %v864
        %v866 = vpop.f32.mrf.mxu0
        %v867 = vadd.f32 %v778, %v866
        %868 = vdwg.mxu0
        %v869 = vmul.f32 %v669, 0.1
        %v870 = vmul.f32 %v671, 0.1
        %v871 = vmul.f32 %v847, 0.1
        %v872 = vmul.f32 %v849, 0.1
        %v873 = vmul.f32 %v675, 0.1
        %v874 = vmul.f32 %v677, 0.1
        %v875 = vmul.f32 %v853, 0.1
        %v876 = vmul.f32 %v855, 0.1
        %v877 = vmul.f32 %v681, 0.1
        %v878 = vmul.f32 %v683, 0.1
        %v879 = vmul.f32 %v859, 0.1
        %v880 = vmul.f32 %v861, 0.1
        %v881 = vmul.f32 %v687, 0.1
        %v882 = vmul.f32 %v689, 0.1
        %v883 = vmul.f32 %v865, 0.1
        %v884 = vmul.f32 %v867, 0.1
        %v885 = vmax.f32 %v669, %v869
        %v886 = vmax.f32 %v671, %v870
        %v887 = vmax.f32 %v847, %v871
        %v888 = vmax.f32 %v849, %v872
        %v889 = vmax.f32 %v675, %v873
        %v890 = vmax.f32 %v677, %v874
        %v891 = vmax.f32 %v853, %v875
        %v892 = vmax.f32 %v855, %v876
        %v893 = vmax.f32 %v681, %v877
        %v894 = vmax.f32 %v683, %v878
        %v895 = vmax.f32 %v859, %v879
        %v896 = vmax.f32 %v861, %v880
        %v897 = vmax.f32 %v687, %v881
        %v898 = vmax.f32 %v689, %v882
        %v899 = vmax.f32 %v865, %v883
        %v900 = vmax.f32 %v867, %v884
        %901 = vst [vmem:[%s216] sm:$0xff] %v885
        %902 = vst [vmem:[%s216 + $0x8] sm:$0xff] %v886
        %903 = vst [vmem:[%s216 + $0x10] sm:$0xff] %v887
        %904 = vst [vmem:[%s216 + $0x18] sm:$0xff] %v888
        %905 = vst [vmem:[%s216 + $0x20] sm:$0xff] %v889
        %906 = vst [vmem:[%s216 + $0x28] sm:$0xff] %v890
        %907 = vst [vmem:[%s216 + $0x30] sm:$0xff] %v891
        %908 = vst [vmem:[%s216 + $0x38] sm:$0xff] %v892
        %909 = vst [vmem:[%s216 + $0x40] sm:$0xff] %v893
        %910 = vst [vmem:[%s216 + $0x48] sm:$0xff] %v894
        %911 = vst [vmem:[%s216 + $0x50] sm:$0xff] %v895
        %912 = vst [vmem:[%s216 + $0x58] sm:$0xff] %v896
        %913 = vst [vmem:[%s216 + $0x60] sm:$0xff] %v897
        %914 = vst [vmem:[%s216 + $0x68] sm:$0xff] %v898
        %915 = vst [vmem:[%s216 + $0x70] sm:$0xff] %v899
        %916 = vst [vmem:[%s216 + $0x78] sm:$0xff] %v900
        %s917 = sand.u32 %s97, 1
        %s918 = scalar_lea.sflag [#allocation4], %s917
        %s919 = sand.u32 %s97, 1
        %s920 = smul.addr %s919, 128
        %s921 = scalar_lea.vmem [#allocation8], %s920
        // Predicated region
        $region45: #{tpu_custom_call.1} parent=31 // pred_check
          %p922 = pneg %p107
        $region46: #{tpu_custom_call.1} parent=31 // pred_check_branch
          %924 = sbr.rel (%p922) target = $region48
        $region47: #{tpu_custom_call.1} parent=31 // pred_region
          %s925 = smul.u32 4, %s21
          %s927 = ssub.s32 2048, 2048
          %928 = vsyncadd %s918, %s927
          %s929 = smul.addr %s925, 4
          %s930 = smul.addr %s929, 128
          %s931 = scalar_lea.hbm %s3, %s930
          %s932 = sshll.u32 %s921, 4
          %s933 = int_to_ptr.vmem [resolvable:$true] %s932
          %938 = dma.vmem_to_hbm [thread:$0]  %s933, 2048, %s931, %s918, 512, 512, 32
        $region48: #{tpu_custom_call.1} parent=31 // pred_fallthru
          _
      $region32: #{tpu_custom_call.1} parent=5 // pred_fallthru
        _
      %p939 = scmp.le.s32.totalorder 2, %s16
      // Predicated region
      $region49: #{tpu_custom_call.1} parent=5 // pred_check
        %p940 = pneg %p939
      $region50: #{tpu_custom_call.1} parent=5 // pred_check_branch
        %942 = sbr.rel (%p940) target = $region52
      $region51: #{tpu_custom_call.1} parent=5 // pred_region
        %s943 = ssub.s32 %s16, 2
        // Predicated region
        $region53: #{tpu_custom_call.1} parent=51 // pred_check
          %p944 = pneg %p113
        $region54: #{tpu_custom_call.1} parent=51 // pred_check_branch
          %946 = sbr.rel (%p944) target = $region56
        $region55: #{tpu_custom_call.1} parent=51 // pred_region
          %s947 = sand.u32 %s98, 1
          %s948 = scalar_lea.sflag [#allocation4], %s947
          %s949 = sand.u32 %s98, 1
          %s950 = smul.addr %s949, 128
          %s951 = scalar_lea.vmem [#allocation8], %s950
          %952 = dma.done %s948, 2048
        $region56: #{tpu_custom_call.1} parent=51 // pred_fallthru
          _
      $region52: #{tpu_custom_call.1} parent=5 // pred_fallthru
        _
    $region6: #{tpu_custom_call.1} parent=1 // loop_footer
      %s20 = sadd.s32 1, %s16
    $region7: #{tpu_custom_call.1} parent=1 // loop_footer_branch
      %15 = sbr.rel target = $region3
    $region8: #{tpu_custom_call.1} parent=1 // loop_exit
      _
    %953 = vsyncpa [#allocation3], 1
    %s954 = scalar_lea.sflag [#allocation3], 1
    %955 = vsyncpa %s954, 1
    %956 = vsyncpa [#allocation6], 1
    %957 = vsyncpa [#allocation4], 1
    %s958 = scalar_lea.sflag [#allocation4], 1
    %959 = vsyncpa %s958, 1

// kernel: tpu_custom_call.1
$region0: #{tpu_custom_call.1}
  #allocation0 [shape = 'u32[]', space=smem, size = 0x4, offset = 0x4, fixed_abs, tag = 'smem constant byte address 0x4 - core index']
  #allocation1 [shape = 'u32[144,128]{1,0:T(1,128)}', space=vmem, size = 0x12000, scoped, tag = 'internal scratch']
  #allocation2 [shape = 'f32[64,512]{1,0:T(8,128)}', space=vmem, size = 0x20000, scoped, tag = 'scratch operand']
  %s0 = inlined_call_operand.hbm [shape: f32[64,512], index: 0, kind: input, shape index: {}]
  %s1 = inlined_call_operand.hbm [shape: f32[512,512], index: 1, kind: input, shape index: {}]
  %s2 = inlined_call_operand.hbm [shape: f32[1,512], index: 2, kind: input, shape index: {}]
  %s3 = inlined_call_operand.hbm [shape: f32[64,512], index: 3, kind: output, shape index: {}]
  %s4 = sld [smem:[#allocation0]]
  $region46: #{tpu_custom_call.1} parent=0
    _
  %s6 = ssub.s32 1, %s4
  %s7 = scalar_select 0, %s6, %s4
  $region1: #{tpu_custom_call.1} parent=0
    #allocation3 [shape = 'u8[131072]{0}', space=vmem, size = 0x20000, scoped, tag = 'input window, operand 0, single buffered']
    #allocation4 [shape = 's32[1]{0}', space=sflag, size = 0x4, scoped, tag = 'scoped memory for tpu_custom_call.1']
    #allocation5 [shape = 's32[1]{0}', space=sflag, size = 0x4, scoped, tag = 'scoped memory for tpu_custom_call.1']
    #allocation6 [shape = 'u8[1048576]{0}', space=vmem, size = 0x100000, scoped, tag = 'input window, operand 1, single buffered']
    #allocation7 [shape = 's32[1]{0}', space=sflag, size = 0x4, scoped, tag = 'scoped memory for tpu_custom_call.1']
    #allocation8 [shape = 'u8[2048]{0}', space=vmem, size = 0x800, scoped, tag = 'input window, operand 2, single buffered']
    #allocation9 [shape = 'u8[131072]{0}', space=vmem, size = 0x20000, scoped, tag = 'output window, operand 0, single buffered']
    %8 = vsyncpa [#allocation4], 0
    %9 = vsyncpa [#allocation7], 0
    %10 = vsyncpa [#allocation5], 0
    // Predicated region
    $region2: #{tpu_custom_call.1} parent=1 // pred_check
      _
    $region3: #{tpu_custom_call.1} parent=1 // pred_check_branch
      %12 = sbr.rel (0) target = $region5
    $region4: #{tpu_custom_call.1} parent=1 // pred_region
      %s14 = ssub.s32 4096, 4096
      %15 = vsyncadd [#allocation4], %s14
      %s16 = sshll.u32 [#allocation3], 4
      %s17 = int_to_ptr.vmem [resolvable:$true] %s16
      %22 = dma.hbm_to_vmem [thread:$0]  %s0, 4096, %s17, [#allocation4], 512, 512, 32
    $region5: #{tpu_custom_call.1} parent=1 // pred_fallthru
      _
    // Predicated region
    $region6: #{tpu_custom_call.1} parent=1 // pred_check
      _
    $region7: #{tpu_custom_call.1} parent=1 // pred_check_branch
      %24 = sbr.rel (0) target = $region9
    $region8: #{tpu_custom_call.1} parent=1 // pred_region
      %s26 = ssub.s32 32768, 32768
      %27 = vsyncadd [#allocation7], %s26
      %s28 = sshll.u32 [#allocation6], 4
      %s29 = int_to_ptr.vmem [resolvable:$true] %s28
      %34 = dma.hbm_to_vmem [thread:$0]  %s1, 32768, %s29, [#allocation7], 512, 512, 32
    $region9: #{tpu_custom_call.1} parent=1 // pred_fallthru
      _
    // Predicated region
    $region10: #{tpu_custom_call.1} parent=1 // pred_check
      _
    $region11: #{tpu_custom_call.1} parent=1 // pred_check_branch
      %36 = sbr.rel (0) target = $region13
    $region12: #{tpu_custom_call.1} parent=1 // pred_region
      %s38 = ssub.s32 64, 64
      %39 = vsyncadd [#allocation7], %s38
      %s41 = sshll.u32 [#allocation8], 4
      %s42 = int_to_ptr.vmem [resolvable:$true] %s41
      %44 = dma.hbm_to_vmem [thread:$0]  %s2, 64, %s42, [#allocation7]
    $region13: #{tpu_custom_call.1} parent=1 // pred_fallthru
      _
    // Predicated region
    $region14: #{tpu_custom_call.1} parent=1 // pred_check
      _
    $region15: #{tpu_custom_call.1} parent=1 // pred_check_branch
      %46 = sbr.rel (0) target = $region17
    $region16: #{tpu_custom_call.1} parent=1 // pred_region
      %47 = dma.done [#allocation4], 4096
    $region17: #{tpu_custom_call.1} parent=1 // pred_fallthru
      _
    // Predicated region
    $region18: #{tpu_custom_call.1} parent=1 // pred_check
      _
    $region19: #{tpu_custom_call.1} parent=1 // pred_check_branch
      %49 = sbr.rel (0) target = $region21
    $region20: #{tpu_custom_call.1} parent=1 // pred_region
      %50 = dma.done [#allocation7], 32768
    $region21: #{tpu_custom_call.1} parent=1 // pred_fallthru
      _
    // Predicated region
    $region22: #{tpu_custom_call.1} parent=1 // pred_check
      _
    $region23: #{tpu_custom_call.1} parent=1 // pred_check_branch
      %52 = sbr.rel (0) target = $region25
    $region24: #{tpu_custom_call.1} parent=1 // pred_region
      %53 = dma.done [#allocation7], 64
    $region25: #{tpu_custom_call.1} parent=1 // pred_fallthru
      _
    %v54 = vld [vmem:[#allocation3] sm:$0xff]
    %v55 = vld [vmem:[#allocation3 + $0x8] sm:$0xff]
    %v56 = vld [vmem:[#allocation3 + $0x10] sm:$0xff]
    %v57 = vld [vmem:[#allocation3 + $0x18] sm:$0xff]
    %v58 = vld [vmem:[#allocation3 + $0x20] sm:$0xff]
    %v59 = vld [vmem:[#allocation3 + $0x28] sm:$0xff]
    %v60 = vld [vmem:[#allocation3 + $0x30] sm:$0xff]
    %v61 = vld [vmem:[#allocation3 + $0x38] sm:$0xff]
    %v62 = vld [vmem:[#allocation3 + $0x40] sm:$0xff]
    %v63 = vld [vmem:[#allocation3 + $0x48] sm:$0xff]
    %v64 = vld [vmem:[#allocation3 + $0x50] sm:$0xff]
    %v65 = vld [vmem:[#allocation3 + $0x58] sm:$0xff]
    %v66 = vld [vmem:[#allocation3 + $0x60] sm:$0xff]
    %v67 = vld [vmem:[#allocation3 + $0x68] sm:$0xff]
    %v68 = vld [vmem:[#allocation3 + $0x70] sm:$0xff]
    %v69 = vld [vmem:[#allocation3 + $0x78] sm:$0xff]
    %v70 = vld [vmem:[#allocation3 + $0x80] sm:$0xff]
    %v71 = vld [vmem:[#allocation3 + $0x88] sm:$0xff]
    %v72 = vld [vmem:[#allocation3 + $0x90] sm:$0xff]
    %v73 = vld [vmem:[#allocation3 + $0x98] sm:$0xff]
    %v74 = vld [vmem:[#allocation3 + $0xa0] sm:$0xff]
    %v75 = vld [vmem:[#allocation3 + $0xa8] sm:$0xff]
    %v76 = vld [vmem:[#allocation3 + $0xb0] sm:$0xff]
    %v77 = vld [vmem:[#allocation3 + $0xb8] sm:$0xff]
    %v78 = vld [vmem:[#allocation3 + $0xc0] sm:$0xff]
    %v79 = vld [vmem:[#allocation3 + $0xc8] sm:$0xff]
    %v80 = vld [vmem:[#allocation3 + $0xd0] sm:$0xff]
    %v81 = vld [vmem:[#allocation3 + $0xd8] sm:$0xff]
    %v82 = vld [vmem:[#allocation3 + $0xe0] sm:$0xff]
    %v83 = vld [vmem:[#allocation3 + $0xe8] sm:$0xff]
    %v84 = vld [vmem:[#allocation3 + $0xf0] sm:$0xff]
    %v85 = vld [vmem:[#allocation3 + $0xf8] sm:$0xff]
    %v86 = vld [vmem:[#allocation6] sm:$0xff]
    %v87 = vld [vmem:[#allocation6 + $0x8] sm:$0xff]
    %v88 = vld [vmem:[#allocation6 + $0x10] sm:$0xff]
    %v89 = vld [vmem:[#allocation6 + $0x18] sm:$0xff]
    %v90 = vld [vmem:[#allocation6 + $0x20] sm:$0xff]
    %v91 = vld [vmem:[#allocation6 + $0x28] sm:$0xff]
    %v92 = vld [vmem:[#allocation6 + $0x30] sm:$0xff]
    %v93 = vld [vmem:[#allocation6 + $0x38] sm:$0xff]
    %v94 = vld [vmem:[#allocation6 + $0x40] sm:$0xff]
    %v95 = vld [vmem:[#allocation6 + $0x48] sm:$0xff]
    %v96 = vld [vmem:[#allocation6 + $0x50] sm:$0xff]
    %v97 = vld [vmem:[#allocation6 + $0x58] sm:$0xff]
    %v98 = vld [vmem:[#allocation6 + $0x60] sm:$0xff]
    %v99 = vld [vmem:[#allocation6 + $0x68] sm:$0xff]
    %v100 = vld [vmem:[#allocation6 + $0x70] sm:$0xff]
    %v101 = vld [vmem:[#allocation6 + $0x78] sm:$0xff]
    %v102 = vld [vmem:[#allocation6 + $0x80] sm:$0xff]
    %v103 = vld [vmem:[#allocation6 + $0x88] sm:$0xff]
    %v104 = vld [vmem:[#allocation6 + $0x90] sm:$0xff]
    %v105 = vld [vmem:[#allocation6 + $0x98] sm:$0xff]
    %v106 = vld [vmem:[#allocation6 + $0xa0] sm:$0xff]
    %v107 = vld [vmem:[#allocation6 + $0xa8] sm:$0xff]
    %v108 = vld [vmem:[#allocation6 + $0xb0] sm:$0xff]
    %v109 = vld [vmem:[#allocation6 + $0xb8] sm:$0xff]
    %v110 = vld [vmem:[#allocation6 + $0xc0] sm:$0xff]
    %v111 = vld [vmem:[#allocation6 + $0xc8] sm:$0xff]
    %v112 = vld [vmem:[#allocation6 + $0xd0] sm:$0xff]
    %v113 = vld [vmem:[#allocation6 + $0xd8] sm:$0xff]
    %v114 = vld [vmem:[#allocation6 + $0xe0] sm:$0xff]
    %v115 = vld [vmem:[#allocation6 + $0xe8] sm:$0xff]
    %v116 = vld [vmem:[#allocation6 + $0xf0] sm:$0xff]
    %v117 = vld [vmem:[#allocation6 + $0xf8] sm:$0xff]
    %v118 = vld [vmem:[#allocation6 + $0x100] sm:$0xff]
    %v119 = vld [vmem:[#allocation6 + $0x108] sm:$0xff]
    %v120 = vld [vmem:[#allocation6 + $0x110] sm:$0xff]
    %v121 = vld [vmem:[#allocation6 + $0x118] sm:$0xff]
    %v122 = vld [vmem:[#allocation6 + $0x120] sm:$0xff]
    %v123 = vld [vmem:[#allocation6 + $0x128] sm:$0xff]
    %v124 = vld [vmem:[#allocation6 + $0x130] sm:$0xff]
    %v125 = vld [vmem:[#allocation6 + $0x138] sm:$0xff]
    %v126 = vld [vmem:[#allocation6 + $0x140] sm:$0xff]
    %v127 = vld [vmem:[#allocation6 + $0x148] sm:$0xff]
    %v128 = vld [vmem:[#allocation6 + $0x150] sm:$0xff]
    %v129 = vld [vmem:[#allocation6 + $0x158] sm:$0xff]
    %v130 = vld [vmem:[#allocation6 + $0x160] sm:$0xff]
    %v131 = vld [vmem:[#allocation6 + $0x168] sm:$0xff]
    %v132 = vld [vmem:[#allocation6 + $0x170] sm:$0xff]
    %v133 = vld [vmem:[#allocation6 + $0x178] sm:$0xff]
    %v134 = vld [vmem:[#allocation6 + $0x180] sm:$0xff]
    %v135 = vld [vmem:[#allocation6 + $0x188] sm:$0xff]
    %v136 = vld [vmem:[#allocation6 + $0x190] sm:$0xff]
    %v137 = vld [vmem:[#allocation6 + $0x198] sm:$0xff]
    %v138 = vld [vmem:[#allocation6 + $0x1a0] sm:$0xff]
    %v139 = vld [vmem:[#allocation6 + $0x1a8] sm:$0xff]
    %v140 = vld [vmem:[#allocation6 + $0x1b0] sm:$0xff]
    %v141 = vld [vmem:[#allocation6 + $0x1b8] sm:$0xff]
    %v142 = vld [vmem:[#allocation6 + $0x1c0] sm:$0xff]
    %v143 = vld [vmem:[#allocation6 + $0x1c8] sm:$0xff]
    %v144 = vld [vmem:[#allocation6 + $0x1d0] sm:$0xff]
    %v145 = vld [vmem:[#allocation6 + $0x1d8] sm:$0xff]
    %v146 = vld [vmem:[#allocation6 + $0x1e0] sm:$0xff]
    %v147 = vld [vmem:[#allocation6 + $0x1e8] sm:$0xff]
    %v148 = vld [vmem:[#allocation6 + $0x1f0] sm:$0xff]
    %v149 = vld [vmem:[#allocation6 + $0x1f8] sm:$0xff]
    %v150 = vld [vmem:[#allocation6 + $0x200] sm:$0xff]
    %v151 = vld [vmem:[#allocation6 + $0x208] sm:$0xff]
    %v152 = vld [vmem:[#allocation6 + $0x210] sm:$0xff]
    %v153 = vld [vmem:[#allocation6 + $0x218] sm:$0xff]
    %v154 = vld [vmem:[#allocation6 + $0x220] sm:$0xff]
    %v155 = vld [vmem:[#allocation6 + $0x228] sm:$0xff]
    %v156 = vld [vmem:[#allocation6 + $0x230] sm:$0xff]
    %v157 = vld [vmem:[#allocation6 + $0x238] sm:$0xff]
    %v158 = vld [vmem:[#allocation6 + $0x240] sm:$0xff]
    %v159 = vld [vmem:[#allocation6 + $0x248] sm:$0xff]
    %v160 = vld [vmem:[#allocation6 + $0x250] sm:$0xff]
    %v161 = vld [vmem:[#allocation6 + $0x258] sm:$0xff]
    %v162 = vld [vmem:[#allocation6 + $0x260] sm:$0xff]
    %v163 = vld [vmem:[#allocation6 + $0x268] sm:$0xff]
    %v164 = vld [vmem:[#allocation6 + $0x270] sm:$0xff]
    %v165 = vld [vmem:[#allocation6 + $0x278] sm:$0xff]
    %v166 = vld [vmem:[#allocation6 + $0x280] sm:$0xff]
    %v167 = vld [vmem:[#allocation6 + $0x288] sm:$0xff]
    %v168 = vld [vmem:[#allocation6 + $0x290] sm:$0xff]
    %v169 = vld [vmem:[#allocation6 + $0x298] sm:$0xff]
    %v170 = vld [vmem:[#allocation6 + $0x2a0] sm:$0xff]
    %v171 = vld [vmem:[#allocation6 + $0x2a8] sm:$0xff]
    %v172 = vld [vmem:[#allocation6 + $0x2b0] sm:$0xff]
    %v173 = vld [vmem:[#allocation6 + $0x2b8] sm:$0xff]
    %v174 = vld [vmem:[#allocation6 + $0x2c0] sm:$0xff]
    %v175 = vld [vmem:[#allocation6 + $0x2c8] sm:$0xff]
    %v176 = vld [vmem:[#allocation6 + $0x2d0] sm:$0xff]
    %v177 = vld [vmem:[#allocation6 + $0x2d8] sm:$0xff]
    %v178 = vld [vmem:[#allocation6 + $0x2e0] sm:$0xff]
    %v179 = vld [vmem:[#allocation6 + $0x2e8] sm:$0xff]
    %v180 = vld [vmem:[#allocation6 + $0x2f0] sm:$0xff]
    %v181 = vld [vmem:[#allocation6 + $0x2f8] sm:$0xff]
    %v182 = vld [vmem:[#allocation6 + $0x300] sm:$0xff]
    %v183 = vld [vmem:[#allocation6 + $0x308] sm:$0xff]
    %v184 = vld [vmem:[#allocation6 + $0x310] sm:$0xff]
    %v185 = vld [vmem:[#allocation6 + $0x318] sm:$0xff]
    %v186 = vld [vmem:[#allocation6 + $0x320] sm:$0xff]
    %v187 = vld [vmem:[#allocation6 + $0x328] sm:$0xff]
    %v188 = vld [vmem:[#allocation6 + $0x330] sm:$0xff]
    %v189 = vld [vmem:[#allocation6 + $0x338] sm:$0xff]
    %v190 = vld [vmem:[#allocation6 + $0x340] sm:$0xff]
    %v191 = vld [vmem:[#allocation6 + $0x348] sm:$0xff]
    %v192 = vld [vmem:[#allocation6 + $0x350] sm:$0xff]
    %v193 = vld [vmem:[#allocation6 + $0x358] sm:$0xff]
    %v194 = vld [vmem:[#allocation6 + $0x360] sm:$0xff]
    %v195 = vld [vmem:[#allocation6 + $0x368] sm:$0xff]
    %v196 = vld [vmem:[#allocation6 + $0x370] sm:$0xff]
    %v197 = vld [vmem:[#allocation6 + $0x378] sm:$0xff]
    %v198 = vld [vmem:[#allocation6 + $0x380] sm:$0xff]
    %v199 = vld [vmem:[#allocation6 + $0x388] sm:$0xff]
    %v200 = vld [vmem:[#allocation6 + $0x390] sm:$0xff]
    %v201 = vld [vmem:[#allocation6 + $0x398] sm:$0xff]
    %v202 = vld [vmem:[#allocation6 + $0x3a0] sm:$0xff]
    %v203 = vld [vmem:[#allocation6 + $0x3a8] sm:$0xff]
    %v204 = vld [vmem:[#allocation6 + $0x3b0] sm:$0xff]
    %v205 = vld [vmem:[#allocation6 + $0x3b8] sm:$0xff]
    %v206 = vld [vmem:[#allocation6 + $0x3c0] sm:$0xff]
    %v207 = vld [vmem:[#allocation6 + $0x3c8] sm:$0xff]
    %v208 = vld [vmem:[#allocation6 + $0x3d0] sm:$0xff]
    %v209 = vld [vmem:[#allocation6 + $0x3d8] sm:$0xff]
    %v210 = vld [vmem:[#allocation6 + $0x3e0] sm:$0xff]
    %v211 = vld [vmem:[#allocation6 + $0x3e8] sm:$0xff]
    %v212 = vld [vmem:[#allocation6 + $0x3f0] sm:$0xff]
    %v213 = vld [vmem:[#allocation6 + $0x3f8] sm:$0xff]
    %v214 = vld [vmem:[#allocation6 + $0x400] sm:$0xff]
    %v215 = vld [vmem:[#allocation6 + $0x408] sm:$0xff]
    %v216 = vld [vmem:[#allocation6 + $0x410] sm:$0xff]
    %v217 = vld [vmem:[#allocation6 + $0x418] sm:$0xff]
    %v218 = vld [vmem:[#allocation6 + $0x420] sm:$0xff]
    %v219 = vld [vmem:[#allocation6 + $0x428] sm:$0xff]
    %v220 = vld [vmem:[#allocation6 + $0x430] sm:$0xff]
    %v221 = vld [vmem:[#allocation6 + $0x438] sm:$0xff]
    %v222 = vld [vmem:[#allocation6 + $0x440] sm:$0xff]
    %v223 = vld [vmem:[#allocation6 + $0x448] sm:$0xff]
    %v224 = vld [vmem:[#allocation6 + $0x450] sm:$0xff]
    %v225 = vld [vmem:[#allocation6 + $0x458] sm:$0xff]
    %v226 = vld [vmem:[#allocation6 + $0x460] sm:$0xff]
    %v227 = vld [vmem:[#allocation6 + $0x468] sm:$0xff]
    %v228 = vld [vmem:[#allocation6 + $0x470] sm:$0xff]
    %v229 = vld [vmem:[#allocation6 + $0x478] sm:$0xff]
    %v230 = vld [vmem:[#allocation6 + $0x480] sm:$0xff]
    %v231 = vld [vmem:[#allocation6 + $0x488] sm:$0xff]
    %v232 = vld [vmem:[#allocation6 + $0x490] sm:$0xff]
    %v233 = vld [vmem:[#allocation6 + $0x498] sm:$0xff]
    %v234 = vld [vmem:[#allocation6 + $0x4a0] sm:$0xff]
    %v235 = vld [vmem:[#allocation6 + $0x4a8] sm:$0xff]
    %v236 = vld [vmem:[#allocation6 + $0x4b0] sm:$0xff]
    %v237 = vld [vmem:[#allocation6 + $0x4b8] sm:$0xff]
    %v238 = vld [vmem:[#allocation6 + $0x4c0] sm:$0xff]
    %v239 = vld [vmem:[#allocation6 + $0x4c8] sm:$0xff]
    %v240 = vld [vmem:[#allocation6 + $0x4d0] sm:$0xff]
    %v241 = vld [vmem:[#allocation6 + $0x4d8] sm:$0xff]
    %v242 = vld [vmem:[#allocation6 + $0x4e0] sm:$0xff]
    %v243 = vld [vmem:[#allocation6 + $0x4e8] sm:$0xff]
    %v244 = vld [vmem:[#allocation6 + $0x4f0] sm:$0xff]
    %v245 = vld [vmem:[#allocation6 + $0x4f8] sm:$0xff]
    %v246 = vld [vmem:[#allocation6 + $0x500] sm:$0xff]
    %v247 = vld [vmem:[#allocation6 + $0x508] sm:$0xff]
    %v248 = vld [vmem:[#allocation6 + $0x510] sm:$0xff]
    %v249 = vld [vmem:[#allocation6 + $0x518] sm:$0xff]
    %v250 = vld [vmem:[#allocation6 + $0x520] sm:$0xff]
    %v251 = vld [vmem:[#allocation6 + $0x528] sm:$0xff]
    %v252 = vld [vmem:[#allocation6 + $0x530] sm:$0xff]
    %v253 = vld [vmem:[#allocation6 + $0x538] sm:$0xff]
    %v254 = vld [vmem:[#allocation6 + $0x540] sm:$0xff]
    %v255 = vld [vmem:[#allocation6 + $0x548] sm:$0xff]
    %v256 = vld [vmem:[#allocation6 + $0x550] sm:$0xff]
    %v257 = vld [vmem:[#allocation6 + $0x558] sm:$0xff]
    %v258 = vld [vmem:[#allocation6 + $0x560] sm:$0xff]
    %v259 = vld [vmem:[#allocation6 + $0x568] sm:$0xff]
    %v260 = vld [vmem:[#allocation6 + $0x570] sm:$0xff]
    %v261 = vld [vmem:[#allocation6 + $0x578] sm:$0xff]
    %v262 = vld [vmem:[#allocation6 + $0x580] sm:$0xff]
    %v263 = vld [vmem:[#allocation6 + $0x588] sm:$0xff]
    %v264 = vld [vmem:[#allocation6 + $0x590] sm:$0xff]
    %v265 = vld [vmem:[#allocation6 + $0x598] sm:$0xff]
    %v266 = vld [vmem:[#allocation6 + $0x5a0] sm:$0xff]
    %v267 = vld [vmem:[#allocation6 + $0x5a8] sm:$0xff]
    %v268 = vld [vmem:[#allocation6 + $0x5b0] sm:$0xff]
    %v269 = vld [vmem:[#allocation6 + $0x5b8] sm:$0xff]
    %v270 = vld [vmem:[#allocation6 + $0x5c0] sm:$0xff]
    %v271 = vld [vmem:[#allocation6 + $0x5c8] sm:$0xff]
    %v272 = vld [vmem:[#allocation6 + $0x5d0] sm:$0xff]
    %v273 = vld [vmem:[#allocation6 + $0x5d8] sm:$0xff]
    %v274 = vld [vmem:[#allocation6 + $0x5e0] sm:$0xff]
    %v275 = vld [vmem:[#allocation6 + $0x5e8] sm:$0xff]
    %v276 = vld [vmem:[#allocation6 + $0x5f0] sm:$0xff]
    %v277 = vld [vmem:[#allocation6 + $0x5f8] sm:$0xff]
    %v278 = vld [vmem:[#allocation6 + $0x600] sm:$0xff]
    %v279 = vld [vmem:[#allocation6 + $0x608] sm:$0xff]
    %v280 = vld [vmem:[#allocation6 + $0x610] sm:$0xff]
    %v281 = vld [vmem:[#allocation6 + $0x618] sm:$0xff]
    %v282 = vld [vmem:[#allocation6 + $0x620] sm:$0xff]
    %v283 = vld [vmem:[#allocation6 + $0x628] sm:$0xff]
    %v284 = vld [vmem:[#allocation6 + $0x630] sm:$0xff]
    %v285 = vld [vmem:[#allocation6 + $0x638] sm:$0xff]
    %v286 = vld [vmem:[#allocation6 + $0x640] sm:$0xff]
    %v287 = vld [vmem:[#allocation6 + $0x648] sm:$0xff]
    %v288 = vld [vmem:[#allocation6 + $0x650] sm:$0xff]
    %v289 = vld [vmem:[#allocation6 + $0x658] sm:$0xff]
    %v290 = vld [vmem:[#allocation6 + $0x660] sm:$0xff]
    %v291 = vld [vmem:[#allocation6 + $0x668] sm:$0xff]
    %v292 = vld [vmem:[#allocation6 + $0x670] sm:$0xff]
    %v293 = vld [vmem:[#allocation6 + $0x678] sm:$0xff]
    %v294 = vld [vmem:[#allocation6 + $0x680] sm:$0xff]
    %v295 = vld [vmem:[#allocation6 + $0x688] sm:$0xff]
    %v296 = vld [vmem:[#allocation6 + $0x690] sm:$0xff]
    %v297 = vld [vmem:[#allocation6 + $0x698] sm:$0xff]
    %v298 = vld [vmem:[#allocation6 + $0x6a0] sm:$0xff]
    %v299 = vld [vmem:[#allocation6 + $0x6a8] sm:$0xff]
    %v300 = vld [vmem:[#allocation6 + $0x6b0] sm:$0xff]
    %v301 = vld [vmem:[#allocation6 + $0x6b8] sm:$0xff]
    %v302 = vld [vmem:[#allocation6 + $0x6c0] sm:$0xff]
    %v303 = vld [vmem:[#allocation6 + $0x6c8] sm:$0xff]
    %v304 = vld [vmem:[#allocation6 + $0x6d0] sm:$0xff]
    %v305 = vld [vmem:[#allocation6 + $0x6d8] sm:$0xff]
    %v306 = vld [vmem:[#allocation6 + $0x6e0] sm:$0xff]
    %v307 = vld [vmem:[#allocation6 + $0x6e8] sm:$0xff]
    %v308 = vld [vmem:[#allocation6 + $0x6f0] sm:$0xff]
    %v309 = vld [vmem:[#allocation6 + $0x6f8] sm:$0xff]
    %v310 = vld [vmem:[#allocation6 + $0x700] sm:$0xff]
    %v311 = vld [vmem:[#allocation6 + $0x708] sm:$0xff]
    %v312 = vld [vmem:[#allocation6 + $0x710] sm:$0xff]
    %v313 = vld [vmem:[#allocation6 + $0x718] sm:$0xff]
    %v314 = vld [vmem:[#allocation6 + $0x720] sm:$0xff]
    %v315 = vld [vmem:[#allocation6 + $0x728] sm:$0xff]
    %v316 = vld [vmem:[#allocation6 + $0x730] sm:$0xff]
    %v317 = vld [vmem:[#allocation6 + $0x738] sm:$0xff]
    %v318 = vld [vmem:[#allocation6 + $0x740] sm:$0xff]
    %v319 = vld [vmem:[#allocation6 + $0x748] sm:$0xff]
    %v320 = vld [vmem:[#allocation6 + $0x750] sm:$0xff]
    %v321 = vld [vmem:[#allocation6 + $0x758] sm:$0xff]
    %v322 = vld [vmem:[#allocation6 + $0x760] sm:$0xff]
    %v323 = vld [vmem:[#allocation6 + $0x768] sm:$0xff]
    %v324 = vld [vmem:[#allocation6 + $0x770] sm:$0xff]
    %v325 = vld [vmem:[#allocation6 + $0x778] sm:$0xff]
    %v326 = vld [vmem:[#allocation6 + $0x780] sm:$0xff]
    %v327 = vld [vmem:[#allocation6 + $0x788] sm:$0xff]
    %v328 = vld [vmem:[#allocation6 + $0x790] sm:$0xff]
    %v329 = vld [vmem:[#allocation6 + $0x798] sm:$0xff]
    %v330 = vld [vmem:[#allocation6 + $0x7a0] sm:$0xff]
    %v331 = vld [vmem:[#allocation6 + $0x7a8] sm:$0xff]
    %v332 = vld [vmem:[#allocation6 + $0x7b0] sm:$0xff]
    %v333 = vld [vmem:[#allocation6 + $0x7b8] sm:$0xff]
    %v334 = vld [vmem:[#allocation6 + $0x7c0] sm:$0xff]
    %v335 = vld [vmem:[#allocation6 + $0x7c8] sm:$0xff]
    %v336 = vld [vmem:[#allocation6 + $0x7d0] sm:$0xff]
    %v337 = vld [vmem:[#allocation6 + $0x7d8] sm:$0xff]
    %v338 = vld [vmem:[#allocation6 + $0x7e0] sm:$0xff]
    %v339 = vld [vmem:[#allocation6 + $0x7e8] sm:$0xff]
    %v340 = vld [vmem:[#allocation6 + $0x7f0] sm:$0xff]
    %v341 = vld [vmem:[#allocation6 + $0x7f8] sm:$0xff]
    %342 = vmatprep.subr.mxu0 %v147
    %343 = vmatpush1.xpose.msra.mxu0 %v146
    %344 = vmatprep.subr.mxu0 %v143
    %345 = vmatpush1.xpose.msra.mxu0 %v142
    %346 = vmatprep.subr.mxu0 %v139
    %347 = vmatpush1.xpose.msra.mxu0 %v138
    %348 = vmatprep.subr.mxu0 %v135
    %349 = vmatpush1.xpose.msra.mxu0 %v134
    %350 = vmatprep.subr.mxu0 %v131
    %351 = vmatpush1.xpose.msra.mxu0 %v130
    %352 = vmatprep.subr.mxu0 %v127
    %353 = vmatpush1.xpose.msra.mxu0 %v126
    %354 = vmatprep.subr.mxu0 %v123
    %355 = vmatpush1.xpose.msra.mxu0 %v122
    %356 = vmatprep.subr.mxu0 %v119
    %357 = vmatpush1.xpose.msra.mxu0 %v118
    %358 = vmatprep.subr.mxu0 %v115
    %359 = vmatpush1.xpose.msra.mxu0 %v114
    %360 = vmatprep.subr.mxu0 %v111
    %361 = vmatpush1.xpose.msra.mxu0 %v110
    %362 = vmatprep.subr.mxu0 %v107
    %363 = vmatpush1.xpose.msra.mxu0 %v106
    %364 = vmatprep.subr.mxu0 %v103
    %365 = vmatpush1.xpose.msra.mxu0 %v102
    %366 = vmatprep.subr.mxu0 %v99
    %367 = vmatpush1.xpose.msra.mxu0 %v98
    %368 = vmatprep.subr.mxu0 %v95
    %369 = vmatpush1.xpose.msra.mxu0 %v94
    %370 = vmatprep.subr.mxu0 %v91
    %371 = vmatpush1.xpose.msra.mxu0 %v90
    %372 = vmatprep.subr.mxu0 %v87
    %373 = vmatpush1.xpose.msra.mxu0 %v86
    %374 = vmatprep.subr.mxu0 %v211
    %375 = vmatpush2.xpose.msra.mxu0 %v210
    %376 = vmatprep.subr.mxu0 %v207
    %377 = vmatpush2.xpose.msra.mxu0 %v206
    %378 = vmatprep.subr.mxu0 %v203
    %379 = vmatpush2.xpose.msra.mxu0 %v202
    %380 = vmatprep.subr.mxu0 %v199
    %381 = vmatpush2.xpose.msra.mxu0 %v198
    %382 = vmatprep.subr.mxu0 %v195
    %383 = vmatpush2.xpose.msra.mxu0 %v194
    %384 = vmatprep.subr.mxu0 %v191
    %385 = vmatpush2.xpose.msra.mxu0 %v190
    %386 = vmatprep.subr.mxu0 %v187
    %387 = vmatpush2.xpose.msra.mxu0 %v186
    %388 = vmatprep.subr.mxu0 %v183
    %389 = vmatpush2.xpose.msra.mxu0 %v182
    %390 = vmatprep.subr.mxu0 %v179
    %391 = vmatpush2.xpose.msra.mxu0 %v178
    %392 = vmatprep.subr.mxu0 %v175
    %393 = vmatpush2.xpose.msra.mxu0 %v174
    %394 = vmatprep.subr.mxu0 %v171
    %395 = vmatpush2.xpose.msra.mxu0 %v170
    %396 = vmatprep.subr.mxu0 %v167
    %397 = vmatpush2.xpose.msra.mxu0 %v166
    %398 = vmatprep.subr.mxu0 %v163
    %399 = vmatpush2.xpose.msra.mxu0 %v162
    %400 = vmatprep.subr.mxu0 %v159
    %401 = vmatpush2.xpose.msra.mxu0 %v158
    %402 = vmatprep.subr.mxu0 %v155
    %403 = vmatpush2.xpose.msra.mxu0 %v154
    %404 = vmatprep.subr.mxu0 %v151
    %405 = vmatpush2.xpose.msra.mxu0 %v150
    %406 = vmatprep.mubr.f32.mxu0 %v55
    %407 = vmatmul.mubr.f32.gmra.mxu0 %v54
    %v408 = vpop.f32.mrf.mxu0
    %v409 = vadd.f32 0.0, %v408
    %v410 = vpop.f32.mrf.mxu0
    %v411 = vadd.f32 0.0, %v410
    %412 = vmatprep.mubr.f32.mxu0 %v59
    %413 = vmatmul.mubr.f32.gmra.mxu0 %v58
    %v414 = vpop.f32.mrf.mxu0
    %v415 = vadd.f32 0.0, %v414
    %v416 = vpop.f32.mrf.mxu0
    %v417 = vadd.f32 0.0, %v416
    %418 = vmatprep.mubr.f32.mxu0 %v63
    %419 = vmatmul.mubr.f32.gmra.mxu0 %v62
    %v420 = vpop.f32.mrf.mxu0
    %v421 = vadd.f32 0.0, %v420
    %v422 = vpop.f32.mrf.mxu0
    %v423 = vadd.f32 0.0, %v422
    %424 = vmatprep.mubr.f32.mxu0 %v67
    %425 = vmatmul.mubr.f32.gmra.mxu0 %v66
    %v426 = vpop.f32.mrf.mxu0
    %v427 = vadd.f32 0.0, %v426
    %v428 = vpop.f32.mrf.mxu0
    %v429 = vadd.f32 0.0, %v428
    %430 = vmatprep.mubr.f32.mxu0 %v71
    %431 = vmatmul.mubr.f32.gmra.mxu0 %v70
    %v432 = vpop.f32.mrf.mxu0
    %v433 = vadd.f32 0.0, %v432
    %v434 = vpop.f32.mrf.mxu0
    %v435 = vadd.f32 0.0, %v434
    %436 = vmatprep.mubr.f32.mxu0 %v75
    %437 = vmatmul.mubr.f32.gmra.mxu0 %v74
    %v438 = vpop.f32.mrf.mxu0
    %v439 = vadd.f32 0.0, %v438
    %v440 = vpop.f32.mrf.mxu0
    %v441 = vadd.f32 0.0, %v440
    %442 = vmatprep.mubr.f32.mxu0 %v79
    %443 = vmatmul.mubr.f32.gmra.mxu0 %v78
    %v444 = vpop.f32.mrf.mxu0
    %v445 = vadd.f32 0.0, %v444
    %v446 = vpop.f32.mrf.mxu0
    %v447 = vadd.f32 0.0, %v446
    %448 = vmatprep.mubr.f32.mxu0 %v83
    %449 = vmatmul.mubr.f32.gmra.mxu0 %v82
    %v450 = vpop.f32.mrf.mxu0
    %v451 = vadd.f32 0.0, %v450
    %v452 = vpop.f32.mrf.mxu0
    %v453 = vadd.f32 0.0, %v452
    %454 = vdwg.mxu0
    %455 = vmatprep.subr.mxu0 %v149
    %456 = vmatpush1.xpose.msra.mxu0 %v148
    %457 = vmatprep.subr.mxu0 %v145
    %458 = vmatpush1.xpose.msra.mxu0 %v144
    %459 = vmatprep.subr.mxu0 %v141
    %460 = vmatpush1.xpose.msra.mxu0 %v140
    %461 = vmatprep.subr.mxu0 %v137
    %462 = vmatpush1.xpose.msra.mxu0 %v136
    %463 = vmatprep.subr.mxu0 %v133
    %464 = vmatpush1.xpose.msra.mxu0 %v132
    %465 = vmatprep.subr.mxu0 %v129
    %466 = vmatpush1.xpose.msra.mxu0 %v128
    %467 = vmatprep.subr.mxu0 %v125
    %468 = vmatpush1.xpose.msra.mxu0 %v124
    %469 = vmatprep.subr.mxu0 %v121
    %470 = vmatpush1.xpose.msra.mxu0 %v120
    %471 = vmatprep.subr.mxu0 %v117
    %472 = vmatpush1.xpose.msra.mxu0 %v116
    %473 = vmatprep.subr.mxu0 %v113
    %474 = vmatpush1.xpose.msra.mxu0 %v112
    %475 = vmatprep.subr.mxu0 %v109
    %476 = vmatpush1.xpose.msra.mxu0 %v108
    %477 = vmatprep.subr.mxu0 %v105
    %478 = vmatpush1.xpose.msra.mxu0 %v104
    %479 = vmatprep.subr.mxu0 %v101
    %480 = vmatpush1.xpose.msra.mxu0 %v100
    %481 = vmatprep.subr.mxu0 %v97
    %482 = vmatpush1.xpose.msra.mxu0 %v96
    %483 = vmatprep.subr.mxu0 %v93
    %484 = vmatpush1.xpose.msra.mxu0 %v92
    %485 = vmatprep.subr.mxu0 %v89
    %486 = vmatpush1.xpose.msra.mxu0 %v88
    %487 = vmatprep.subr.mxu0 %v213
    %488 = vmatpush2.xpose.msra.mxu0 %v212
    %489 = vmatprep.subr.mxu0 %v209
    %490 = vmatpush2.xpose.msra.mxu0 %v208
    %491 = vmatprep.subr.mxu0 %v205
    %492 = vmatpush2.xpose.msra.mxu0 %v204
    %493 = vmatprep.subr.mxu0 %v201
    %494 = vmatpush2.xpose.msra.mxu0 %v200
    %495 = vmatprep.subr.mxu0 %v197
    %496 = vmatpush2.xpose.msra.mxu0 %v196
    %497 = vmatprep.subr.mxu0 %v193
    %498 = vmatpush2.xpose.msra.mxu0 %v192
    %499 = vmatprep.subr.mxu0 %v189
    %500 = vmatpush2.xpose.msra.mxu0 %v188
    %501 = vmatprep.subr.mxu0 %v185
    %502 = vmatpush2.xpose.msra.mxu0 %v184
    %503 = vmatprep.subr.mxu0 %v181
    %504 = vmatpush2.xpose.msra.mxu0 %v180
    %505 = vmatprep.subr.mxu0 %v177
    %506 = vmatpush2.xpose.msra.mxu0 %v176
    %507 = vmatprep.subr.mxu0 %v173
    %508 = vmatpush2.xpose.msra.mxu0 %v172
    %509 = vmatprep.subr.mxu0 %v169
    %510 = vmatpush2.xpose.msra.mxu0 %v168
    %511 = vmatprep.subr.mxu0 %v165
    %512 = vmatpush2.xpose.msra.mxu0 %v164
    %513 = vmatprep.subr.mxu0 %v161
    %514 = vmatpush2.xpose.msra.mxu0 %v160
    %515 = vmatprep.subr.mxu0 %v157
    %516 = vmatpush2.xpose.msra.mxu0 %v156
    %517 = vmatprep.subr.mxu0 %v153
    %518 = vmatpush2.xpose.msra.mxu0 %v152
    %519 = vmatprep.mubr.f32.mxu0 %v57
    %520 = vmatmul.mubr.f32.gmra.mxu0 %v56
    %v521 = vpop.f32.mrf.mxu0
    %v522 = vadd.f32 %v409, %v521
    %v523 = vpop.f32.mrf.mxu0
    %v524 = vadd.f32 %v411, %v523
    %525 = vmatprep.mubr.f32.mxu0 %v61
    %526 = vmatmul.mubr.f32.gmra.mxu0 %v60
    %v527 = vpop.f32.mrf.mxu0
    %v528 = vadd.f32 %v415, %v527
    %v529 = vpop.f32.mrf.mxu0
    %v530 = vadd.f32 %v417, %v529
    %531 = vmatprep.mubr.f32.mxu0 %v65
    %532 = vmatmul.mubr.f32.gmra.mxu0 %v64
    %v533 = vpop.f32.mrf.mxu0
    %v534 = vadd.f32 %v421, %v533
    %v535 = vpop.f32.mrf.mxu0
    %v536 = vadd.f32 %v423, %v535
    %537 = vmatprep.mubr.f32.mxu0 %v69
    %538 = vmatmul.mubr.f32.gmra.mxu0 %v68
    %v539 = vpop.f32.mrf.mxu0
    %v540 = vadd.f32 %v427, %v539
    %v541 = vpop.f32.mrf.mxu0
    %v542 = vadd.f32 %v429, %v541
    %543 = vmatprep.mubr.f32.mxu0 %v73
    %544 = vmatmul.mubr.f32.gmra.mxu0 %v72
    %v545 = vpop.f32.mrf.mxu0
    %v546 = vadd.f32 %v433, %v545
    %v547 = vpop.f32.mrf.mxu0
    %v548 = vadd.f32 %v435, %v547
    %549 = vmatprep.mubr.f32.mxu0 %v77
    %550 = vmatmul.mubr.f32.gmra.mxu0 %v76
    %v551 = vpop.f32.mrf.mxu0
    %v552 = vadd.f32 %v439, %v551
    %v553 = vpop.f32.mrf.mxu0
    %v554 = vadd.f32 %v441, %v553
    %555 = vmatprep.mubr.f32.mxu0 %v81
    %556 = vmatmul.mubr.f32.gmra.mxu0 %v80
    %v557 = vpop.f32.mrf.mxu0
    %v558 = vadd.f32 %v445, %v557
    %v559 = vpop.f32.mrf.mxu0
    %v560 = vadd.f32 %v447, %v559
    %561 = vmatprep.mubr.f32.mxu0 %v85
    %562 = vmatmul.mubr.f32.gmra.mxu0 %v84
    %v563 = vpop.f32.mrf.mxu0
    %v564 = vadd.f32 %v451, %v563
    %v565 = vpop.f32.mrf.mxu0
    %v566 = vadd.f32 %v453, %v565
    %567 = vdwg.mxu0
    %568 = vmatprep.subr.mxu0 %v275
    %569 = vmatpush1.xpose.msra.mxu0 %v274
    %570 = vmatprep.subr.mxu0 %v271
    %571 = vmatpush1.xpose.msra.mxu0 %v270
    %572 = vmatprep.subr.mxu0 %v267
    %573 = vmatpush1.xpose.msra.mxu0 %v266
    %574 = vmatprep.subr.mxu0 %v263
    %575 = vmatpush1.xpose.msra.mxu0 %v262
    %576 = vmatprep.subr.mxu0 %v259
    %577 = vmatpush1.xpose.msra.mxu0 %v258
    %578 = vmatprep.subr.mxu0 %v255
    %579 = vmatpush1.xpose.msra.mxu0 %v254
    %580 = vmatprep.subr.mxu0 %v251
    %581 = vmatpush1.xpose.msra.mxu0 %v250
    %582 = vmatprep.subr.mxu0 %v247
    %583 = vmatpush1.xpose.msra.mxu0 %v246
    %584 = vmatprep.subr.mxu0 %v243
    %585 = vmatpush1.xpose.msra.mxu0 %v242
    %586 = vmatprep.subr.mxu0 %v239
    %587 = vmatpush1.xpose.msra.mxu0 %v238
    %588 = vmatprep.subr.mxu0 %v235
    %589 = vmatpush1.xpose.msra.mxu0 %v234
    %590 = vmatprep.subr.mxu0 %v231
    %591 = vmatpush1.xpose.msra.mxu0 %v230
    %592 = vmatprep.subr.mxu0 %v227
    %593 = vmatpush1.xpose.msra.mxu0 %v226
    %594 = vmatprep.subr.mxu0 %v223
    %595 = vmatpush1.xpose.msra.mxu0 %v222
    %596 = vmatprep.subr.mxu0 %v219
    %597 = vmatpush1.xpose.msra.mxu0 %v218
    %598 = vmatprep.subr.mxu0 %v215
    %599 = vmatpush1.xpose.msra.mxu0 %v214
    %600 = vmatprep.subr.mxu0 %v339
    %601 = vmatpush2.xpose.msra.mxu0 %v338
    %602 = vmatprep.subr.mxu0 %v335
    %603 = vmatpush2.xpose.msra.mxu0 %v334
    %604 = vmatprep.subr.mxu0 %v331
    %605 = vmatpush2.xpose.msra.mxu0 %v330
    %606 = vmatprep.subr.mxu0 %v327
    %607 = vmatpush2.xpose.msra.mxu0 %v326
    %608 = vmatprep.subr.mxu0 %v323
    %609 = vmatpush2.xpose.msra.mxu0 %v322
    %610 = vmatprep.subr.mxu0 %v319
    %611 = vmatpush2.xpose.msra.mxu0 %v318
    %612 = vmatprep.subr.mxu0 %v315
    %613 = vmatpush2.xpose.msra.mxu0 %v314
    %614 = vmatprep.subr.mxu0 %v311
    %615 = vmatpush2.xpose.msra.mxu0 %v310
    %616 = vmatprep.subr.mxu0 %v307
    %617 = vmatpush2.xpose.msra.mxu0 %v306
    %618 = vmatprep.subr.mxu0 %v303
    %619 = vmatpush2.xpose.msra.mxu0 %v302
    %620 = vmatprep.subr.mxu0 %v299
    %621 = vmatpush2.xpose.msra.mxu0 %v298
    %622 = vmatprep.subr.mxu0 %v295
    %623 = vmatpush2.xpose.msra.mxu0 %v294
    %624 = vmatprep.subr.mxu0 %v291
    %625 = vmatpush2.xpose.msra.mxu0 %v290
    %626 = vmatprep.subr.mxu0 %v287
    %627 = vmatpush2.xpose.msra.mxu0 %v286
    %628 = vmatprep.subr.mxu0 %v283
    %629 = vmatpush2.xpose.msra.mxu0 %v282
    %630 = vmatprep.subr.mxu0 %v279
    %631 = vmatpush2.xpose.msra.mxu0 %v278
    %632 = vmatprep.mubr.f32.mxu0 %v55
    %633 = vmatmul.mubr.f32.gmra.mxu0 %v54
    %v634 = vpop.f32.mrf.mxu0
    %v635 = vadd.f32 0.0, %v634
    %v636 = vpop.f32.mrf.mxu0
    %v637 = vadd.f32 0.0, %v636
    %638 = vmatprep.mubr.f32.mxu0 %v59
    %639 = vmatmul.mubr.f32.gmra.mxu0 %v58
    %v640 = vpop.f32.mrf.mxu0
    %v641 = vadd.f32 0.0, %v640
    %v642 = vpop.f32.mrf.mxu0
    %v643 = vadd.f32 0.0, %v642
    %644 = vmatprep.mubr.f32.mxu0 %v63
    %645 = vmatmul.mubr.f32.gmra.mxu0 %v62
    %v646 = vpop.f32.mrf.mxu0
    %v647 = vadd.f32 0.0, %v646
    %v648 = vpop.f32.mrf.mxu0
    %v649 = vadd.f32 0.0, %v648
    %650 = vmatprep.mubr.f32.mxu0 %v67
    %651 = vmatmul.mubr.f32.gmra.mxu0 %v66
    %v652 = vpop.f32.mrf.mxu0
    %v653 = vadd.f32 0.0, %v652
    %v654 = vpop.f32.mrf.mxu0
    %v655 = vadd.f32 0.0, %v654
    %656 = vmatprep.mubr.f32.mxu0 %v71
    %657 = vmatmul.mubr.f32.gmra.mxu0 %v70
    %v658 = vpop.f32.mrf.mxu0
    %v659 = vadd.f32 0.0, %v658
    %v660 = vpop.f32.mrf.mxu0
    %v661 = vadd.f32 0.0, %v660
    %662 = vmatprep.mubr.f32.mxu0 %v75
    %663 = vmatmul.mubr.f32.gmra.mxu0 %v74
    %v664 = vpop.f32.mrf.mxu0
    %v665 = vadd.f32 0.0, %v664
    %v666 = vpop.f32.mrf.mxu0
    %v667 = vadd.f32 0.0, %v666
    %668 = vmatprep.mubr.f32.mxu0 %v79
    %669 = vmatmul.mubr.f32.gmra.mxu0 %v78
    %v670 = vpop.f32.mrf.mxu0
    %v671 = vadd.f32 0.0, %v670
    %v672 = vpop.f32.mrf.mxu0
    %v673 = vadd.f32 0.0, %v672
    %674 = vmatprep.mubr.f32.mxu0 %v83
    %675 = vmatmul.mubr.f32.gmra.mxu0 %v82
    %v676 = vpop.f32.mrf.mxu0
    %v677 = vadd.f32 0.0, %v676
    %v678 = vpop.f32.mrf.mxu0
    %v679 = vadd.f32 0.0, %v678
    %680 = vdwg.mxu0
    %681 = vmatprep.subr.mxu0 %v277
    %682 = vmatpush1.xpose.msra.mxu0 %v276
    %683 = vmatprep.subr.mxu0 %v273
    %684 = vmatpush1.xpose.msra.mxu0 %v272
    %685 = vmatprep.subr.mxu0 %v269
    %686 = vmatpush1.xpose.msra.mxu0 %v268
    %687 = vmatprep.subr.mxu0 %v265
    %688 = vmatpush1.xpose.msra.mxu0 %v264
    %689 = vmatprep.subr.mxu0 %v261
    %690 = vmatpush1.xpose.msra.mxu0 %v260
    %691 = vmatprep.subr.mxu0 %v257
    %692 = vmatpush1.xpose.msra.mxu0 %v256
    %693 = vmatprep.subr.mxu0 %v253
    %694 = vmatpush1.xpose.msra.mxu0 %v252
    %695 = vmatprep.subr.mxu0 %v249
    %696 = vmatpush1.xpose.msra.mxu0 %v248
    %697 = vmatprep.subr.mxu0 %v245
    %698 = vmatpush1.xpose.msra.mxu0 %v244
    %699 = vmatprep.subr.mxu0 %v241
    %700 = vmatpush1.xpose.msra.mxu0 %v240
    %701 = vmatprep.subr.mxu0 %v237
    %702 = vmatpush1.xpose.msra.mxu0 %v236
    %703 = vmatprep.subr.mxu0 %v233
    %704 = vmatpush1.xpose.msra.mxu0 %v232
    %705 = vmatprep.subr.mxu0 %v229
    %706 = vmatpush1.xpose.msra.mxu0 %v228
    %707 = vmatprep.subr.mxu0 %v225
    %708 = vmatpush1.xpose.msra.mxu0 %v224
    %709 = vmatprep.subr.mxu0 %v221
    %710 = vmatpush1.xpose.msra.mxu0 %v220
    %711 = vmatprep.subr.mxu0 %v217
    %712 = vmatpush1.xpose.msra.mxu0 %v216
    %713 = vmatprep.subr.mxu0 %v341
    %714 = vmatpush2.xpose.msra.mxu0 %v340
    %715 = vmatprep.subr.mxu0 %v337
    %716 = vmatpush2.xpose.msra.mxu0 %v336
    %717 = vmatprep.subr.mxu0 %v333
    %718 = vmatpush2.xpose.msra.mxu0 %v332
    %719 = vmatprep.subr.mxu0 %v329
    %720 = vmatpush2.xpose.msra.mxu0 %v328
    %721 = vmatprep.subr.mxu0 %v325
    %722 = vmatpush2.xpose.msra.mxu0 %v324
    %723 = vmatprep.subr.mxu0 %v321
    %724 = vmatpush2.xpose.msra.mxu0 %v320
    %725 = vmatprep.subr.mxu0 %v317
    %726 = vmatpush2.xpose.msra.mxu0 %v316
    %727 = vmatprep.subr.mxu0 %v313
    %728 = vmatpush2.xpose.msra.mxu0 %v312
    %729 = vmatprep.subr.mxu0 %v309
    %730 = vmatpush2.xpose.msra.mxu0 %v308
    %731 = vmatprep.subr.mxu0 %v305
    %732 = vmatpush2.xpose.msra.mxu0 %v304
    %733 = vmatprep.subr.mxu0 %v301
    %734 = vmatpush2.xpose.msra.mxu0 %v300
    %735 = vmatprep.subr.mxu0 %v297
    %736 = vmatpush2.xpose.msra.mxu0 %v296
    %737 = vmatprep.subr.mxu0 %v293
    %738 = vmatpush2.xpose.msra.mxu0 %v292
    %739 = vmatprep.subr.mxu0 %v289
    %740 = vmatpush2.xpose.msra.mxu0 %v288
    %741 = vmatprep.subr.mxu0 %v285
    %742 = vmatpush2.xpose.msra.mxu0 %v284
    %743 = vmatprep.subr.mxu0 %v281
    %744 = vmatpush2.xpose.msra.mxu0 %v280
    %745 = vmatprep.mubr.f32.mxu0 %v57
    %746 = vmatmul.mubr.f32.gmra.mxu0 %v56
    %v747 = vpop.f32.mrf.mxu0
    %v748 = vadd.f32 %v635, %v747
    %v749 = vpop.f32.mrf.mxu0
    %v750 = vadd.f32 %v637, %v749
    %751 = vmatprep.mubr.f32.mxu0 %v61
    %752 = vmatmul.mubr.f32.gmra.mxu0 %v60
    %v753 = vpop.f32.mrf.mxu0
    %v754 = vadd.f32 %v641, %v753
    %v755 = vpop.f32.mrf.mxu0
    %v756 = vadd.f32 %v643, %v755
    %757 = vmatprep.mubr.f32.mxu0 %v65
    %758 = vmatmul.mubr.f32.gmra.mxu0 %v64
    %v759 = vpop.f32.mrf.mxu0
    %v760 = vadd.f32 %v647, %v759
    %v761 = vpop.f32.mrf.mxu0
    %v762 = vadd.f32 %v649, %v761
    %763 = vmatprep.mubr.f32.mxu0 %v69
    %764 = vmatmul.mubr.f32.gmra.mxu0 %v68
    %v765 = vpop.f32.mrf.mxu0
    %v766 = vadd.f32 %v653, %v765
    %v767 = vpop.f32.mrf.mxu0
    %v768 = vadd.f32 %v655, %v767
    %769 = vmatprep.mubr.f32.mxu0 %v73
    %770 = vmatmul.mubr.f32.gmra.mxu0 %v72
    %v771 = vpop.f32.mrf.mxu0
    %v772 = vadd.f32 %v659, %v771
    %v773 = vpop.f32.mrf.mxu0
    %v774 = vadd.f32 %v661, %v773
    %775 = vmatprep.mubr.f32.mxu0 %v77
    %776 = vmatmul.mubr.f32.gmra.mxu0 %v76
    %v777 = vpop.f32.mrf.mxu0
    %v778 = vadd.f32 %v665, %v777
    %v779 = vpop.f32.mrf.mxu0
    %v780 = vadd.f32 %v667, %v779
    %781 = vmatprep.mubr.f32.mxu0 %v81
    %782 = vmatmul.mubr.f32.gmra.mxu0 %v80
    %v783 = vpop.f32.mrf.mxu0
    %v784 = vadd.f32 %v671, %v783
    %v785 = vpop.f32.mrf.mxu0
    %v786 = vadd.f32 %v673, %v785
    %787 = vmatprep.mubr.f32.mxu0 %v85
    %788 = vmatmul.mubr.f32.gmra.mxu0 %v84
    %v789 = vpop.f32.mrf.mxu0
    %v790 = vadd.f32 %v677, %v789
    %v791 = vpop.f32.mrf.mxu0
    %v792 = vadd.f32 %v679, %v791
    %793 = vdwg.mxu0
    %p794 = scmp.eq.s32.totalorder 0, 0
    // Predicated region
    $region26: #{tpu_custom_call.1} parent=1 // pred_check
      %p795 = pneg %p794
    $region27: #{tpu_custom_call.1} parent=1 // pred_check_branch
      %797 = sbr.rel (%p795) target = $region29
    $region28: #{tpu_custom_call.1} parent=1 // pred_region
      %798 = vst [vmem:[#allocation2] sm:$0xff] %v522
      %799 = vst [vmem:[#allocation2 + $0x8] sm:$0xff] %v524
      %800 = vst [vmem:[#allocation2 + $0x10] sm:$0xff] %v748
      %801 = vst [vmem:[#allocation2 + $0x18] sm:$0xff] %v750
      %802 = vst [vmem:[#allocation2 + $0x20] sm:$0xff] %v528
      %803 = vst [vmem:[#allocation2 + $0x28] sm:$0xff] %v530
      %804 = vst [vmem:[#allocation2 + $0x30] sm:$0xff] %v754
      %805 = vst [vmem:[#allocation2 + $0x38] sm:$0xff] %v756
      %806 = vst [vmem:[#allocation2 + $0x40] sm:$0xff] %v534
      %807 = vst [vmem:[#allocation2 + $0x48] sm:$0xff] %v536
      %808 = vst [vmem:[#allocation2 + $0x50] sm:$0xff] %v760
      %809 = vst [vmem:[#allocation2 + $0x58] sm:$0xff] %v762
      %810 = vst [vmem:[#allocation2 + $0x60] sm:$0xff] %v540
      %811 = vst [vmem:[#allocation2 + $0x68] sm:$0xff] %v542
      %812 = vst [vmem:[#allocation2 + $0x70] sm:$0xff] %v766
      %813 = vst [vmem:[#allocation2 + $0x78] sm:$0xff] %v768
      %814 = vst [vmem:[#allocation2 + $0x80] sm:$0xff] %v546
      %815 = vst [vmem:[#allocation2 + $0x88] sm:$0xff] %v548
      %816 = vst [vmem:[#allocation2 + $0x90] sm:$0xff] %v772
      %817 = vst [vmem:[#allocation2 + $0x98] sm:$0xff] %v774
      %818 = vst [vmem:[#allocation2 + $0xa0] sm:$0xff] %v552
      %819 = vst [vmem:[#allocation2 + $0xa8] sm:$0xff] %v554
      %820 = vst [vmem:[#allocation2 + $0xb0] sm:$0xff] %v778
      %821 = vst [vmem:[#allocation2 + $0xb8] sm:$0xff] %v780
      %822 = vst [vmem:[#allocation2 + $0xc0] sm:$0xff] %v558
      %823 = vst [vmem:[#allocation2 + $0xc8] sm:$0xff] %v560
      %824 = vst [vmem:[#allocation2 + $0xd0] sm:$0xff] %v784
      %825 = vst [vmem:[#allocation2 + $0xd8] sm:$0xff] %v786
      %826 = vst [vmem:[#allocation2 + $0xe0] sm:$0xff] %v564
      %827 = vst [vmem:[#allocation2 + $0xe8] sm:$0xff] %v566
      %828 = vst [vmem:[#allocation2 + $0xf0] sm:$0xff] %v790
      %829 = vst [vmem:[#allocation2 + $0xf8] sm:$0xff] %v792
    $region29: #{tpu_custom_call.1} parent=1 // pred_fallthru
      _
    %p830 = scmp.ne.s32.totalorder 0, 0
    // Predicated region
    $region30: #{tpu_custom_call.1} parent=1 // pred_check
      %p831 = pneg %p830
    $region31: #{tpu_custom_call.1} parent=1 // pred_check_branch
      %833 = sbr.rel (%p831) target = $region33
    $region32: #{tpu_custom_call.1} parent=1 // pred_region
      %v834 = vld [vmem:[#allocation2] sm:$0xff]
      %v835 = vld [vmem:[#allocation2 + $0x8] sm:$0xff]
      %v836 = vld [vmem:[#allocation2 + $0x10] sm:$0xff]
      %v837 = vld [vmem:[#allocation2 + $0x18] sm:$0xff]
      %v838 = vld [vmem:[#allocation2 + $0x20] sm:$0xff]
      %v839 = vld [vmem:[#allocation2 + $0x28] sm:$0xff]
      %v840 = vld [vmem:[#allocation2 + $0x30] sm:$0xff]
      %v841 = vld [vmem:[#allocation2 + $0x38] sm:$0xff]
      %v842 = vld [vmem:[#allocation2 + $0x40] sm:$0xff]
      %v843 = vld [vmem:[#allocation2 + $0x48] sm:$0xff]
      %v844 = vld [vmem:[#allocation2 + $0x50] sm:$0xff]
      %v845 = vld [vmem:[#allocation2 + $0x58] sm:$0xff]
      %v846 = vld [vmem:[#allocation2 + $0x60] sm:$0xff]
      %v847 = vld [vmem:[#allocation2 + $0x68] sm:$0xff]
      %v848 = vld [vmem:[#allocation2 + $0x70] sm:$0xff]
      %v849 = vld [vmem:[#allocation2 + $0x78] sm:$0xff]
      %v850 = vld [vmem:[#allocation2 + $0x80] sm:$0xff]
      %v851 = vld [vmem:[#allocation2 + $0x88] sm:$0xff]
      %v852 = vld [vmem:[#allocation2 + $0x90] sm:$0xff]
      %v853 = vld [vmem:[#allocation2 + $0x98] sm:$0xff]
      %v854 = vld [vmem:[#allocation2 + $0xa0] sm:$0xff]
      %v855 = vld [vmem:[#allocation2 + $0xa8] sm:$0xff]
      %v856 = vld [vmem:[#allocation2 + $0xb0] sm:$0xff]
      %v857 = vld [vmem:[#allocation2 + $0xb8] sm:$0xff]
      %v858 = vld [vmem:[#allocation2 + $0xc0] sm:$0xff]
      %v859 = vld [vmem:[#allocation2 + $0xc8] sm:$0xff]
      %v860 = vld [vmem:[#allocation2 + $0xd0] sm:$0xff]
      %v861 = vld [vmem:[#allocation2 + $0xd8] sm:$0xff]
      %v862 = vld [vmem:[#allocation2 + $0xe0] sm:$0xff]
      %v863 = vld [vmem:[#allocation2 + $0xe8] sm:$0xff]
      %v864 = vld [vmem:[#allocation2 + $0xf0] sm:$0xff]
      %v865 = vld [vmem:[#allocation2 + $0xf8] sm:$0xff]
      %v866 = vadd.f32 %v834, %v522
      %v867 = vadd.f32 %v835, %v524
      %v868 = vadd.f32 %v836, %v748
      %v869 = vadd.f32 %v837, %v750
      %v870 = vadd.f32 %v838, %v528
      %v871 = vadd.f32 %v839, %v530
      %v872 = vadd.f32 %v840, %v754
      %v873 = vadd.f32 %v841, %v756
      %v874 = vadd.f32 %v842, %v534
      %v875 = vadd.f32 %v843, %v536
      %v876 = vadd.f32 %v844, %v760
      %v877 = vadd.f32 %v845, %v762
      %v878 = vadd.f32 %v846, %v540
      %v879 = vadd.f32 %v847, %v542
      %v880 = vadd.f32 %v848, %v766
      %v881 = vadd.f32 %v849, %v768
      %v882 = vadd.f32 %v850, %v546
      %v883 = vadd.f32 %v851, %v548
      %v884 = vadd.f32 %v852, %v772
      %v885 = vadd.f32 %v853, %v774
      %v886 = vadd.f32 %v854, %v552
      %v887 = vadd.f32 %v855, %v554
      %v888 = vadd.f32 %v856, %v778
      %v889 = vadd.f32 %v857, %v780
      %v890 = vadd.f32 %v858, %v558
      %v891 = vadd.f32 %v859, %v560
      %v892 = vadd.f32 %v860, %v784
      %v893 = vadd.f32 %v861, %v786
      %v894 = vadd.f32 %v862, %v564
      %v895 = vadd.f32 %v863, %v566
      %v896 = vadd.f32 %v864, %v790
      %v897 = vadd.f32 %v865, %v792
      %898 = vst [vmem:[#allocation2] sm:$0xff] %v866
      %899 = vst [vmem:[#allocation2 + $0x8] sm:$0xff] %v867
      %900 = vst [vmem:[#allocation2 + $0x10] sm:$0xff] %v868
      %901 = vst [vmem:[#allocation2 + $0x18] sm:$0xff] %v869
      %902 = vst [vmem:[#allocation2 + $0x20] sm:$0xff] %v870
      %903 = vst [vmem:[#allocation2 + $0x28] sm:$0xff] %v871
      %904 = vst [vmem:[#allocation2 + $0x30] sm:$0xff] %v872
      %905 = vst [vmem:[#allocation2 + $0x38] sm:$0xff] %v873
      %906 = vst [vmem:[#allocation2 + $0x40] sm:$0xff] %v874
      %907 = vst [vmem:[#allocation2 + $0x48] sm:$0xff] %v875
      %908 = vst [vmem:[#allocation2 + $0x50] sm:$0xff] %v876
      %909 = vst [vmem:[#allocation2 + $0x58] sm:$0xff] %v877
      %910 = vst [vmem:[#allocation2 + $0x60] sm:$0xff] %v878
      %911 = vst [vmem:[#allocation2 + $0x68] sm:$0xff] %v879
      %912 = vst [vmem:[#allocation2 + $0x70] sm:$0xff] %v880
      %913 = vst [vmem:[#allocation2 + $0x78] sm:$0xff] %v881
      %914 = vst [vmem:[#allocation2 + $0x80] sm:$0xff] %v882
      %915 = vst [vmem:[#allocation2 + $0x88] sm:$0xff] %v883
      %916 = vst [vmem:[#allocation2 + $0x90] sm:$0xff] %v884
      %917 = vst [vmem:[#allocation2 + $0x98] sm:$0xff] %v885
      %918 = vst [vmem:[#allocation2 + $0xa0] sm:$0xff] %v886
      %919 = vst [vmem:[#allocation2 + $0xa8] sm:$0xff] %v887
      %920 = vst [vmem:[#allocation2 + $0xb0] sm:$0xff] %v888
      %921 = vst [vmem:[#allocation2 + $0xb8] sm:$0xff] %v889
      %922 = vst [vmem:[#allocation2 + $0xc0] sm:$0xff] %v890
      %923 = vst [vmem:[#allocation2 + $0xc8] sm:$0xff] %v891
      %924 = vst [vmem:[#allocation2 + $0xd0] sm:$0xff] %v892
      %925 = vst [vmem:[#allocation2 + $0xd8] sm:$0xff] %v893
      %926 = vst [vmem:[#allocation2 + $0xe0] sm:$0xff] %v894
      %927 = vst [vmem:[#allocation2 + $0xe8] sm:$0xff] %v895
      %928 = vst [vmem:[#allocation2 + $0xf0] sm:$0xff] %v896
      %929 = vst [vmem:[#allocation2 + $0xf8] sm:$0xff] %v897
    $region33: #{tpu_custom_call.1} parent=1 // pred_fallthru
      _
    // Predicated region
    $region34: #{tpu_custom_call.1} parent=1 // pred_check
      %p930 = pneg %p794
    $region35: #{tpu_custom_call.1} parent=1 // pred_check_branch
      %932 = sbr.rel (%p930) target = $region37
    $region36: #{tpu_custom_call.1} parent=1 // pred_region
      %v933 = vld [vmem:[#allocation2] sm:$0xff]
      %v934 = vld [vmem:[#allocation2 + $0x8] sm:$0xff]
      %v935 = vld [vmem:[#allocation2 + $0x10] sm:$0xff]
      %v936 = vld [vmem:[#allocation2 + $0x18] sm:$0xff]
      %v937 = vld [vmem:[#allocation2 + $0x20] sm:$0xff]
      %v938 = vld [vmem:[#allocation2 + $0x28] sm:$0xff]
      %v939 = vld [vmem:[#allocation2 + $0x30] sm:$0xff]
      %v940 = vld [vmem:[#allocation2 + $0x38] sm:$0xff]
      %v941 = vld [vmem:[#allocation2 + $0x40] sm:$0xff]
      %v942 = vld [vmem:[#allocation2 + $0x48] sm:$0xff]
      %v943 = vld [vmem:[#allocation2 + $0x50] sm:$0xff]
      %v944 = vld [vmem:[#allocation2 + $0x58] sm:$0xff]
      %v945 = vld [vmem:[#allocation2 + $0x60] sm:$0xff]
      %v946 = vld [vmem:[#allocation2 + $0x68] sm:$0xff]
      %v947 = vld [vmem:[#allocation2 + $0x70] sm:$0xff]
      %v948 = vld [vmem:[#allocation2 + $0x78] sm:$0xff]
      %v949 = vld [vmem:[#allocation2 + $0x80] sm:$0xff]
      %v950 = vld [vmem:[#allocation2 + $0x88] sm:$0xff]
      %v951 = vld [vmem:[#allocation2 + $0x90] sm:$0xff]
      %v952 = vld [vmem:[#allocation2 + $0x98] sm:$0xff]
      %v953 = vld [vmem:[#allocation2 + $0xa0] sm:$0xff]
      %v954 = vld [vmem:[#allocation2 + $0xa8] sm:$0xff]
      %v955 = vld [vmem:[#allocation2 + $0xb0] sm:$0xff]
      %v956 = vld [vmem:[#allocation2 + $0xb8] sm:$0xff]
      %v957 = vld [vmem:[#allocation2 + $0xc0] sm:$0xff]
      %v958 = vld [vmem:[#allocation2 + $0xc8] sm:$0xff]
      %v959 = vld [vmem:[#allocation2 + $0xd0] sm:$0xff]
      %v960 = vld [vmem:[#allocation2 + $0xd8] sm:$0xff]
      %v961 = vld [vmem:[#allocation2 + $0xe0] sm:$0xff]
      %v962 = vld [vmem:[#allocation2 + $0xe8] sm:$0xff]
      %v963 = vld [vmem:[#allocation2 + $0xf0] sm:$0xff]
      %v964 = vld [vmem:[#allocation2 + $0xf8] sm:$0xff]
      %v965 = vld [vmem:[#allocation8] sm:$0xf]
      %v967 = vlaneseq
      %v968 = vshrl.u32 %v967, 7
      %v969 = vsub.s32 0, %v968
      %v970 = vrot.slane %v965, %v969
      %v971 = vlaneseq
      %v972 = vshrl.u32 %v971, 7
      %v973 = vsub.s32 1, %v972
      %v974 = vrot.slane %v965, %v973
      %v975 = vlaneseq
      %v976 = vshrl.u32 %v975, 7
      %v977 = vsub.s32 2, %v976
      %v978 = vrot.slane %v965, %v977
      %v979 = vlaneseq
      %v980 = vshrl.u32 %v979, 7
      %v981 = vsub.s32 3, %v980
      %v982 = vrot.slane %v965, %v981
      %v987 = vadd.f32 %v933, %v970
      %v988 = vadd.f32 %v934, %v974
      %v989 = vadd.f32 %v935, %v978
      %v990 = vadd.f32 %v936, %v982
      %v991 = vadd.f32 %v937, %v970
      %v992 = vadd.f32 %v938, %v974
      %v993 = vadd.f32 %v939, %v978
      %v994 = vadd.f32 %v940, %v982
      %v995 = vadd.f32 %v941, %v970
      %v996 = vadd.f32 %v942, %v974
      %v997 = vadd.f32 %v943, %v978
      %v998 = vadd.f32 %v944, %v982
      %v999 = vadd.f32 %v945, %v970
      %v1000 = vadd.f32 %v946, %v974
      %v1001 = vadd.f32 %v947, %v978
      %v1002 = vadd.f32 %v948, %v982
      %v1003 = vadd.f32 %v949, %v970
      %v1004 = vadd.f32 %v950, %v974
      %v1005 = vadd.f32 %v951, %v978
      %v1006 = vadd.f32 %v952, %v982
      %v1007 = vadd.f32 %v953, %v970
      %v1008 = vadd.f32 %v954, %v974
      %v1009 = vadd.f32 %v955, %v978
      %v1010 = vadd.f32 %v956, %v982
      %v1011 = vadd.f32 %v957, %v970
      %v1012 = vadd.f32 %v958, %v974
      %v1013 = vadd.f32 %v959, %v978
      %v1014 = vadd.f32 %v960, %v982
      %v1015 = vadd.f32 %v961, %v970
      %v1016 = vadd.f32 %v962, %v974
      %v1017 = vadd.f32 %v963, %v978
      %v1018 = vadd.f32 %v964, %v982
      %v1019 = vmul.f32 %v987, 0.1
      %v1020 = vmul.f32 %v988, 0.1
      %v1021 = vmul.f32 %v989, 0.1
      %v1022 = vmul.f32 %v990, 0.1
      %v1023 = vmul.f32 %v991, 0.1
      %v1024 = vmul.f32 %v992, 0.1
      %v1025 = vmul.f32 %v993, 0.1
      %v1026 = vmul.f32 %v994, 0.1
      %v1027 = vmul.f32 %v995, 0.1
      %v1028 = vmul.f32 %v996, 0.1
      %v1029 = vmul.f32 %v997, 0.1
      %v1030 = vmul.f32 %v998, 0.1
      %v1031 = vmul.f32 %v999, 0.1
      %v1032 = vmul.f32 %v1000, 0.1
      %v1033 = vmul.f32 %v1001, 0.1
      %v1034 = vmul.f32 %v1002, 0.1
      %v1035 = vmul.f32 %v1003, 0.1
      %v1036 = vmul.f32 %v1004, 0.1
      %v1037 = vmul.f32 %v1005, 0.1
      %v1038 = vmul.f32 %v1006, 0.1
      %v1039 = vmul.f32 %v1007, 0.1
      %v1040 = vmul.f32 %v1008, 0.1
      %v1041 = vmul.f32 %v1009, 0.1
      %v1042 = vmul.f32 %v1010, 0.1
      %v1043 = vmul.f32 %v1011, 0.1
      %v1044 = vmul.f32 %v1012, 0.1
      %v1045 = vmul.f32 %v1013, 0.1
      %v1046 = vmul.f32 %v1014, 0.1
      %v1047 = vmul.f32 %v1015, 0.1
      %v1048 = vmul.f32 %v1016, 0.1
      %v1049 = vmul.f32 %v1017, 0.1
      %v1050 = vmul.f32 %v1018, 0.1
      %v1051 = vmax.f32 %v987, %v1019
      %v1052 = vmax.f32 %v988, %v1020
      %v1053 = vmax.f32 %v989, %v1021
      %v1054 = vmax.f32 %v990, %v1022
      %v1055 = vmax.f32 %v991, %v1023
      %v1056 = vmax.f32 %v992, %v1024
      %v1057 = vmax.f32 %v993, %v1025
      %v1058 = vmax.f32 %v994, %v1026
      %v1059 = vmax.f32 %v995, %v1027
      %v1060 = vmax.f32 %v996, %v1028
      %v1061 = vmax.f32 %v997, %v1029
      %v1062 = vmax.f32 %v998, %v1030
      %v1063 = vmax.f32 %v999, %v1031
      %v1064 = vmax.f32 %v1000, %v1032
      %v1065 = vmax.f32 %v1001, %v1033
      %v1066 = vmax.f32 %v1002, %v1034
      %v1067 = vmax.f32 %v1003, %v1035
      %v1068 = vmax.f32 %v1004, %v1036
      %v1069 = vmax.f32 %v1005, %v1037
      %v1070 = vmax.f32 %v1006, %v1038
      %v1071 = vmax.f32 %v1007, %v1039
      %v1072 = vmax.f32 %v1008, %v1040
      %v1073 = vmax.f32 %v1009, %v1041
      %v1074 = vmax.f32 %v1010, %v1042
      %v1075 = vmax.f32 %v1011, %v1043
      %v1076 = vmax.f32 %v1012, %v1044
      %v1077 = vmax.f32 %v1013, %v1045
      %v1078 = vmax.f32 %v1014, %v1046
      %v1079 = vmax.f32 %v1015, %v1047
      %v1080 = vmax.f32 %v1016, %v1048
      %v1081 = vmax.f32 %v1017, %v1049
      %v1082 = vmax.f32 %v1018, %v1050
      %1083 = vst [vmem:[#allocation9] sm:$0xff] %v1051
      %1084 = vst [vmem:[#allocation9 + $0x8] sm:$0xff] %v1052
      %1085 = vst [vmem:[#allocation9 + $0x10] sm:$0xff] %v1053
      %1086 = vst [vmem:[#allocation9 + $0x18] sm:$0xff] %v1054
      %1087 = vst [vmem:[#allocation9 + $0x20] sm:$0xff] %v1055
      %1088 = vst [vmem:[#allocation9 + $0x28] sm:$0xff] %v1056
      %1089 = vst [vmem:[#allocation9 + $0x30] sm:$0xff] %v1057
      %1090 = vst [vmem:[#allocation9 + $0x38] sm:$0xff] %v1058
      %1091 = vst [vmem:[#allocation9 + $0x40] sm:$0xff] %v1059
      %1092 = vst [vmem:[#allocation9 + $0x48] sm:$0xff] %v1060
      %1093 = vst [vmem:[#allocation9 + $0x50] sm:$0xff] %v1061
      %1094 = vst [vmem:[#allocation9 + $0x58] sm:$0xff] %v1062
      %1095 = vst [vmem:[#allocation9 + $0x60] sm:$0xff] %v1063
      %1096 = vst [vmem:[#allocation9 + $0x68] sm:$0xff] %v1064
      %1097 = vst [vmem:[#allocation9 + $0x70] sm:$0xff] %v1065
      %1098 = vst [vmem:[#allocation9 + $0x78] sm:$0xff] %v1066
      %1099 = vst [vmem:[#allocation9 + $0x80] sm:$0xff] %v1067
      %1100 = vst [vmem:[#allocation9 + $0x88] sm:$0xff] %v1068
      %1101 = vst [vmem:[#allocation9 + $0x90] sm:$0xff] %v1069
      %1102 = vst [vmem:[#allocation9 + $0x98] sm:$0xff] %v1070
      %1103 = vst [vmem:[#allocation9 + $0xa0] sm:$0xff] %v1071
      %1104 = vst [vmem:[#allocation9 + $0xa8] sm:$0xff] %v1072
      %1105 = vst [vmem:[#allocation9 + $0xb0] sm:$0xff] %v1073
      %1106 = vst [vmem:[#allocation9 + $0xb8] sm:$0xff] %v1074
      %1107 = vst [vmem:[#allocation9 + $0xc0] sm:$0xff] %v1075
      %1108 = vst [vmem:[#allocation9 + $0xc8] sm:$0xff] %v1076
      %1109 = vst [vmem:[#allocation9 + $0xd0] sm:$0xff] %v1077
      %1110 = vst [vmem:[#allocation9 + $0xd8] sm:$0xff] %v1078
      %1111 = vst [vmem:[#allocation9 + $0xe0] sm:$0xff] %v1079
      %1112 = vst [vmem:[#allocation9 + $0xe8] sm:$0xff] %v1080
      %1113 = vst [vmem:[#allocation9 + $0xf0] sm:$0xff] %v1081
      %1114 = vst [vmem:[#allocation9 + $0xf8] sm:$0xff] %v1082
    $region37: #{tpu_custom_call.1} parent=1 // pred_fallthru
      _
    // Predicated region
    $region38: #{tpu_custom_call.1} parent=1 // pred_check
      _
    $region39: #{tpu_custom_call.1} parent=1 // pred_check_branch
      %1116 = sbr.rel (0) target = $region41
    $region40: #{tpu_custom_call.1} parent=1 // pred_region
      %s1118 = ssub.s32 4096, 4096
      %1119 = vsyncadd [#allocation5], %s1118
      %s1120 = sshll.u32 [#allocation9], 4
      %s1121 = int_to_ptr.vmem [resolvable:$true] %s1120
      %1126 = dma.vmem_to_hbm [thread:$0]  %s1121, 4096, %s3, [#allocation5], 512, 512, 32
    $region41: #{tpu_custom_call.1} parent=1 // pred_fallthru
      _
    // Predicated region
    $region42: #{tpu_custom_call.1} parent=1 // pred_check
      _
    $region43: #{tpu_custom_call.1} parent=1 // pred_check_branch
      %1128 = sbr.rel (0) target = $region45
    $region44: #{tpu_custom_call.1} parent=1 // pred_region
      %1129 = dma.done [#allocation5], 4096
    $region45: #{tpu_custom_call.1} parent=1 // pred_fallthru
      _
    %1130 = vsyncpa [#allocation4], 1
    %1131 = vsyncpa [#allocation7], 1
    %1132 = vsyncpa [#allocation5], 1

</llo_original>
